<compile_context>
chip_gen: v6e
topology: v6e:2x2x1
jax: 0.10.0
libtpu: 0.0.40
codegen_flags: <defaults>
</compile_context>

<pallas_src>
import functools
import math

import jax
import jax.numpy as jnp
from jax.experimental import pallas as pl
from jax.experimental.pallas import tpu as pltpu


# ----------------------------- small helpers -----------------------------

def _round_up(x, m):
    return ((x + m - 1) // m) * m


def wrap_angle(a):
    return (a + jnp.pi) % (2.0 * jnp.pi) - jnp.pi


def angle_between_2d(ctr, nbr):
    return jnp.arctan2(ctr[..., 0] * nbr[..., 1] - ctr[..., 1] * nbr[..., 0],
                       (ctr[..., :2] * nbr[..., :2]).sum(-1))


def _layernorm(x, w, b, eps=1e-5):
    mu = jnp.mean(x, axis=-1, keepdims=True)
    var = jnp.mean(jnp.square(x - mu), axis=-1, keepdims=True)
    return (x - mu) * jax.lax.rsqrt(var + eps) * w + b


def _mm(a, w):
    # MXU matmul: bf16 operands (weights pre-cast in the wrapper), f32 accumulation.
    return jnp.dot(a.astype(jnp.bfloat16), w, preferred_element_type=jnp.float32)


def _full_spec(shape):
    nd = len(shape)
    return pl.BlockSpec(shape, lambda *_, _n=nd: (0,) * _n)


def _block_diag(blocks):
    rows = sum(b.shape[0] for b in blocks)
    cols = sum(b.shape[1] for b in blocks)
    out = jnp.zeros((rows, cols), blocks[0].dtype)
    i = j = 0
    for b in blocks:
        out = out.at[i:i + b.shape[0], j:j + b.shape[1]].set(b)
        i += b.shape[0]
        j += b.shape[1]
    return out


def _vmem_limit_bytes():
    phys = 64 << 20                                # conservative fallback (v7x per-core VMEM)
    try:
        phys = int(getattr(pltpu.get_tpu_info(), 'vmem_capacity_bytes', phys))
    except Exception:
        pass
    if phys <= (64 << 20):                         # v7x-class part: ~half of physical scoped
        return max(phys // 2, 16 << 20)
    return min(phys - (32 << 20), 100 << 20)       # v5e / v6e 128 MiB parts: ~96-100 MiB


# ----------------------------- Fourier embedding Pallas kernel -----------------------------

_FOURIER_KEYS = ('freqs', 'w1c', 'w1s', 'w1x', 'b1', 'g1', 'be1', 'pool', 'expand',
                 'w2', 'b2', 'out_ln', 'w_out', 'b_out')


def _fourier_kernel(x_ref, *rest, has_cat):
    if has_cat:
        cat_ref, rest = rest[0], rest[1:]
    (freq_ref, w1c_ref, w1s_ref, w1x_ref, b1_ref, g1_ref, be1_ref, pool_ref, exp_ref,
     w2_ref, b2_ref, oln_ref, wout_ref, bout_ref, o_ref) = rest
    D = x_ref.shape[1]
    two_pi = 2.0 * math.pi
    x = x_ref[...]                                       # (R, D) f32
    freqs = freq_ref[...]                                # (D, F) f32
    # Phases for every (dim, frequency) pair, lane-flattened to (R, D*F).
    f = jnp.concatenate(
        [x[:, d:d + 1] * (two_pi * freqs[d:d + 1, :]) for d in range(D)], axis=-1)
    # Per-dim Linear(2F+1 -> H) as three block-diagonal MXU matmuls (no per-dim loop).
    h = (_mm(jnp.cos(f), w1c_ref[...]) + _mm(jnp.sin(f), w1s_ref[...])
         + _mm(x, w1x_ref[...]) + b1_ref[...])           # (R, D*H) f32
    # Per-dim LayerNorm on the lane-flattened layout via block-pooling matmuls
    # (pool averages each H block, expand broadcasts back; avoids (R, D, H) relayouts).
    pool = pool_ref[...]
    expand = exp_ref[...]
    mu = jnp.dot(jnp.dot(h, pool, preferred_element_type=jnp.float32), expand,
                 preferred_element_type=jnp.float32)
    var = jnp.dot(jnp.dot(jnp.square(h - mu), pool, preferred_element_type=jnp.float32),
                  expand, preferred_element_type=jnp.float32)
    hn = (h - mu) * jax.lax.rsqrt(var + 1e-5) * g1_ref[...] + be1_ref[...]
    # Per-dim Linear(H -> H), with the sum over dims folded into one stacked matmul.
    acc = _mm(jnp.maximum(hn, 0.0), w2_ref[...]) + b2_ref[...]              # (R, H)
    if has_cat:
        acc = acc + cat_ref[...]
    oln = oln_ref[...]
    y = jnp.maximum(_layernorm(acc, oln[0:1, :], oln[1:2, :]), 0.0)
    o_ref[...] = (_mm(y, wout_ref[...]) + bout_ref[...]).astype(o_ref.dtype)


def fourier_embedding(x, cat_emb, p, *, hidden_dim, out_dtype=jnp.float32):
    """FourierEmbedding forward.  cat_emb may be None.  Emits `out_dtype` directly
    (bf16 for the relational embeddings to halve HBM writeback)."""
    n, d_in = x.shape
    has_cat = cat_emb is not None
    tr = 1024 if n >= 1024 else max(8, _round_up(n, 8))
    n_pad = _round_up(n, tr)
    x = x.astype(jnp.float32)
    if n_pad != n:
        x = jnp.pad(x, ((0, n_pad - n), (0, 0)))
        if has_cat:
            cat_emb = jnp.pad(cat_emb, ((0, n_pad - n), (0, 0)))
    args = [x]
    in_specs = [pl.BlockSpec((tr, d_in), lambda i: (i, 0))]
    if has_cat:
        args.append(cat_emb.astype(jnp.float32))
        in_specs.append(pl.BlockSpec((tr, hidden_dim), lambda i: (i, 0)))
    weights = [p[k] for k in _FOURIER_KEYS]
    args += weights
    in_specs += [_full_spec(w.shape) for w in weights]
    out = pl.pallas_call(
        functools.partial(_fourier_kernel, has_cat=has_cat),
        out_shape=jax.ShapeDtypeStruct((n_pad, hidden_dim), out_dtype),
        grid=(n_pad // tr,),
        in_specs=in_specs,
        out_specs=pl.BlockSpec((tr, hidden_dim), lambda i: (i, 0)),
        compiler_params=pltpu.CompilerParams(
            dimension_semantics=("parallel",), vmem_limit_bytes=_vmem_limit_bytes()),
    )(*args)
    return out[:n]


# ----------------------------- attention building blocks (in-kernel) -----------------------------

def _heads_attend(q, k, v, kr, vr, adj, *, num_heads, head_dim, scale):
    """Every dst row attends over a shared src set with per-edge positional keys/values.
    q: (D, C) f32; k, v: (S, C) bf16; kr, vr: (D, S, C) bf16; adj: (D, S) bool.
    Returns (D, C) f32 aggregated messages (exactly 0 where a dst row has no edges)."""
    qb = q.astype(jnp.bfloat16)
    aggs = []
    for h in range(num_heads):
        sl = slice(h * head_dim, (h + 1) * head_dim)
        qh, kh, vh = qb[:, sl], k[:, sl], v[:, sl]
        sim = jax.lax.dot_general(qh, kh, (((1,), (1,)), ((), ())),
                                  preferred_element_type=jnp.float32)          # MXU
        sim = sim + jnp.sum(qh[:, None, :] * kr[:, :, sl], axis=-1, dtype=jnp.float32)
        sim = sim * scale
        sim = jnp.where(adj, sim, -1e30)
        mx = jnp.max(sim, axis=-1, keepdims=True)
        e = jnp.where(adj, jnp.exp(sim - mx), 0.0)
        den = jnp.sum(e, axis=-1, keepdims=True)
        attn = (e * pl.reciprocal(jnp.maximum(den, 1e-30), approx=True)).astype(jnp.bfloat16)
        aggh = jax.lax.dot_general(attn, vh, (((1,), (0,)), ((), ())),
                                   preferred_element_type=jnp.float32)         # MXU, K = S
        aggh = aggh + jnp.sum(attn[:, :, None] * vr[:, :, sl], axis=1, dtype=jnp.float32)
        aggs.append(aggh)
    return jnp.concatenate(aggs, axis=-1)


def _heads_attend_single_dst(q, keff, veff, adj, *, num_heads, head_dim, scale):
    """One dst row per batch element.  q: (B, C) f32; keff, veff: (B, T, C) bf16
    (already k + k_r / v + v_r); adj: (B, T) bool.  Returns (B, C) f32."""
    qb = q.astype(jnp.bfloat16)
    aggs = []
    for h in range(num_heads):
        sl = slice(h * head_dim, (h + 1) * head_dim)
        sim = jnp.sum(qb[:, None, sl] * keff[:, :, sl], axis=-1, dtype=jnp.float32) * scale
        sim = jnp.where(adj, sim, -1e30)
        mx = jnp.max(sim, axis=-1, keepdims=True)
        e = jnp.where(adj, jnp.exp(sim - mx), 0.0)
        den = jnp.sum(e, axis=-1, keepdims=True)
        attn = (e * pl.reciprocal(jnp.maximum(den, 1e-30), approx=True)).astype(jnp.bfloat16)
        aggs.append(jnp.sum(attn[:, :, None] * veff[:, :, sl], axis=1, dtype=jnp.float32))
    return jnp.concatenate(aggs, axis=-1)


def _gated_update_ff(x_raw, x_norm, agg, s_lin, wga, wgx, bg, wo, bo, ln_ff, w1, b1, w2, b2):
    """Gated update (QCNet), output projection, residual, and pre-norm FF block."""
    g = jax.nn.sigmoid(_mm(agg, wga) + _mm(x_norm, wgx) + bg)
    upd = agg + g * (s_lin - agg)
    x = x_raw + _mm(upd, wo) + bo
    xf = _layernorm(x, ln_ff[0:1, :], ln_ff[1:2, :])
    ff = _mm(jnp.maximum(_mm(xf, w1) + b1, 0.0), w2) + b2
    return x + ff


# ----------------------------- graph attention Pallas kernels -----------------------------

_EDGE_ATTN_KEYS = ('ln_dst', 'ln_r', 'w_ds', 'b_ds', 'w_r', 'b_r',
                   'wga', 'wgx', 'bg', 'wo', 'bo', 'ln_ff', 'w1', 'b1', 'w2', 'b2')
_TEMPORAL_ATTN_KEYS = ('ln_dst', 'ln_r', 'w_ds', 'b_ds', 'w_kv', 'b_kv', 'w_r', 'b_r',
                       'wga', 'wgx', 'bg', 'wo', 'bo', 'ln_ff', 'w1', 'b1', 'w2', 'b2')


def _edge_attn_kernel(x_dst_ref, kv_ref, r_ref, adj_ref,
                      ln_dst_ref, ln_r_ref, w_ds_ref, b_ds_ref, w_r_ref, b_r_ref,
                      wga_ref, wgx_ref, bg_ref, wo_ref, bo_ref,
                      ln_ff_ref, w1_ref, b1_ref, w2_ref, b2_ref,
                      o_ref, *, num_heads, head_dim):
    Dt, H = x_dst_ref.shape
    S = kv_ref.shape[0]
    C = num_heads * head_dim
    scale = float(head_dim) ** -0.5

    x_raw = x_dst_ref[...]                                       # (Dt, H) f32
    ln_d = ln_dst_ref[...]
    xn = _layernorm(x_raw, ln_d[0:1, :], ln_d[1:2, :])
    qs = _mm(xn, w_ds_ref[...]) + b_ds_ref[...]                  # (Dt, 2C) = [q | s]
    q, s_lin = qs[:, :C], qs[:, C:]

    kv = kv_ref[...]                                             # (S, 2C) bf16: [k | v], hoisted
    ln_r = ln_r_ref[...]
    rn = _layernorm(r_ref[...].reshape(Dt * S, H).astype(jnp.float32),
                    ln_r[0:1, :], ln_r[1:2, :])
    krvr = (_mm(rn, w_r_ref[...]) + b_r_ref[...]).astype(jnp.bfloat16).reshape(Dt, S, 2 * C)

    agg = _heads_attend(q, kv[:, :C], kv[:, C:], krvr[:, :, :C], krvr[:, :, C:],
                        adj_ref[...] > 0, num_heads=num_heads, head_dim=head_dim, scale=scale)
    o_ref[...] = _gated_update_ff(
        x_raw, xn, agg, s_lin, wga_ref[...], wgx_ref[...], bg_ref[...],
        wo_ref[...], bo_ref[...], ln_ff_ref[...], w1_ref[...], b1_ref[...],
        w2_ref[...], b2_ref[...])


def _temporal_attn_kernel(x_ref, r_ref, adj_ref,
                          ln_x_ref, ln_r_ref, w_ds_ref, b_ds_ref, w_kv_ref, b_kv_ref,
                          w_r_ref, b_r_ref, wga_ref, wgx_ref, bg_ref, wo_ref, bo_ref,
                          ln_ff_ref, w1_ref, b1_ref, w2_ref, b2_ref,
                          o_ref, *, num_heads, head_dim):
    B, T, H = x_ref.shape
    C = num_heads * head_dim
    scale = float(head_dim) ** -0.5

    x_raw = x_ref[...].reshape(B * T, H)
    ln_x = ln_x_ref[...]
    xn = _layernorm(x_raw, ln_x[0:1, :], ln_x[1:2, :])
    qs = _mm(xn, w_ds_ref[...]) + b_ds_ref[...]                  # (B*T, 2C) = [q | s]
    kv = _mm(xn, w_kv_ref[...]) + b_kv_ref[...]                  # (B*T, 2C) = [k | v]
    ln_r = ln_r_ref[...]
    rn = _layernorm(r_ref[...].reshape(B * T, H).astype(jnp.float32),
                    ln_r[0:1, :], ln_r[1:2, :])
    krvr = _mm(rn, w_r_ref[...]) + b_r_ref[...]                  # (B*T, 2C) = [k_r | v_r]

    # Only t = T-1 ever receives temporal edges (reference mask); s / gate / FF apply to all.
    q_last = qs.reshape(B, T, 2 * C)[:, T - 1, :C]               # (B, C)
    s_lin = qs[:, C:]                                            # (B*T, C)
    kveff = (kv + krvr).astype(jnp.bfloat16).reshape(B, T, 2 * C)   # [k + k_r | v + v_r]

    agg_last = _heads_attend_single_dst(
        q_last, kveff[:, :, :C], kveff[:, :, C:], adj_ref[...] > 0,
        num_heads=num_heads, head_dim=head_dim, scale=scale)     # (B, C)
    is_last = jax.lax.broadcasted_iota(jnp.int32, (1, T, 1), 1) == (T - 1)
    agg = jnp.where(is_last, agg_last[:, None, :], 0.0).reshape(B * T, C)

    out = _gated_update_ff(
        x_raw, xn, agg, s_lin, wga_ref[...], wgx_ref[...], bg_ref[...],
        wo_ref[...], bo_ref[...], ln_ff_ref[...], w1_ref[...], b1_ref[...],
        w2_ref[...], b2_ref[...])
    o_ref[...] = out.reshape(B, T, H)


# ----------------------------- VMEM-aware tile selection -----------------------------

def _pick_dst_tile(D, S, H, C):
    limit = _vmem_limit_bytes()
    budget = int(limit * 0.6)                       # headroom for pipelining slop
    per_row = S * (2 * 2 * H                        # r block, bf16, double-buffered
                   + 4 * H                          # LayerNorm(r) f32
                   + 4 * 2 * C                      # grouped k_r/v_r matmul result f32
                   + 2 * 2 * C                      # k_r/v_r bf16
                   + 2 * C + 16                     # per-head products + score temps
                   + 2)                             # adjacency, double-buffered
    per_row += 4 * (4 * H + 4 * C + 4 * H)          # x_dst / qs / out row temps
    fixed = S * 2 * 2 * C * 2 + (2 << 20)           # shared k/v + weights + slack
    tile = (budget - fixed) // max(per_row, 1)
    tile = int(max(8, min(512, (tile // 8) * 8)))
    if D > 16:                                      # keep >=2 grid steps (dual TC on v7x)
        tile = min(tile, max(8, _round_up((D + 1) // 2, 8)))
    tile = min(tile, max(8, _round_up(D, 8)))
    return tile, limit


def _pick_agent_tile(N, T, H, C):
    limit = _vmem_limit_bytes()
    budget = int(limit * 0.6)
    per_agent = T * (2 * 4 * H                      # x block f32, double-buffered
                     + 2 * 2 * H                    # r block bf16, double-buffered
                     + 2 * 4 * H                    # LN / residual temps f32
                     + 3 * 4 * 2 * C                # qs / kv / k_r-v_r projections f32
                     + 2 * 2 * C                    # keff/veff bf16
                     + 4 * 4 * H                    # FF hidden f32
                     + 64)                          # scores / misc
    fixed = 2 << 20
    tile = (budget - fixed) // max(per_agent, 1)
    tile = int(max(8, min(1024, (tile // 8) * 8)))
    if N > 16:
        tile = min(tile, max(8, _round_up((N + 1) // 2, 8)))
    tile = min(tile, max(8, _round_up(N, 8)))
    return tile, limit


# ----------------------------- attention layer wrappers -----------------------------

def attention_layer(x_src, x_dst, r, adj, p, *, num_heads, head_dim):
    """QCNet-style AttentionLayer over a dense [dst, src] adjacency.  The src-side work
    (LayerNorm + grouped k/v projection) is identical for every dst tile, so it is hoisted
    out of the Pallas grid and streamed in as an (S, 2C) bf16 blob."""
    S, H = x_src.shape
    D = x_dst.shape[0]
    C = num_heads * head_dim
    xs = _layernorm(x_src.astype(jnp.float32), p['ln_src'][0:1, :], p['ln_src'][1:2, :])
    kv = (jnp.dot(xs.astype(jnp.bfloat16), p['w_kv'],
                  preferred_element_type=jnp.float32) + p['b_kv']).astype(jnp.bfloat16)
    tile_d, vmem_limit = _pick_dst_tile(D, S, H, C)
    d_pad = _round_up(D, tile_d)
    x_dst = x_dst.astype(jnp.float32)
    r = r.astype(jnp.bfloat16)
    adj = adj.astype(jnp.int8)
    if d_pad != D:
        x_dst = jnp.pad(x_dst, ((0, d_pad - D), (0, 0)))
        r = jnp.pad(r, ((0, d_pad - D), (0, 0), (0, 0)))
        adj = jnp.pad(adj, ((0, d_pad - D), (0, 0)))
    weights = [p[k] for k in _EDGE_ATTN_KEYS]
    kernel = functools.partial(_edge_attn_kernel, num_heads=num_heads, head_dim=head_dim)
    out = pl.pallas_call(
        kernel,
        out_shape=jax.ShapeDtypeStruct((d_pad, H), jnp.float32),
        grid=(d_pad // tile_d,),
        in_specs=[pl.BlockSpec((tile_d, H), lambda i: (i, 0)),
                  _full_spec(kv.shape),
                  pl.BlockSpec((tile_d, S, H), lambda i: (i, 0, 0)),
                  pl.BlockSpec((tile_d, S), lambda i: (i, 0))]
                 + [_full_spec(w.shape) for w in weights],
        out_specs=pl.BlockSpec((tile_d, H), lambda i: (i, 0)),
        compiler_params=pltpu.CompilerParams(
            dimension_semantics=("parallel",), vmem_limit_bytes=vmem_limit),
    )(x_dst, kv, r, adj, *weights)
    return out[:D]


def attention_layer_temporal(x, r, adj, p, *, num_heads, head_dim):
    """Temporal AttentionLayer.  Destinations are only the last historical step of each agent
    (the reference mask zeroes every other dst row); the gated / FF update is still applied
    to every timestep (agg = 0 where there are no incoming edges), matching PyG add-agg."""
    N, T, H = x.shape
    C = num_heads * head_dim
    tile_b, vmem_limit = _pick_agent_tile(N, T, H, C)
    n_pad = _round_up(N, tile_b)
    x = x.astype(jnp.float32)
    r = r.astype(jnp.bfloat16)
    adj = adj.astype(jnp.int8)
    if n_pad != N:
        x = jnp.pad(x, ((0, n_pad - N), (0, 0), (0, 0)))
        r = jnp.pad(r, ((0, n_pad - N), (0, 0), (0, 0)))
        adj = jnp.pad(adj, ((0, n_pad - N), (0, 0)))
    weights = [p[k] for k in _TEMPORAL_ATTN_KEYS]
    kernel = functools.partial(_temporal_attn_kernel, num_heads=num_heads, head_dim=head_dim)
    out = pl.pallas_call(
        kernel,
        out_shape=jax.ShapeDtypeStruct((n_pad, T, H), jnp.float32),
        grid=(n_pad // tile_b,),
        in_specs=[pl.BlockSpec((tile_b, T, H), lambda i: (i, 0, 0)),
                  pl.BlockSpec((tile_b, T, H), lambda i: (i, 0, 0)),
                  pl.BlockSpec((tile_b, T), lambda i: (i, 0))]
                 + [_full_spec(w.shape) for w in weights],
        out_specs=pl.BlockSpec((tile_b, T, H), lambda i: (i, 0, 0)),
        compiler_params=pltpu.CompilerParams(
            dimension_semantics=("parallel",), vmem_limit_bytes=vmem_limit),
    )(x, r, adj, *weights)
    return out[:N]


# ----------------------------- parameter init (deterministic, synthetic) -----------------------------

def make_fourier_params(key, input_dim, hidden_dim, num_freq_bands):
    D, H, F = input_dim, hidden_dim, num_freq_bands
    ks = jax.random.split(key, 6)
    bf = jnp.bfloat16
    freqs = jax.random.normal(ks[0], (D, F), jnp.float32)
    w1c = 0.1 * jax.random.normal(ks[1], (D, F, H), jnp.float32)
    w1s = 0.1 * jax.random.normal(ks[2], (D, F, H), jnp.float32)
    w1x = 0.1 * jax.random.normal(ks[3], (D, H), jnp.float32)
    w2 = 0.1 * jax.random.normal(ks[4], (D, H, H), jnp.float32)
    w_out = 0.1 * jax.random.normal(ks[5], (H, H), jnp.float32)
    return dict(
        freqs=freqs,
        # Per-dim Linear(2F+1 -> H) realised as block-diagonal matmuls over lane-flattened
        # inputs (one wide MXU pass per weight instead of 2*D tiny ones).
        w1c=_block_diag([w1c[d] for d in range(D)]).astype(bf),            # (D*F, D*H)
        w1s=_block_diag([w1s[d] for d in range(D)]).astype(bf),            # (D*F, D*H)
        w1x=_block_diag([w1x[d:d + 1] for d in range(D)]).astype(bf),      # (D,   D*H)
        b1=jnp.zeros((1, D * H), jnp.float32),
        g1=jnp.ones((1, D * H), jnp.float32),                              # per-dim LN gamma
        be1=jnp.zeros((1, D * H), jnp.float32),                            # per-dim LN beta
        pool=_block_diag([jnp.full((H, 1), 1.0 / H, jnp.float32)] * D),    # (D*H, D) block mean
        expand=_block_diag([jnp.ones((1, H), jnp.float32)] * D),           # (D, D*H) broadcast
        w2=jnp.concatenate([w2[d] for d in range(D)], axis=0).astype(bf),  # (D*H, H) sum over d
        b2=jnp.zeros((1, H), jnp.float32),
        out_ln=jnp.stack([jnp.ones((H,)), jnp.zeros((H,))], 0).astype(jnp.float32),
        w_out=w_out.astype(bf),
        b_out=jnp.zeros((1, H), jnp.float32),
    )


def make_attention_params(key, hidden_dim, num_heads, head_dim):
    H, C = hidden_dim, num_heads * head_dim
    ks = jax.random.split(key, 11)
    bf = jnp.bfloat16
    ln = jnp.stack([jnp.ones((H,)), jnp.zeros((H,))], axis=0).astype(jnp.float32)
    rnd = lambda k, s: 0.1 * jax.random.normal(k, s, jnp.float32)
    wq, wk, wv, ws = rnd(ks[0], (H, C)), rnd(ks[1], (H, C)), rnd(ks[2], (H, C)), rnd(ks[3], (H, C))
    wkr, wvr = rnd(ks[4], (H, C)), rnd(ks[5], (H, C))
    return dict(
        # Non-bipartite layers tie src/dst prenorm; identical values make both cases coincide.
        ln_src=ln, ln_dst=ln, ln_r=ln, ln_ff=ln,
        # Grouped projections (columns reordered so each activation hits ONE matmul):
        #   x_dst -> [q | s], x_src -> [k | v], LN(r) -> [k_r | v_r].
        # k / k_r have no bias in the reference; their bias slots are structurally zero.
        w_ds=jnp.concatenate([wq, ws], axis=1).astype(bf),
        b_ds=jnp.zeros((1, 2 * C), jnp.float32),
        w_kv=jnp.concatenate([wk, wv], axis=1).astype(bf),
        b_kv=jnp.zeros((1, 2 * C), jnp.float32),
        w_r=jnp.concatenate([wkr, wvr], axis=1).astype(bf),
        b_r=jnp.zeros((1, 2 * C), jnp.float32),
        wga=rnd(ks[6], (C, C)).astype(bf),                 # gate: agg half of to_g
        wgx=rnd(ks[7], (H, C)).astype(bf),                 # gate: x_dst half of to_g
        bg=jnp.zeros((1, C), jnp.float32),
        wo=rnd(ks[8], (C, H)).astype(bf), bo=jnp.zeros((1, H), jnp.float32),
        w1=rnd(ks[9], (H, 4 * H)).astype(bf), b1=jnp.zeros((1, 4 * H), jnp.float32),
        w2=rnd(ks[10], (4 * H, H)).astype(bf), b2=jnp.zeros((1, H), jnp.float32),
    )


def init_params(key, cfg):
    mcfg = cfg['model']
    acfg = mcfg['agent_encoder']
    H = mcfg['hidden_dim']
    input_dim = mcfg['input_dim']
    F = acfg['num_freq_bands']
    L = acfg['num_layers']
    nh, hd = acfg['num_heads'], acfg['head_dim']
    keys = iter(jax.random.split(key, 5 + 3 * L))
    p = {}
    p['type_a_emb'] = 0.1 * jax.random.normal(next(keys), (5, H), jnp.float32)
    p['x_a_emb'] = make_fourier_params(next(keys), 4 + input_dim, H, F)
    p['r_t_emb'] = make_fourier_params(next(keys), 4, H, F)
    p['r_pl2a_emb'] = make_fourier_params(next(keys), 3, H, F)
    p['r_a2a_emb'] = make_fourier_params(next(keys), 3, H, F)
    p['t_attn'] = [make_attention_params(next(keys), H, nh, hd) for _ in range(L)]
    p['pl2a_attn'] = [make_attention_params(next(keys), H, nh, hd) for _ in range(L)]
    p['a2a_attn'] = [make_attention_params(next(keys), H, nh, hd) for _ in range(L)]
    return p


# ----------------------------- AgentEncoder forward -----------------------------

def agent_encoder_forward(data, map_enc, params, cfg):
    mcfg = cfg['model']
    acfg = mcfg['agent_encoder']
    input_dim = mcfg['input_dim']
    H = mcfg['hidden_dim']
    T = mcfg['num_historical_steps']
    L = acfg['num_layers']
    nh, hd = acfg['num_heads'], acfg['head_dim']
    time_span = acfg['time_span']
    a2a_radius = acfg['a2a_radius']
    pl2a_radius = acfg['pl2a_radius']

    N = data['agent_xyz'].shape[0]
    M = data['rg_points'].shape[0]

    mask = data['agent_valid'][:, :T, 0]                                   # (N, T) bool
    pos_a = data['agent_xyz'][:, :T, :input_dim].astype(jnp.float32)       # (N, T, 2)
    motion = jnp.concatenate(
        [jnp.zeros((N, 1, input_dim), jnp.float32), pos_a[:, 1:] - pos_a[:, :-1]], axis=1)
    head_a = data['agent_heading'][:, :T, 0].astype(jnp.float32)           # (N, T)
    head_vec = jnp.stack([jnp.cos(head_a), jnp.sin(head_a)], axis=-1)      # (N, T, 2)
    pl_pts = data['rg_points'].astype(jnp.float32)
    pos_pl = pl_pts[:, :input_dim]
    head_pl = jnp.arctan2(pl_pts[:, 4], pl_pts[:, 3])
    vel = data['agent_vel'][:, :T].astype(jnp.float32)
    shp = data['agent_shape'][:, :T].astype(jnp.float32)
    length, width = shp[..., 0], shp[..., 1]                               # input_dim == 2

    cat_emb = jnp.repeat(params['type_a_emb'][data['agent_type']], T, axis=0)   # (N*T, H)

    x_a_feat = jnp.stack([
        jnp.linalg.norm(motion[:, :, :2], axis=-1),
        angle_between_2d(head_vec, motion[:, :, :2]),
        jnp.linalg.norm(vel[:, :, :2], axis=-1),
        angle_between_2d(head_vec, vel[:, :, :2]),
        length, width], axis=-1)                                           # (N, T, 6)
    x_a = fourier_embedding(x_a_feat.reshape(-1, 4 + input_dim), cat_emb,
                            params['x_a_emb'], hidden_dim=H).reshape(N, T, H)

    # ---- temporal graph: the reference mask (mask_t[..., :-1] = False) only keeps dst = T-1,
    #      so r_t/adj_t are built for that single dst row per agent (T x less work). ----
    t_idx = jnp.arange(T)
    adj_t = (mask[:, T - 1:T] & mask
             & (t_idx[None, :] < T - 1)
             & ((T - 1 - t_idx)[None, :] <= time_span))                    # (N, T) src mask
    pos_last, head_last = pos_a[:, T - 1], head_a[:, T - 1]
    hv_last = jnp.broadcast_to(head_vec[:, T - 1][:, None, :], (N, T, 2))
    rel_pos_t = pos_last[:, None, :] - pos_a                               # dst - src
    rel_head_t = wrap_angle(head_last[:, None] - head_a)
    dt = (t_idx - (T - 1)).astype(jnp.float32)                             # src idx - dst idx
    r_t_feat = jnp.stack([
        jnp.linalg.norm(rel_pos_t[..., :2], axis=-1),
        angle_between_2d(hv_last, rel_pos_t[..., :2]),
        rel_head_t,
        jnp.broadcast_to(dt[None, :], (N, T))], axis=-1)                   # (N, T, 4)
    r_t = fourier_embedding(r_t_feat.reshape(-1, 4), None, params['r_t_emb'],
                            hidden_dim=H, out_dtype=jnp.bfloat16).reshape(N, T, H)
    adj_t = adj_t.astype(jnp.int8)

    # ---- current-step quantities ----
    pos_s, head_s = pos_a[:, -1], head_a[:, -1]
    hv_s, mask_s = head_vec[:, -1], mask[:, -1]
    batch_s, batch_pl = data['agent_batch'], data['rg_batch']

    # ---- roadgraph -> agent edges ----
    dist_pl2a = jnp.linalg.norm(pos_pl[None, :, :2] - pos_s[:, None, :2], axis=-1)
    adj_pl2a = ((batch_s[:, None] == batch_pl[None, :]) & (dist_pl2a <= pl2a_radius)
                & mask_s[:, None])
    rel_pos_pl2a = pos_pl[None, :, :] - pos_s[:, None, :]                  # src - dst
    rel_head_pl2a = wrap_angle(head_pl[None, :] - head_s[:, None])
    hv_s_pl = jnp.broadcast_to(hv_s[:, None, :], (N, M, 2))
    r_pl2a_feat = jnp.stack([
        jnp.linalg.norm(rel_pos_pl2a[..., :2], axis=-1),
        angle_between_2d(hv_s_pl, rel_pos_pl2a[..., :2]),
        rel_head_pl2a], axis=-1)                                           # (N, M, 3)
    r_pl2a = fourier_embedding(r_pl2a_feat.reshape(-1, 3), None, params['r_pl2a_emb'],
                               hidden_dim=H, out_dtype=jnp.bfloat16).reshape(N, M, H)
    adj_pl2a = adj_pl2a.astype(jnp.int8)

    # ---- agent -> agent edges ----
    dist_a2a = jnp.linalg.norm(pos_s[None, :, :] - pos_s[:, None, :], axis=-1)
    adj_a2a = ((batch_s[:, None] == batch_s[None, :]) & (dist_a2a <= a2a_radius)
               & (~jnp.eye(N, dtype=bool)) & mask_s[:, None] & mask_s[None, :])
    rel_pos_a2a = pos_s[None, :, :] - pos_s[:, None, :]                    # src - dst
    rel_head_a2a = wrap_angle(head_s[None, :] - head_s[:, None])
    hv_s_a = jnp.broadcast_to(hv_s[:, None, :], (N, N, 2))
    r_a2a_feat = jnp.stack([
        jnp.linalg.norm(rel_pos_a2a[..., :2], axis=-1),
        angle_between_2d(hv_s_a, rel_pos_a2a[..., :2]),
        rel_head_a2a], axis=-1)                                            # (N, N, 3)
    r_a2a = fourier_embedding(r_a2a_feat.reshape(-1, 3), None, params['r_a2a_emb'],
                              hidden_dim=H, out_dtype=jnp.bfloat16).reshape(N, N, H)
    adj_a2a = adj_a2a.astype(jnp.int8)

    # ---- stacked attention layers ----
    x_a_his, x_a_cur = x_a[:, :-1], x_a[:, -1]
    for i in range(L):
        x3d = jnp.concatenate([x_a_his, x_a_cur[:, None, :]], axis=1)      # (N, T, H)
        x_a = attention_layer_temporal(x3d, r_t, adj_t, params['t_attn'][i],
                                       num_heads=nh, head_dim=hd)
        x_a_his, x_a_cur = x_a[:, :-1], x_a[:, -1]
        x_a_cur = attention_layer(map_enc, x_a_cur, r_pl2a, adj_pl2a,
                                  params['pl2a_attn'][i], num_heads=nh, head_dim=hd)
        x_a_cur = attention_layer(x_a_cur, x_a_cur, r_a2a, adj_a2a,
                                  params['a2a_attn'][i], num_heads=nh, head_dim=hd)
    # As in the reference, the returned 'agent' tensor is the output of the last temporal
    # attention; the final pl2a/a2a updates only touch x_a_cur (discarded here).
    return {'agent': x_a, 'roadgraph': map_enc}


# ----------------------------- demo -----------------------------

if __name__ == "__main__":
    cfg = {'model': {
        'input_dim': 2, 'hidden_dim': 32, 'num_historical_steps': 8,
        'agent_encoder': {
            'time_span': 4, 'a2a_radius': 50.0, 'pl2a_radius': 50.0,
            'num_freq_bands': 4, 'num_layers': 2, 'num_heads': 2,
            'head_dim': 16, 'dropout': 0.1,   # dropout: identity (eval mode)
        }}}

    key = jax.random.PRNGKey(0)
    kd, kp = jax.random.split(key)
    N, M = 8, 8
    T = cfg['model']['num_historical_steps']
    H = cfg['model']['hidden_dim']
    ks = jax.random.split(kd, 8)

    data = {
        'agent_xyz': 10.0 * jax.random.normal(ks[0], (N, T, 3), jnp.float32),
        'agent_heading': jax.random.uniform(ks[1], (N, T, 1), jnp.float32, -math.pi, math.pi),
        'agent_vel': jax.random.normal(ks[2], (N, T, 3), jnp.float32),
        'agent_shape': jax.random.uniform(ks[3], (N, T, 3), jnp.float32, 1.0, 5.0),
        'agent_valid': jax.random.uniform(ks[4], (N, T, 1)) > 0.1,
        'agent_type': jax.random.randint(ks[5], (N,), 0, 5),
        'agent_batch': jnp.array([0, 0, 0, 0, 1, 1, 1, 1], jnp.int32),
        'rg_points': 10.0 * jax.random.normal(ks[6], (M, 7), jnp.float32),
        'rg_batch': jnp.array([0, 0, 0, 0, 1, 1, 1, 1], jnp.int32),
    }
    map_enc = jax.random.normal(ks[7], (M, H), jnp.float32)

    params = init_params(kp, cfg)
    out = agent_encoder_forward(data, map_enc, params, cfg)
    jax.block_until_ready(out['agent'])
    assert out['agent'].shape == (N, T, H)
    assert out['roadgraph'].shape == (M, H)
    assert bool(jnp.all(jnp.isfinite(out['agent'])))
    print("KERNEL_OK")
</pallas_src>

<mosaic_0001>
module attributes {stable_mosaic.version = 11 : i64} {
  func.func @_fourier_kernel(%arg0: i32, %arg1: memref<64x6xf32, #tpu.memory_space<vmem>>, %arg2: memref<64x32xf32, #tpu.memory_space<vmem>>, %arg3: memref<6x4xf32, #tpu.memory_space<vmem>>, %arg4: memref<24x192xbf16, #tpu.memory_space<vmem>>, %arg5: memref<24x192xbf16, #tpu.memory_space<vmem>>, %arg6: memref<6x192xbf16, #tpu.memory_space<vmem>>, %arg7: memref<1x192xf32, #tpu.memory_space<vmem>>, %arg8: memref<1x192xf32, #tpu.memory_space<vmem>>, %arg9: memref<1x192xf32, #tpu.memory_space<vmem>>, %arg10: memref<192x6xf32, #tpu.memory_space<vmem>>, %arg11: memref<6x192xf32, #tpu.memory_space<vmem>>, %arg12: memref<192x32xbf16, #tpu.memory_space<vmem>>, %arg13: memref<1x32xf32, #tpu.memory_space<vmem>>, %arg14: memref<2x32xf32, #tpu.memory_space<vmem>>, %arg15: memref<32x32xbf16, #tpu.memory_space<vmem>>, %arg16: memref<1x32xf32, #tpu.memory_space<vmem>>, %arg17: memref<64x32xf32, #tpu.memory_space<vmem>>) attributes {dimension_semantics = [#tpu.dimension_semantics<parallel>], iteration_bounds = array<i64: 1>, scalar_prefetch = 0 : i64, scratch_operands = 0 : i64, tpu.core_type = #tpu.core_type<tc>, window_params = [{transform_indices = @transform_0, window_bounds = array<i64: 64, 6>}, {transform_indices = @transform_1, window_bounds = array<i64: 64, 32>}, {pipeline_mode = #tpu.pipeline_mode<synchronous>, transform_indices = @transform_2, window_bounds = array<i64: 6, 4>}, {pipeline_mode = #tpu.pipeline_mode<synchronous>, transform_indices = @transform_3, window_bounds = array<i64: 24, 192>}, {pipeline_mode = #tpu.pipeline_mode<synchronous>, transform_indices = @transform_4, window_bounds = array<i64: 24, 192>}, {pipeline_mode = #tpu.pipeline_mode<synchronous>, transform_indices = @transform_5, window_bounds = array<i64: 6, 192>}, {pipeline_mode = #tpu.pipeline_mode<synchronous>, transform_indices = @transform_6, window_bounds = array<i64: 1, 192>}, {pipeline_mode = #tpu.pipeline_mode<synchronous>, transform_indices = @transform_7, window_bounds = array<i64: 1, 192>}, {pipeline_mode = #tpu.pipeline_mode<synchronous>, transform_indices = @transform_8, window_bounds = array<i64: 1, 192>}, {pipeline_mode = #tpu.pipeline_mode<synchronous>, transform_indices = @transform_9, window_bounds = array<i64: 192, 6>}, {pipeline_mode = #tpu.pipeline_mode<synchronous>, transform_indices = @transform_10, window_bounds = array<i64: 6, 192>}, {pipeline_mode = #tpu.pipeline_mode<synchronous>, transform_indices = @transform_11, window_bounds = array<i64: 192, 32>}, {pipeline_mode = #tpu.pipeline_mode<synchronous>, transform_indices = @transform_12, window_bounds = array<i64: 1, 32>}, {pipeline_mode = #tpu.pipeline_mode<synchronous>, transform_indices = @transform_13, window_bounds = array<i64: 2, 32>}, {pipeline_mode = #tpu.pipeline_mode<synchronous>, transform_indices = @transform_14, window_bounds = array<i64: 32, 32>}, {pipeline_mode = #tpu.pipeline_mode<synchronous>, transform_indices = @transform_15, window_bounds = array<i64: 1, 32>}, {transform_indices = @transform_16, window_bounds = array<i64: 64, 32>}]} {
    %c0 = arith.constant 0 : index
    %c0_0 = arith.constant 0 : index
    %0 = vector.load %arg1[%c0, %c0_0] : memref<64x6xf32, #tpu.memory_space<vmem>>, vector<64x6xf32>
    %c0_1 = arith.constant 0 : index
    %c0_2 = arith.constant 0 : index
    %1 = vector.load %arg3[%c0_1, %c0_2] : memref<6x4xf32, #tpu.memory_space<vmem>>, vector<6x4xf32>
    %2 = vector.extract_strided_slice %0 {offsets = [0, 0], sizes = [64, 1], strides = [1, 1]} : vector<64x6xf32> to vector<64x1xf32>
    %3 = vector.extract_strided_slice %1 {offsets = [0, 0], sizes = [1, 4], strides = [1, 1]} : vector<6x4xf32> to vector<1x4xf32>
    %cst = arith.constant 6.28318548 : f32
    %4 = vector.broadcast %cst : f32 to vector<1x4xf32>
    %5 = arith.mulf %4, %3 : vector<1x4xf32>
    %6 = vector.broadcast %2 : vector<64x1xf32> to vector<64x4xf32>
    %7 = vector.broadcast %5 : vector<1x4xf32> to vector<64x4xf32>
    %8 = arith.mulf %6, %7 : vector<64x4xf32>
    %9 = vector.extract_strided_slice %0 {offsets = [0, 1], sizes = [64, 1], strides = [1, 1]} : vector<64x6xf32> to vector<64x1xf32>
    %10 = vector.extract_strided_slice %1 {offsets = [1, 0], sizes = [1, 4], strides = [1, 1]} : vector<6x4xf32> to vector<1x4xf32>
    %cst_3 = arith.constant 6.28318548 : f32
    %11 = vector.broadcast %cst_3 : f32 to vector<1x4xf32>
    %12 = arith.mulf %11, %10 : vector<1x4xf32>
    %13 = vector.broadcast %9 : vector<64x1xf32> to vector<64x4xf32>
    %14 = vector.broadcast %12 : vector<1x4xf32> to vector<64x4xf32>
    %15 = arith.mulf %13, %14 : vector<64x4xf32>
    %16 = vector.extract_strided_slice %0 {offsets = [0, 2], sizes = [64, 1], strides = [1, 1]} : vector<64x6xf32> to vector<64x1xf32>
    %17 = vector.extract_strided_slice %1 {offsets = [2, 0], sizes = [1, 4], strides = [1, 1]} : vector<6x4xf32> to vector<1x4xf32>
    %cst_4 = arith.constant 6.28318548 : f32
    %18 = vector.broadcast %cst_4 : f32 to vector<1x4xf32>
    %19 = arith.mulf %18, %17 : vector<1x4xf32>
    %20 = vector.broadcast %16 : vector<64x1xf32> to vector<64x4xf32>
    %21 = vector.broadcast %19 : vector<1x4xf32> to vector<64x4xf32>
    %22 = arith.mulf %20, %21 : vector<64x4xf32>
    %23 = vector.extract_strided_slice %0 {offsets = [0, 3], sizes = [64, 1], strides = [1, 1]} : vector<64x6xf32> to vector<64x1xf32>
    %24 = vector.extract_strided_slice %1 {offsets = [3, 0], sizes = [1, 4], strides = [1, 1]} : vector<6x4xf32> to vector<1x4xf32>
    %cst_5 = arith.constant 6.28318548 : f32
    %25 = vector.broadcast %cst_5 : f32 to vector<1x4xf32>
    %26 = arith.mulf %25, %24 : vector<1x4xf32>
    %27 = vector.broadcast %23 : vector<64x1xf32> to vector<64x4xf32>
    %28 = vector.broadcast %26 : vector<1x4xf32> to vector<64x4xf32>
    %29 = arith.mulf %27, %28 : vector<64x4xf32>
    %30 = vector.extract_strided_slice %0 {offsets = [0, 4], sizes = [64, 1], strides = [1, 1]} : vector<64x6xf32> to vector<64x1xf32>
    %31 = vector.extract_strided_slice %1 {offsets = [4, 0], sizes = [1, 4], strides = [1, 1]} : vector<6x4xf32> to vector<1x4xf32>
    %cst_6 = arith.constant 6.28318548 : f32
    %32 = vector.broadcast %cst_6 : f32 to vector<1x4xf32>
    %33 = arith.mulf %32, %31 : vector<1x4xf32>
    %34 = vector.broadcast %30 : vector<64x1xf32> to vector<64x4xf32>
    %35 = vector.broadcast %33 : vector<1x4xf32> to vector<64x4xf32>
    %36 = arith.mulf %34, %35 : vector<64x4xf32>
    %37 = vector.extract_strided_slice %0 {offsets = [0, 5], sizes = [64, 1], strides = [1, 1]} : vector<64x6xf32> to vector<64x1xf32>
    %38 = vector.extract_strided_slice %1 {offsets = [5, 0], sizes = [1, 4], strides = [1, 1]} : vector<6x4xf32> to vector<1x4xf32>
    %cst_7 = arith.constant 6.28318548 : f32
    %39 = vector.broadcast %cst_7 : f32 to vector<1x4xf32>
    %40 = arith.mulf %39, %38 : vector<1x4xf32>
    %41 = vector.broadcast %37 : vector<64x1xf32> to vector<64x4xf32>
    %42 = vector.broadcast %40 : vector<1x4xf32> to vector<64x4xf32>
    %43 = arith.mulf %41, %42 : vector<64x4xf32>
    %44 = tpu.concatenate %8, %15, %22, %29, %36, %43 in 1 : vector<64x4xf32>, vector<64x4xf32>, vector<64x4xf32>, vector<64x4xf32>, vector<64x4xf32>, vector<64x4xf32> -> vector<64x24xf32>
    %45 = math.cos %44 : vector<64x24xf32>
    %c0_8 = arith.constant 0 : index
    %c0_9 = arith.constant 0 : index
    %46 = vector.load %arg4[%c0_8, %c0_9] : memref<24x192xbf16, #tpu.memory_space<vmem>>, vector<24x192xbf16>
    %47 = arith.truncf %45 : vector<64x24xf32> to vector<64x24xbf16>
    %cst_10 = arith.constant dense<0.000000e+00> : vector<64x192xf32>
    %48 = tpu.matmul %47, %46, %cst_10 {dimension_numbers = #tpu.dot_dimension_numbers<[1], [0], [0], [1], [0, 0, 1, 1], [], []>} : vector<64x24xbf16>, vector<24x192xbf16>, vector<64x192xf32> -> vector<64x192xf32>
    %49 = math.sin %44 : vector<64x24xf32>
    %c0_11 = arith.constant 0 : index
    %c0_12 = arith.constant 0 : index
    %50 = vector.load %arg5[%c0_11, %c0_12] : memref<24x192xbf16, #tpu.memory_space<vmem>>, vector<24x192xbf16>
    %51 = arith.truncf %49 : vector<64x24xf32> to vector<64x24xbf16>
    %cst_13 = arith.constant dense<0.000000e+00> : vector<64x192xf32>
    %52 = tpu.matmul %51, %50, %cst_13 {dimension_numbers = #tpu.dot_dimension_numbers<[1], [0], [0], [1], [0, 0, 1, 1], [], []>} : vector<64x24xbf16>, vector<24x192xbf16>, vector<64x192xf32> -> vector<64x192xf32>
    %53 = arith.addf %48, %52 : vector<64x192xf32>
    %c0_14 = arith.constant 0 : index
    %c0_15 = arith.constant 0 : index
    %54 = vector.load %arg6[%c0_14, %c0_15] : memref<6x192xbf16, #tpu.memory_space<vmem>>, vector<6x192xbf16>
    %55 = arith.truncf %0 : vector<64x6xf32> to vector<64x6xbf16>
    %cst_16 = arith.constant dense<0.000000e+00> : vector<64x192xf32>
    %56 = tpu.matmul %55, %54, %cst_16 {dimension_numbers = #tpu.dot_dimension_numbers<[1], [0], [0], [1], [0, 0, 1, 1], [], []>} : vector<64x6xbf16>, vector<6x192xbf16>, vector<64x192xf32> -> vector<64x192xf32>
    %57 = arith.addf %53, %56 : vector<64x192xf32>
    %c0_17 = arith.constant 0 : index
    %c0_18 = arith.constant 0 : index
    %58 = vector.load %arg7[%c0_17, %c0_18] : memref<1x192xf32, #tpu.memory_space<vmem>>, vector<1x192xf32>
    %59 = vector.broadcast %58 : vector<1x192xf32> to vector<64x192xf32>
    %60 = arith.addf %57, %59 : vector<64x192xf32>
    %c0_19 = arith.constant 0 : index
    %c0_20 = arith.constant 0 : index
    %61 = vector.load %arg10[%c0_19, %c0_20] : memref<192x6xf32, #tpu.memory_space<vmem>>, vector<192x6xf32>
    %c0_21 = arith.constant 0 : index
    %c0_22 = arith.constant 0 : index
    %62 = vector.load %arg11[%c0_21, %c0_22] : memref<6x192xf32, #tpu.memory_space<vmem>>, vector<6x192xf32>
    %cst_23 = arith.constant dense<0.000000e+00> : vector<64x6xf32>
    %63 = tpu.matmul %60, %61, %cst_23 {dimension_numbers = #tpu.dot_dimension_numbers<[1], [0], [0], [1], [0, 0, 1, 1], [], []>} : vector<64x192xf32>, vector<192x6xf32>, vector<64x6xf32> -> vector<64x6xf32>
    %cst_24 = arith.constant dense<0.000000e+00> : vector<64x192xf32>
    %64 = tpu.matmul %63, %62, %cst_24 {dimension_numbers = #tpu.dot_dimension_numbers<[1], [0], [0], [1], [0, 0, 1, 1], [], []>} : vector<64x6xf32>, vector<6x192xf32>, vector<64x192xf32> -> vector<64x192xf32>
    %65 = arith.subf %60, %64 : vector<64x192xf32>
    %66 = arith.mulf %65, %65 : vector<64x192xf32>
    %cst_25 = arith.constant dense<0.000000e+00> : vector<64x6xf32>
    %67 = tpu.matmul %66, %61, %cst_25 {dimension_numbers = #tpu.dot_dimension_numbers<[1], [0], [0], [1], [0, 0, 1, 1], [], []>} : vector<64x192xf32>, vector<192x6xf32>, vector<64x6xf32> -> vector<64x6xf32>
    %cst_26 = arith.constant dense<0.000000e+00> : vector<64x192xf32>
    %68 = tpu.matmul %67, %62, %cst_26 {dimension_numbers = #tpu.dot_dimension_numbers<[1], [0], [0], [1], [0, 0, 1, 1], [], []>} : vector<64x6xf32>, vector<6x192xf32>, vector<64x192xf32> -> vector<64x192xf32>
    %69 = arith.subf %60, %64 : vector<64x192xf32>
    %cst_27 = arith.constant 9.99999974E-6 : f32
    %70 = vector.broadcast %cst_27 : f32 to vector<64x192xf32>
    %71 = arith.addf %68, %70 : vector<64x192xf32>
    %72 = math.rsqrt %71 : vector<64x192xf32>
    %73 = arith.mulf %69, %72 : vector<64x192xf32>
    %c0_28 = arith.constant 0 : index
    %c0_29 = arith.constant 0 : index
    %74 = vector.load %arg8[%c0_28, %c0_29] : memref<1x192xf32, #tpu.memory_space<vmem>>, vector<1x192xf32>
    %75 = vector.broadcast %74 : vector<1x192xf32> to vector<64x192xf32>
    %76 = arith.mulf %73, %75 : vector<64x192xf32>
    %c0_30 = arith.constant 0 : index
    %c0_31 = arith.constant 0 : index
    %77 = vector.load %arg9[%c0_30, %c0_31] : memref<1x192xf32, #tpu.memory_space<vmem>>, vector<1x192xf32>
    %78 = vector.broadcast %77 : vector<1x192xf32> to vector<64x192xf32>
    %79 = arith.addf %76, %78 : vector<64x192xf32>
    %cst_32 = arith.constant 0.000000e+00 : f32
    %80 = vector.broadcast %cst_32 : f32 to vector<64x192xf32>
    %81 = arith.maximumf %79, %80 : vector<64x192xf32>
    %c0_33 = arith.constant 0 : index
    %c0_34 = arith.constant 0 : index
    %82 = vector.load %arg12[%c0_33, %c0_34] : memref<192x32xbf16, #tpu.memory_space<vmem>>, vector<192x32xbf16>
    %83 = arith.truncf %81 : vector<64x192xf32> to vector<64x192xbf16>
    %cst_35 = arith.constant dense<0.000000e+00> : vector<64x32xf32>
    %84 = tpu.matmul %83, %82, %cst_35 {dimension_numbers = #tpu.dot_dimension_numbers<[1], [0], [0], [1], [0, 0, 1, 1], [], []>} : vector<64x192xbf16>, vector<192x32xbf16>, vector<64x32xf32> -> vector<64x32xf32>
    %c0_36 = arith.constant 0 : index
    %c0_37 = arith.constant 0 : index
    %85 = vector.load %arg13[%c0_36, %c0_37] : memref<1x32xf32, #tpu.memory_space<vmem>>, vector<1x32xf32>
    %86 = vector.broadcast %85 : vector<1x32xf32> to vector<64x32xf32>
    %87 = arith.addf %84, %86 : vector<64x32xf32>
    %c0_38 = arith.constant 0 : index
    %c0_39 = arith.constant 0 : index
    %88 = vector.load %arg2[%c0_38, %c0_39] : memref<64x32xf32, #tpu.memory_space<vmem>>, vector<64x32xf32>
    %89 = arith.addf %87, %88 : vector<64x32xf32>
    %c0_40 = arith.constant 0 : index
    %c0_41 = arith.constant 0 : index
    %90 = vector.load %arg14[%c0_40, %c0_41] : memref<2x32xf32, #tpu.memory_space<vmem>>, vector<2x32xf32>
    %91 = vector.extract_strided_slice %90 {offsets = [0, 0], sizes = [1, 32], strides = [1, 1]} : vector<2x32xf32> to vector<1x32xf32>
    %92 = vector.extract_strided_slice %90 {offsets = [1, 0], sizes = [1, 32], strides = [1, 1]} : vector<2x32xf32> to vector<1x32xf32>
    %cst_42 = arith.constant dense<0.000000e+00> : vector<64xf32>
    %93 = vector.multi_reduction <add>, %89, %cst_42 [1] : vector<64x32xf32> to vector<64xf32>
    %94 = vector.shape_cast %93 : vector<64xf32> to vector<64x1xf32>
    %cst_43 = arith.constant 3.200000e+01 : f32
    %95 = vector.broadcast %cst_43 : f32 to vector<64x1xf32>
    %96 = arith.divf %94, %95 : vector<64x1xf32>
    %97 = vector.broadcast %96 : vector<64x1xf32> to vector<64x32xf32>
    %98 = arith.subf %89, %97 : vector<64x32xf32>
    %99 = arith.mulf %98, %98 : vector<64x32xf32>
    %cst_44 = arith.constant dense<0.000000e+00> : vector<64xf32>
    %100 = vector.multi_reduction <add>, %99, %cst_44 [1] : vector<64x32xf32> to vector<64xf32>
    %101 = vector.shape_cast %100 : vector<64xf32> to vector<64x1xf32>
    %cst_45 = arith.constant 3.200000e+01 : f32
    %102 = vector.broadcast %cst_45 : f32 to vector<64x1xf32>
    %103 = arith.divf %101, %102 : vector<64x1xf32>
    %104 = vector.broadcast %96 : vector<64x1xf32> to vector<64x32xf32>
    %105 = arith.subf %89, %104 : vector<64x32xf32>
    %cst_46 = arith.constant 9.99999974E-6 : f32
    %106 = vector.broadcast %cst_46 : f32 to vector<64x1xf32>
    %107 = arith.addf %103, %106 : vector<64x1xf32>
    %108 = math.rsqrt %107 : vector<64x1xf32>
    %109 = vector.broadcast %108 : vector<64x1xf32> to vector<64x32xf32>
    %110 = arith.mulf %105, %109 : vector<64x32xf32>
    %111 = vector.broadcast %91 : vector<1x32xf32> to vector<64x32xf32>
    %112 = arith.mulf %110, %111 : vector<64x32xf32>
    %113 = vector.broadcast %92 : vector<1x32xf32> to vector<64x32xf32>
    %114 = arith.addf %112, %113 : vector<64x32xf32>
    %cst_47 = arith.constant 0.000000e+00 : f32
    %115 = vector.broadcast %cst_47 : f32 to vector<64x32xf32>
    %116 = arith.maximumf %114, %115 : vector<64x32xf32>
    %c0_48 = arith.constant 0 : index
    %c0_49 = arith.constant 0 : index
    %117 = vector.load %arg15[%c0_48, %c0_49] : memref<32x32xbf16, #tpu.memory_space<vmem>>, vector<32x32xbf16>
    %118 = arith.truncf %116 : vector<64x32xf32> to vector<64x32xbf16>
    %cst_50 = arith.constant dense<0.000000e+00> : vector<64x32xf32>
    %119 = tpu.matmul %118, %117, %cst_50 {dimension_numbers = #tpu.dot_dimension_numbers<[1], [0], [0], [1], [0, 0, 1, 1], [], []>} : vector<64x32xbf16>, vector<32x32xbf16>, vector<64x32xf32> -> vector<64x32xf32>
    %c0_51 = arith.constant 0 : index
    %c0_52 = arith.constant 0 : index
    %120 = vector.load %arg16[%c0_51, %c0_52] : memref<1x32xf32, #tpu.memory_space<vmem>>, vector<1x32xf32>
    %121 = vector.broadcast %120 : vector<1x32xf32> to vector<64x32xf32>
    %122 = arith.addf %119, %121 : vector<64x32xf32>
    %c0_53 = arith.constant 0 : index
    %c0_54 = arith.constant 0 : index
    %123 = vector.load %arg17[%c0_53, %c0_54] : memref<64x32xf32, #tpu.memory_space<vmem>>, vector<64x32xf32>
    tpu.vector_store %arg17[%c0_53, %c0_54], %122 {strides = array<i32>} : memref<64x32xf32, #tpu.memory_space<vmem>>, vector<64x32xf32>,
    return
  }
  func.func @transform_0(%arg0: i32) -> (i32, i32) {
    %c0_i32 = arith.constant 0 : i32
    %c0_i32_0 = arith.constant 0 : i32
    return %arg0, %c0_i32 : i32, i32
  }
  func.func @transform_1(%arg0: i32) -> (i32, i32) {
    %c0_i32 = arith.constant 0 : i32
    %c0_i32_0 = arith.constant 0 : i32
    return %arg0, %c0_i32 : i32, i32
  }
  func.func @transform_2(%arg0: i32) -> (i32, i32) {
    %c0_i32 = arith.constant 0 : i32
    %c0_i32_0 = arith.constant 0 : i32
    %c0_i32_1 = arith.constant 0 : i32
    return %c0_i32, %c0_i32_0 : i32, i32
  }
  func.func @transform_3(%arg0: i32) -> (i32, i32) {
    %c0_i32 = arith.constant 0 : i32
    %c0_i32_0 = arith.constant 0 : i32
    %c0_i32_1 = arith.constant 0 : i32
    return %c0_i32, %c0_i32_0 : i32, i32
  }
  func.func @transform_4(%arg0: i32) -> (i32, i32) {
    %c0_i32 = arith.constant 0 : i32
    %c0_i32_0 = arith.constant 0 : i32
    %c0_i32_1 = arith.constant 0 : i32
    return %c0_i32, %c0_i32_0 : i32, i32
  }
  func.func @transform_5(%arg0: i32) -> (i32, i32) {
    %c0_i32 = arith.constant 0 : i32
    %c0_i32_0 = arith.constant 0 : i32
    %c0_i32_1 = arith.constant 0 : i32
    return %c0_i32, %c0_i32_0 : i32, i32
  }
  func.func @transform_6(%arg0: i32) -> (i32, i32) {
    %c0_i32 = arith.constant 0 : i32
    %c0_i32_0 = arith.constant 0 : i32
    %c0_i32_1 = arith.constant 0 : i32
    return %c0_i32, %c0_i32_0 : i32, i32
  }
  func.func @transform_7(%arg0: i32) -> (i32, i32) {
    %c0_i32 = arith.constant 0 : i32
    %c0_i32_0 = arith.constant 0 : i32
    %c0_i32_1 = arith.constant 0 : i32
    return %c0_i32, %c0_i32_0 : i32, i32
  }
  func.func @transform_8(%arg0: i32) -> (i32, i32) {
    %c0_i32 = arith.constant 0 : i32
    %c0_i32_0 = arith.constant 0 : i32
    %c0_i32_1 = arith.constant 0 : i32
    return %c0_i32, %c0_i32_0 : i32, i32
  }
  func.func @transform_9(%arg0: i32) -> (i32, i32) {
    %c0_i32 = arith.constant 0 : i32
    %c0_i32_0 = arith.constant 0 : i32
    %c0_i32_1 = arith.constant 0 : i32
    return %c0_i32, %c0_i32_0 : i32, i32
  }
  func.func @transform_10(%arg0: i32) -> (i32, i32) {
    %c0_i32 = arith.constant 0 : i32
    %c0_i32_0 = arith.constant 0 : i32
    %c0_i32_1 = arith.constant 0 : i32
    return %c0_i32, %c0_i32_0 : i32, i32
  }
  func.func @transform_11(%arg0: i32) -> (i32, i32) {
    %c0_i32 = arith.constant 0 : i32
    %c0_i32_0 = arith.constant 0 : i32
    %c0_i32_1 = arith.constant 0 : i32
    return %c0_i32, %c0_i32_0 : i32, i32
  }
  func.func @transform_12(%arg0: i32) -> (i32, i32) {
    %c0_i32 = arith.constant 0 : i32
    %c0_i32_0 = arith.constant 0 : i32
    %c0_i32_1 = arith.constant 0 : i32
    return %c0_i32, %c0_i32_0 : i32, i32
  }
  func.func @transform_13(%arg0: i32) -> (i32, i32) {
    %c0_i32 = arith.constant 0 : i32
    %c0_i32_0 = arith.constant 0 : i32
    %c0_i32_1 = arith.constant 0 : i32
    return %c0_i32, %c0_i32_0 : i32, i32
  }
  func.func @transform_14(%arg0: i32) -> (i32, i32) {
    %c0_i32 = arith.constant 0 : i32
    %c0_i32_0 = arith.constant 0 : i32
    %c0_i32_1 = arith.constant 0 : i32
    return %c0_i32, %c0_i32_0 : i32, i32
  }
  func.func @transform_15(%arg0: i32) -> (i32, i32) {
    %c0_i32 = arith.constant 0 : i32
    %c0_i32_0 = arith.constant 0 : i32
    %c0_i32_1 = arith.constant 0 : i32
    return %c0_i32, %c0_i32_0 : i32, i32
  }
  func.func @transform_16(%arg0: i32) -> (i32, i32) {
    %c0_i32 = arith.constant 0 : i32
    %c0_i32_0 = arith.constant 0 : i32
    return %arg0, %c0_i32 : i32, i32
  }
}

</mosaic_0001>

<llo_original>
// kernel: tpu_custom_call.1
$region0: #{tpu_custom_call.1}
  #allocation0 [shape = 'u32[]', space=smem, size = 0x4, offset = 0x4, fixed_abs, tag = 'smem constant byte address 0x4 - core index']
  #allocation1 [shape = 'u32[144,128]{1,0:T(1,128)}', space=vmem, size = 0x12000, scoped, tag = 'internal scratch']
  %s0 = inlined_call_operand.vmem [shape: f32[64,6], index: 0, kind: input, shape index: {}]
  %s1 = inlined_call_operand.vmem [shape: f32[64,32], index: 1, kind: input, shape index: {}]
  %s2 = inlined_call_operand.vmem [shape: f32[6,4], index: 2, kind: input, shape index: {}]
  %s3 = inlined_call_operand.vmem [shape: bf16[24,192], index: 3, kind: input, shape index: {}]
  %s4 = inlined_call_operand.vmem [shape: bf16[24,192], index: 4, kind: input, shape index: {}]
  %s5 = inlined_call_operand.vmem [shape: bf16[6,192], index: 5, kind: input, shape index: {}]
  %s6 = inlined_call_operand.vmem [shape: f32[1,192], index: 6, kind: input, shape index: {}]
  %s7 = inlined_call_operand.vmem [shape: f32[1,192], index: 7, kind: input, shape index: {}]
  %s8 = inlined_call_operand.vmem [shape: f32[1,192], index: 8, kind: input, shape index: {}]
  %s9 = inlined_call_operand.vmem [shape: f32[192,6], index: 9, kind: input, shape index: {}]
  %s10 = inlined_call_operand.vmem [shape: f32[6,192], index: 10, kind: input, shape index: {}]
  %s11 = inlined_call_operand.vmem [shape: bf16[192,32], index: 11, kind: input, shape index: {}]
  %s12 = inlined_call_operand.vmem [shape: f32[1,32], index: 12, kind: input, shape index: {}]
  %s13 = inlined_call_operand.vmem [shape: f32[2,32], index: 13, kind: input, shape index: {}]
  %s14 = inlined_call_operand.vmem [shape: bf16[32,32], index: 14, kind: input, shape index: {}]
  %s15 = inlined_call_operand.vmem [shape: f32[1,32], index: 15, kind: input, shape index: {}]
  %s16 = inlined_call_operand.vmem [shape: f32[64,32], index: 16, kind: output, shape index: {}]
  %s17 = sld [smem:[#allocation0]]
  $region74: #{tpu_custom_call.1} parent=0
    _
  %s19 = ssub.s32 1, %s17
  %s20 = scalar_select 0, %s19, %s17
  // Predicated region
  $region2: #{tpu_custom_call.1} parent=0 // pred_check
    _
  $region3: #{tpu_custom_call.1} parent=0 // pred_check_branch
    %22 = sbr.rel (0) target = $region5
  $region4: #{tpu_custom_call.1} parent=0 // pred_region
    _
  $region5: #{tpu_custom_call.1} parent=0 // pred_fallthru
    _
  // Predicated region
  $region6: #{tpu_custom_call.1} parent=0 // pred_check
    _
  $region7: #{tpu_custom_call.1} parent=0 // pred_check_branch
    %24 = sbr.rel (0) target = $region9
  $region8: #{tpu_custom_call.1} parent=0 // pred_region
    _
  $region9: #{tpu_custom_call.1} parent=0 // pred_fallthru
    _
  // Predicated region
  $region10: #{tpu_custom_call.1} parent=0 // pred_check
    _
  $region11: #{tpu_custom_call.1} parent=0 // pred_check_branch
    %26 = sbr.rel (0) target = $region13
  $region12: #{tpu_custom_call.1} parent=0 // pred_region
    _
  $region13: #{tpu_custom_call.1} parent=0 // pred_fallthru
    _
  // Predicated region
  $region14: #{tpu_custom_call.1} parent=0 // pred_check
    _
  $region15: #{tpu_custom_call.1} parent=0 // pred_check_branch
    %28 = sbr.rel (0) target = $region17
  $region16: #{tpu_custom_call.1} parent=0 // pred_region
    _
  $region17: #{tpu_custom_call.1} parent=0 // pred_fallthru
    _
  // Predicated region
  $region18: #{tpu_custom_call.1} parent=0 // pred_check
    _
  $region19: #{tpu_custom_call.1} parent=0 // pred_check_branch
    %30 = sbr.rel (0) target = $region21
  $region20: #{tpu_custom_call.1} parent=0 // pred_region
    _
  $region21: #{tpu_custom_call.1} parent=0 // pred_fallthru
    _
  // Predicated region
  $region22: #{tpu_custom_call.1} parent=0 // pred_check
    _
  $region23: #{tpu_custom_call.1} parent=0 // pred_check_branch
    %32 = sbr.rel (0) target = $region25
  $region24: #{tpu_custom_call.1} parent=0 // pred_region
    _
  $region25: #{tpu_custom_call.1} parent=0 // pred_fallthru
    _
  // Predicated region
  $region26: #{tpu_custom_call.1} parent=0 // pred_check
    _
  $region27: #{tpu_custom_call.1} parent=0 // pred_check_branch
    %34 = sbr.rel (0) target = $region29
  $region28: #{tpu_custom_call.1} parent=0 // pred_region
    _
  $region29: #{tpu_custom_call.1} parent=0 // pred_fallthru
    _
  // Predicated region
  $region30: #{tpu_custom_call.1} parent=0 // pred_check
    _
  $region31: #{tpu_custom_call.1} parent=0 // pred_check_branch
    %36 = sbr.rel (0) target = $region33
  $region32: #{tpu_custom_call.1} parent=0 // pred_region
    _
  $region33: #{tpu_custom_call.1} parent=0 // pred_fallthru
    _
  // Predicated region
  $region34: #{tpu_custom_call.1} parent=0 // pred_check
    _
  $region35: #{tpu_custom_call.1} parent=0 // pred_check_branch
    %38 = sbr.rel (0) target = $region37
  $region36: #{tpu_custom_call.1} parent=0 // pred_region
    _
  $region37: #{tpu_custom_call.1} parent=0 // pred_fallthru
    _
  // Predicated region
  $region38: #{tpu_custom_call.1} parent=0 // pred_check
    _
  $region39: #{tpu_custom_call.1} parent=0 // pred_check_branch
    %40 = sbr.rel (0) target = $region41
  $region40: #{tpu_custom_call.1} parent=0 // pred_region
    _
  $region41: #{tpu_custom_call.1} parent=0 // pred_fallthru
    _
  // Predicated region
  $region42: #{tpu_custom_call.1} parent=0 // pred_check
    _
  $region43: #{tpu_custom_call.1} parent=0 // pred_check_branch
    %42 = sbr.rel (0) target = $region45
  $region44: #{tpu_custom_call.1} parent=0 // pred_region
    _
  $region45: #{tpu_custom_call.1} parent=0 // pred_fallthru
    _
  // Predicated region
  $region46: #{tpu_custom_call.1} parent=0 // pred_check
    _
  $region47: #{tpu_custom_call.1} parent=0 // pred_check_branch
    %44 = sbr.rel (0) target = $region49
  $region48: #{tpu_custom_call.1} parent=0 // pred_region
    _
  $region49: #{tpu_custom_call.1} parent=0 // pred_fallthru
    _
  // Predicated region
  $region50: #{tpu_custom_call.1} parent=0 // pred_check
    _
  $region51: #{tpu_custom_call.1} parent=0 // pred_check_branch
    %46 = sbr.rel (0) target = $region53
  $region52: #{tpu_custom_call.1} parent=0 // pred_region
    _
  $region53: #{tpu_custom_call.1} parent=0 // pred_fallthru
    _
  // Predicated region
  $region54: #{tpu_custom_call.1} parent=0 // pred_check
    _
  $region55: #{tpu_custom_call.1} parent=0 // pred_check_branch
    %48 = sbr.rel (0) target = $region57
  $region56: #{tpu_custom_call.1} parent=0 // pred_region
    _
  $region57: #{tpu_custom_call.1} parent=0 // pred_fallthru
    _
  // Predicated region
  $region58: #{tpu_custom_call.1} parent=0 // pred_check
    _
  $region59: #{tpu_custom_call.1} parent=0 // pred_check_branch
    %50 = sbr.rel (0) target = $region61
  $region60: #{tpu_custom_call.1} parent=0 // pred_region
    _
  $region61: #{tpu_custom_call.1} parent=0 // pred_fallthru
    _
  // Predicated region
  $region62: #{tpu_custom_call.1} parent=0 // pred_check
    _
  $region63: #{tpu_custom_call.1} parent=0 // pred_check_branch
    %52 = sbr.rel (0) target = $region65
  $region64: #{tpu_custom_call.1} parent=0 // pred_region
    _
  $region65: #{tpu_custom_call.1} parent=0 // pred_fallthru
    _
  %v54 = vld [vmem:[%s0] sm:$0xff]
  %v55 = vld [vmem:[%s0 + $0x8] sm:$0xff]
  %v56 = vld [vmem:[%s0 + $0x10] sm:$0xff]
  %v57 = vld [vmem:[%s0 + $0x18] sm:$0xff]
  %v58 = vld [vmem:[%s0 + $0x20] sm:$0xff]
  %v59 = vld [vmem:[%s0 + $0x28] sm:$0xff]
  %v60 = vld [vmem:[%s0 + $0x30] sm:$0xff]
  %v61 = vld [vmem:[%s0 + $0x38] sm:$0xff]
  %v62 = vld [vmem:[%s2] sm:$0x3f]
  %v63 = vmul.f32 %v62, 6.2831855
  %65 = vset.pattern.permute.xlu0 0
  %66 = vperm.xlu0 %65, %v54
  %v67 = vpop.permute.xlu0 %66
  %70 = vset.pattern.permute.xlu0 0
  %71 = vperm.xlu0 %70, %v55
  %v72 = vpop.permute.xlu0 %71
  %75 = vset.pattern.permute.xlu0 0
  %76 = vperm.xlu0 %75, %v56
  %v77 = vpop.permute.xlu0 %76
  %80 = vset.pattern.permute.xlu0 0
  %81 = vperm.xlu0 %80, %v57
  %v82 = vpop.permute.xlu0 %81
  %85 = vset.pattern.permute.xlu0 0
  %86 = vperm.xlu0 %85, %v58
  %v87 = vpop.permute.xlu0 %86
  %90 = vset.pattern.permute.xlu0 0
  %91 = vperm.xlu0 %90, %v59
  %v92 = vpop.permute.xlu0 %91
  %95 = vset.pattern.permute.xlu0 0
  %96 = vperm.xlu0 %95, %v60
  %v97 = vpop.permute.xlu0 %96
  %100 = vset.pattern.permute.xlu0 0
  %101 = vperm.xlu0 %100, %v61
  %v102 = vpop.permute.xlu0 %101
  %v104 = vlaneseq
  %v105 = vshrl.u32 %v104, 7
  %v106 = vsub.s32 0, %v105
  %v107 = vrot.slane %v63, %v106
  %v108 = vmul.f32 %v67, %v107
  %v109 = vmul.f32 %v72, %v107
  %v110 = vmul.f32 %v77, %v107
  %v111 = vmul.f32 %v82, %v107
  %v112 = vmul.f32 %v87, %v107
  %v113 = vmul.f32 %v92, %v107
  %v114 = vmul.f32 %v97, %v107
  %v115 = vmul.f32 %v102, %v107
  %116 = vset.pattern.permute.xlu0 1
  %117 = vperm.xlu0 %116, %v54
  %v118 = vpop.permute.xlu0 %117
  %120 = vset.pattern.permute.xlu0 1
  %121 = vperm.xlu0 %120, %v55
  %v122 = vpop.permute.xlu0 %121
  %124 = vset.pattern.permute.xlu0 1
  %125 = vperm.xlu0 %124, %v56
  %v126 = vpop.permute.xlu0 %125
  %128 = vset.pattern.permute.xlu0 1
  %129 = vperm.xlu0 %128, %v57
  %v130 = vpop.permute.xlu0 %129
  %132 = vset.pattern.permute.xlu0 1
  %133 = vperm.xlu0 %132, %v58
  %v134 = vpop.permute.xlu0 %133
  %136 = vset.pattern.permute.xlu0 1
  %137 = vperm.xlu0 %136, %v59
  %v138 = vpop.permute.xlu0 %137
  %140 = vset.pattern.permute.xlu0 1
  %141 = vperm.xlu0 %140, %v60
  %v142 = vpop.permute.xlu0 %141
  %144 = vset.pattern.permute.xlu0 1
  %145 = vperm.xlu0 %144, %v61
  %v146 = vpop.permute.xlu0 %145
  %v148 = vlaneseq
  %v149 = vshrl.u32 %v148, 7
  %v150 = vsub.s32 1, %v149
  %v151 = vrot.slane %v63, %v150
  %v152 = vmul.f32 %v118, %v151
  %v153 = vmul.f32 %v122, %v151
  %v154 = vmul.f32 %v126, %v151
  %v155 = vmul.f32 %v130, %v151
  %v156 = vmul.f32 %v134, %v151
  %v157 = vmul.f32 %v138, %v151
  %v158 = vmul.f32 %v142, %v151
  %v159 = vmul.f32 %v146, %v151
  %160 = vset.pattern.permute.xlu0 2
  %161 = vperm.xlu0 %160, %v54
  %v162 = vpop.permute.xlu0 %161
  %164 = vset.pattern.permute.xlu0 2
  %165 = vperm.xlu0 %164, %v55
  %v166 = vpop.permute.xlu0 %165
  %168 = vset.pattern.permute.xlu0 2
  %169 = vperm.xlu0 %168, %v56
  %v170 = vpop.permute.xlu0 %169
  %172 = vset.pattern.permute.xlu0 2
  %173 = vperm.xlu0 %172, %v57
  %v174 = vpop.permute.xlu0 %173
  %176 = vset.pattern.permute.xlu0 2
  %177 = vperm.xlu0 %176, %v58
  %v178 = vpop.permute.xlu0 %177
  %180 = vset.pattern.permute.xlu0 2
  %181 = vperm.xlu0 %180, %v59
  %v182 = vpop.permute.xlu0 %181
  %184 = vset.pattern.permute.xlu0 2
  %185 = vperm.xlu0 %184, %v60
  %v186 = vpop.permute.xlu0 %185
  %188 = vset.pattern.permute.xlu0 2
  %189 = vperm.xlu0 %188, %v61
  %v190 = vpop.permute.xlu0 %189
  %v192 = vlaneseq
  %v193 = vshrl.u32 %v192, 7
  %v194 = vsub.s32 2, %v193
  %v195 = vrot.slane %v63, %v194
  %v196 = vmul.f32 %v162, %v195
  %v197 = vmul.f32 %v166, %v195
  %v198 = vmul.f32 %v170, %v195
  %v199 = vmul.f32 %v174, %v195
  %v200 = vmul.f32 %v178, %v195
  %v201 = vmul.f32 %v182, %v195
  %v202 = vmul.f32 %v186, %v195
  %v203 = vmul.f32 %v190, %v195
  %204 = vset.pattern.permute.xlu0 3
  %205 = vperm.xlu0 %204, %v54
  %v206 = vpop.permute.xlu0 %205
  %208 = vset.pattern.permute.xlu0 3
  %209 = vperm.xlu0 %208, %v55
  %v210 = vpop.permute.xlu0 %209
  %212 = vset.pattern.permute.xlu0 3
  %213 = vperm.xlu0 %212, %v56
  %v214 = vpop.permute.xlu0 %213
  %216 = vset.pattern.permute.xlu0 3
  %217 = vperm.xlu0 %216, %v57
  %v218 = vpop.permute.xlu0 %217
  %220 = vset.pattern.permute.xlu0 3
  %221 = vperm.xlu0 %220, %v58
  %v222 = vpop.permute.xlu0 %221
  %224 = vset.pattern.permute.xlu0 3
  %225 = vperm.xlu0 %224, %v59
  %v226 = vpop.permute.xlu0 %225
  %228 = vset.pattern.permute.xlu0 3
  %229 = vperm.xlu0 %228, %v60
  %v230 = vpop.permute.xlu0 %229
  %232 = vset.pattern.permute.xlu0 3
  %233 = vperm.xlu0 %232, %v61
  %v234 = vpop.permute.xlu0 %233
  %v236 = vlaneseq
  %v237 = vshrl.u32 %v236, 7
  %v238 = vsub.s32 3, %v237
  %v239 = vrot.slane %v63, %v238
  %v240 = vmul.f32 %v206, %v239
  %v241 = vmul.f32 %v210, %v239
  %v242 = vmul.f32 %v214, %v239
  %v243 = vmul.f32 %v218, %v239
  %v244 = vmul.f32 %v222, %v239
  %v245 = vmul.f32 %v226, %v239
  %v246 = vmul.f32 %v230, %v239
  %v247 = vmul.f32 %v234, %v239
  %248 = vset.pattern.permute.xlu0 4
  %249 = vperm.xlu0 %248, %v54
  %v250 = vpop.permute.xlu0 %249
  %252 = vset.pattern.permute.xlu0 4
  %253 = vperm.xlu0 %252, %v55
  %v254 = vpop.permute.xlu0 %253
  %256 = vset.pattern.permute.xlu0 4
  %257 = vperm.xlu0 %256, %v56
  %v258 = vpop.permute.xlu0 %257
  %260 = vset.pattern.permute.xlu0 4
  %261 = vperm.xlu0 %260, %v57
  %v262 = vpop.permute.xlu0 %261
  %264 = vset.pattern.permute.xlu0 4
  %265 = vperm.xlu0 %264, %v58
  %v266 = vpop.permute.xlu0 %265
  %268 = vset.pattern.permute.xlu0 4
  %269 = vperm.xlu0 %268, %v59
  %v270 = vpop.permute.xlu0 %269
  %272 = vset.pattern.permute.xlu0 4
  %273 = vperm.xlu0 %272, %v60
  %v274 = vpop.permute.xlu0 %273
  %276 = vset.pattern.permute.xlu0 4
  %277 = vperm.xlu0 %276, %v61
  %v278 = vpop.permute.xlu0 %277
  %v280 = vlaneseq
  %v281 = vshrl.u32 %v280, 7
  %v282 = vsub.s32 4, %v281
  %v283 = vrot.slane %v63, %v282
  %v284 = vmul.f32 %v250, %v283
  %v285 = vmul.f32 %v254, %v283
  %v286 = vmul.f32 %v258, %v283
  %v287 = vmul.f32 %v262, %v283
  %v288 = vmul.f32 %v266, %v283
  %v289 = vmul.f32 %v270, %v283
  %v290 = vmul.f32 %v274, %v283
  %v291 = vmul.f32 %v278, %v283
  %292 = vset.pattern.permute.xlu0 5
  %293 = vperm.xlu0 %292, %v54
  %v294 = vpop.permute.xlu0 %293
  %296 = vset.pattern.permute.xlu0 5
  %297 = vperm.xlu0 %296, %v55
  %v298 = vpop.permute.xlu0 %297
  %300 = vset.pattern.permute.xlu0 5
  %301 = vperm.xlu0 %300, %v56
  %v302 = vpop.permute.xlu0 %301
  %304 = vset.pattern.permute.xlu0 5
  %305 = vperm.xlu0 %304, %v57
  %v306 = vpop.permute.xlu0 %305
  %308 = vset.pattern.permute.xlu0 5
  %309 = vperm.xlu0 %308, %v58
  %v310 = vpop.permute.xlu0 %309
  %312 = vset.pattern.permute.xlu0 5
  %313 = vperm.xlu0 %312, %v59
  %v314 = vpop.permute.xlu0 %313
  %316 = vset.pattern.permute.xlu0 5
  %317 = vperm.xlu0 %316, %v60
  %v318 = vpop.permute.xlu0 %317
  %320 = vset.pattern.permute.xlu0 5
  %321 = vperm.xlu0 %320, %v61
  %v322 = vpop.permute.xlu0 %321
  %v324 = vlaneseq
  %v325 = vshrl.u32 %v324, 7
  %v326 = vsub.s32 5, %v325
  %v327 = vrot.slane %v63, %v326
  %v328 = vmul.f32 %v294, %v327
  %v329 = vmul.f32 %v298, %v327
  %v330 = vmul.f32 %v302, %v327
  %v331 = vmul.f32 %v306, %v327
  %v332 = vmul.f32 %v310, %v327
  %v333 = vmul.f32 %v314, %v327
  %v334 = vmul.f32 %v318, %v327
  %v335 = vmul.f32 %v322, %v327
  %344 = vrot.lane.b32.xlu0 %v152, 4
  %v345 = vpop.permute.xlu0 %344
  %346 = vrot.lane.b32.xlu0 %v153, 4
  %v347 = vpop.permute.xlu0 %346
  %348 = vrot.lane.b32.xlu0 %v154, 4
  %v349 = vpop.permute.xlu0 %348
  %350 = vrot.lane.b32.xlu0 %v155, 4
  %v351 = vpop.permute.xlu0 %350
  %352 = vrot.lane.b32.xlu0 %v156, 4
  %v353 = vpop.permute.xlu0 %352
  %354 = vrot.lane.b32.xlu0 %v157, 4
  %v355 = vpop.permute.xlu0 %354
  %356 = vrot.lane.b32.xlu0 %v158, 4
  %v357 = vpop.permute.xlu0 %356
  %358 = vrot.lane.b32.xlu0 %v159, 4
  %v359 = vpop.permute.xlu0 %358
  %376 = vrot.lane.b32.xlu0 %v196, 8
  %v377 = vpop.permute.xlu0 %376
  %378 = vrot.lane.b32.xlu0 %v197, 8
  %v379 = vpop.permute.xlu0 %378
  %380 = vrot.lane.b32.xlu0 %v198, 8
  %v381 = vpop.permute.xlu0 %380
  %382 = vrot.lane.b32.xlu0 %v199, 8
  %v383 = vpop.permute.xlu0 %382
  %384 = vrot.lane.b32.xlu0 %v200, 8
  %v385 = vpop.permute.xlu0 %384
  %386 = vrot.lane.b32.xlu0 %v201, 8
  %v387 = vpop.permute.xlu0 %386
  %388 = vrot.lane.b32.xlu0 %v202, 8
  %v389 = vpop.permute.xlu0 %388
  %390 = vrot.lane.b32.xlu0 %v203, 8
  %v391 = vpop.permute.xlu0 %390
  %408 = vrot.lane.b32.xlu0 %v240, 12
  %v409 = vpop.permute.xlu0 %408
  %410 = vrot.lane.b32.xlu0 %v241, 12
  %v411 = vpop.permute.xlu0 %410
  %412 = vrot.lane.b32.xlu0 %v242, 12
  %v413 = vpop.permute.xlu0 %412
  %414 = vrot.lane.b32.xlu0 %v243, 12
  %v415 = vpop.permute.xlu0 %414
  %416 = vrot.lane.b32.xlu0 %v244, 12
  %v417 = vpop.permute.xlu0 %416
  %418 = vrot.lane.b32.xlu0 %v245, 12
  %v419 = vpop.permute.xlu0 %418
  %420 = vrot.lane.b32.xlu0 %v246, 12
  %v421 = vpop.permute.xlu0 %420
  %422 = vrot.lane.b32.xlu0 %v247, 12
  %v423 = vpop.permute.xlu0 %422
  %440 = vrot.lane.b32.xlu0 %v284, 16
  %v441 = vpop.permute.xlu0 %440
  %442 = vrot.lane.b32.xlu0 %v285, 16
  %v443 = vpop.permute.xlu0 %442
  %444 = vrot.lane.b32.xlu0 %v286, 16
  %v445 = vpop.permute.xlu0 %444
  %446 = vrot.lane.b32.xlu0 %v287, 16
  %v447 = vpop.permute.xlu0 %446
  %448 = vrot.lane.b32.xlu0 %v288, 16
  %v449 = vpop.permute.xlu0 %448
  %450 = vrot.lane.b32.xlu0 %v289, 16
  %v451 = vpop.permute.xlu0 %450
  %452 = vrot.lane.b32.xlu0 %v290, 16
  %v453 = vpop.permute.xlu0 %452
  %454 = vrot.lane.b32.xlu0 %v291, 16
  %v455 = vpop.permute.xlu0 %454
  %472 = vrot.lane.b32.xlu0 %v328, 20
  %v473 = vpop.permute.xlu0 %472
  %474 = vrot.lane.b32.xlu0 %v329, 20
  %v475 = vpop.permute.xlu0 %474
  %476 = vrot.lane.b32.xlu0 %v330, 20
  %v477 = vpop.permute.xlu0 %476
  %478 = vrot.lane.b32.xlu0 %v331, 20
  %v479 = vpop.permute.xlu0 %478
  %480 = vrot.lane.b32.xlu0 %v332, 20
  %v481 = vpop.permute.xlu0 %480
  %482 = vrot.lane.b32.xlu0 %v333, 20
  %v483 = vpop.permute.xlu0 %482
  %484 = vrot.lane.b32.xlu0 %v334, 20
  %v485 = vpop.permute.xlu0 %484
  %486 = vrot.lane.b32.xlu0 %v335, 20
  %v487 = vpop.permute.xlu0 %486
  %vm496 = vcmask 31744
  %v497 = vsel %vm496, %v108, %v345
  %v498 = vsel %vm496, %v109, %v347
  %v499 = vsel %vm496, %v110, %v349
  %v500 = vsel %vm496, %v111, %v351
  %v501 = vsel %vm496, %v112, %v353
  %v502 = vsel %vm496, %v113, %v355
  %v503 = vsel %vm496, %v114, %v357
  %v504 = vsel %vm496, %v115, %v359
  %vm505 = vcmask 64512
  %v506 = vsel %vm505, %v497, %v377
  %v507 = vsel %vm505, %v498, %v379
  %v508 = vsel %vm505, %v499, %v381
  %v509 = vsel %vm505, %v500, %v383
  %v510 = vsel %vm505, %v501, %v385
  %v511 = vsel %vm505, %v502, %v387
  %v512 = vsel %vm505, %v503, %v389
  %v513 = vsel %vm505, %v504, %v391
  %vm514 = vcmask 97280
  %v515 = vsel %vm514, %v506, %v409
  %v516 = vsel %vm514, %v507, %v411
  %v517 = vsel %vm514, %v508, %v413
  %v518 = vsel %vm514, %v509, %v415
  %v519 = vsel %vm514, %v510, %v417
  %v520 = vsel %vm514, %v511, %v419
  %v521 = vsel %vm514, %v512, %v421
  %v522 = vsel %vm514, %v513, %v423
  %vm523 = vcmask 130048
  %v524 = vsel %vm523, %v515, %v441
  %v525 = vsel %vm523, %v516, %v443
  %v526 = vsel %vm523, %v517, %v445
  %v527 = vsel %vm523, %v518, %v447
  %v528 = vsel %vm523, %v519, %v449
  %v529 = vsel %vm523, %v520, %v451
  %v530 = vsel %vm523, %v521, %v453
  %v531 = vsel %vm523, %v522, %v455
  %vm532 = vcmask 162816
  %v533 = vsel %vm532, %v524, %v473
  %v534 = vsel %vm532, %v525, %v475
  %v535 = vsel %vm532, %v526, %v477
  %v536 = vsel %vm532, %v527, %v479
  %v537 = vsel %vm532, %v528, %v481
  %v538 = vsel %vm532, %v529, %v483
  %v539 = vsel %vm532, %v530, %v485
  %v540 = vsel %vm532, %v531, %v487
  %v541 = vand.u32 2147483647, %v533
  %vm542 = vcmp.le.f32.partialorder %v541, 0.7853982
  %vm543 = vcmp.lt.s32.totalorder %v533, 0
  %v544 = vand.u32 %v533, 2139095040
  %v545 = vshrl.u32 %v544, 23
  %v546 = vsub.s32 %v545, 127
  %v547 = vand.u32 2147483647, %v533
  %v548 = vand.u32 %v547, 8388607
  %v549 = vor.u32 %v548, 8388608
  %v550 = vsub.s32 0, %v549
  %v551 = vadd.s32 %v546, 1
  %vm552 = vcmp.gt.s32.totalorder %v551, 0
  %v553 = vsel %vm552, %v551, 0
  %v554 = vshrl.u32 %v553, 5
  %v555 = vand.u32 %v553, 31
  %v556 = vsub.s32 32, %v555
  %v557 = vshrl.u32 683565275, %v556
  %v558 = vshll.u32 683565275, %v555
  %v559 = vshrl.u32 2475754826, %v556
  %v560 = vor.u32 %v558, %v559
  %v561 = vshll.u32 2475754826, %v555
  %v562 = vshrl.u32 2131351028, %v556
  %v563 = vor.u32 %v561, %v562
  %v564 = vshll.u32 2131351028, %v555
  %v565 = vshrl.u32 2102212464, %v556
  %v566 = vor.u32 %v564, %v565
  %v567 = vshll.u32 2102212464, %v555
  %v568 = vshrl.u32 920167782, %v556
  %v569 = vor.u32 %v567, %v568
  %v570 = vshll.u32 920167782, %v555
  %v571 = vshrl.u32 1326507024, %v556
  %v572 = vor.u32 %v570, %v571
  %vm573 = vcmp.lt.s32.totalorder %v554, 1
  %vm574 = vcmp.lt.s32.totalorder %v554, 2
  %vm575 = vcmp.lt.s32.totalorder %v554, 3
  %vm576 = vcmp.lt.s32.totalorder %v554, 4
  %v577 = vsel %vm573, %v557, %v560
  %v578 = vsel %vm576, %v566, 2102212464
  %v579 = vsel %vm575, %v563, %v578
  %v580 = vsel %vm574, %v577, %v579
  %v581 = vsel %vm573, %v560, %v563
  %v582 = vsel %vm576, %v569, 920167782
  %v583 = vsel %vm575, %v566, %v582
  %v584 = vsel %vm574, %v581, %v583
  %v585 = vsel %vm573, %v563, %v566
  %v586 = vsel %vm576, %v572, 1326507024
  %v587 = vsel %vm575, %v569, %v586
  %v588 = vsel %vm574, %v585, %v587
  %v589 = vshll.u32 %v549, 8
  %v590 = vmul.u32.u64.compose %v589, %v588
  %v591 = vextract.low.u32 %v590
  %v592 = vextract.high.u32 %v590
  %v593 = vmul.u32.u64.compose %v589, %v584
  %v594 = vextract.low.u32 %v593
  %v595 = vextract.high.u32 %v593
  %v596 = vmul.u32 %v589, %v580
  %v597 = vadd.s32 %v592, %v594
  %vm598 = vc.u32 %v592, %v594
  %v599 = vadd.s32 %v595, 1
  %v600 = vsel %vm598, %v599, %v595
  %v601 = vadd.s32 %v596, %v600
  %v602 = vadd.s32 %v601, 536870912
  %v603 = vshrl.u32 %v602, 30
  %v604 = vshll.u32 %v603, 30
  %v605 = vsub.s32 %v601, %v604
  %vm606 = vcmp.lt.s32.totalorder %v605, 0
  %v607 = vsub.s32 0, %v605
  %v608 = vsel %vm606, %v607, %v605
  %v609 = vclz %v608
  %v610 = vsub.s32 %v609, 2
  %vm611 = vcmp.gt.s32.totalorder 0, %v610
  %v612 = vsel %vm611, 0, %v610
  %v613 = vsub.s32 32, %v612
  %v614 = vshll.u32 %v605, %v612
  %v615 = vshrl.u32 %v597, %v613
  %v616 = vor.u32 %v614, %v615
  %v617 = vsub.s32 4294967266, %v612
  %v618 = vadd.s32 %v617, 127
  %v619 = vshll.u32 %v618, 23
  %v620 = vor.u32 4788187, %v619
  %v621 = vand.u32 2147483647, %v620
  %v623 = vcvt.s32.f32 %v616
  %v624 = vmul.f32 %v623, %v621
  %v625 = vxor.u32 %v624, 2147483648
  %v626 = vsel %vm543, %v625, %v624
  %v627 = vsub.s32 4, %v603
  %v628 = vsel %vm543, %v627, %v603
  %v629 = vsel %vm542, %v533, %v626
  %v630 = vsel %vm542, 0, %v628
  %v631 = vcosq.f32.pop %v629
  %v632 = vsinq.f32.pop %v629
  %vm633 = vweird.f32 %v533
  %v634 = vand.u32 %v630, 3
  %vm635 = vcmp.lt.s32.totalorder %v634, 2
  %vm636 = vcmp.eq.s32.totalorder %v634, 0
  %v637 = vxor.u32 %v632, 2147483648
  %v638 = vsel %vm636, %v631, %v637
  %vm639 = vcmp.eq.s32.totalorder %v634, 2
  %v640 = vxor.u32 %v631, 2147483648
  %v641 = vsel %vm639, %v640, %v632
  %v642 = vsel %vm635, %v638, %v641
  %v643 = vsel %vm633, nan, %v642
  %v644 = vand.u32 2147483647, %v534
  %vm645 = vcmp.le.f32.partialorder %v644, 0.7853982
  %vm646 = vcmp.lt.s32.totalorder %v534, 0
  %v647 = vand.u32 %v534, 2139095040
  %v648 = vshrl.u32 %v647, 23
  %v649 = vsub.s32 %v648, 127
  %v650 = vand.u32 2147483647, %v534
  %v651 = vand.u32 %v650, 8388607
  %v652 = vor.u32 %v651, 8388608
  %v653 = vsub.s32 0, %v652
  %v654 = vadd.s32 %v649, 1
  %vm655 = vcmp.gt.s32.totalorder %v654, 0
  %v656 = vsel %vm655, %v654, 0
  %v657 = vshrl.u32 %v656, 5
  %v658 = vand.u32 %v656, 31
  %v659 = vsub.s32 32, %v658
  %v660 = vshrl.u32 683565275, %v659
  %v661 = vshll.u32 683565275, %v658
  %v662 = vshrl.u32 2475754826, %v659
  %v663 = vor.u32 %v661, %v662
  %v664 = vshll.u32 2475754826, %v658
  %v665 = vshrl.u32 2131351028, %v659
  %v666 = vor.u32 %v664, %v665
  %v667 = vshll.u32 2131351028, %v658
  %v668 = vshrl.u32 2102212464, %v659
  %v669 = vor.u32 %v667, %v668
  %v670 = vshll.u32 2102212464, %v658
  %v671 = vshrl.u32 920167782, %v659
  %v672 = vor.u32 %v670, %v671
  %v673 = vshll.u32 920167782, %v658
  %v674 = vshrl.u32 1326507024, %v659
  %v675 = vor.u32 %v673, %v674
  %vm676 = vcmp.lt.s32.totalorder %v657, 1
  %vm677 = vcmp.lt.s32.totalorder %v657, 2
  %vm678 = vcmp.lt.s32.totalorder %v657, 3
  %vm679 = vcmp.lt.s32.totalorder %v657, 4
  %v680 = vsel %vm676, %v660, %v663
  %v681 = vsel %vm679, %v669, 2102212464
  %v682 = vsel %vm678, %v666, %v681
  %v683 = vsel %vm677, %v680, %v682
  %v684 = vsel %vm676, %v663, %v666
  %v685 = vsel %vm679, %v672, 920167782
  %v686 = vsel %vm678, %v669, %v685
  %v687 = vsel %vm677, %v684, %v686
  %v688 = vsel %vm676, %v666, %v669
  %v689 = vsel %vm679, %v675, 1326507024
  %v690 = vsel %vm678, %v672, %v689
  %v691 = vsel %vm677, %v688, %v690
  %v692 = vshll.u32 %v652, 8
  %v693 = vmul.u32.u64.compose %v692, %v691
  %v694 = vextract.low.u32 %v693
  %v695 = vextract.high.u32 %v693
  %v696 = vmul.u32.u64.compose %v692, %v687
  %v697 = vextract.low.u32 %v696
  %v698 = vextract.high.u32 %v696
  %v699 = vmul.u32 %v692, %v683
  %v700 = vadd.s32 %v695, %v697
  %vm701 = vc.u32 %v695, %v697
  %v702 = vadd.s32 %v698, 1
  %v703 = vsel %vm701, %v702, %v698
  %v704 = vadd.s32 %v699, %v703
  %v705 = vadd.s32 %v704, 536870912
  %v706 = vshrl.u32 %v705, 30
  %v707 = vshll.u32 %v706, 30
  %v708 = vsub.s32 %v704, %v707
  %vm709 = vcmp.lt.s32.totalorder %v708, 0
  %v710 = vsub.s32 0, %v708
  %v711 = vsel %vm709, %v710, %v708
  %v712 = vclz %v711
  %v713 = vsub.s32 %v712, 2
  %vm714 = vcmp.gt.s32.totalorder 0, %v713
  %v715 = vsel %vm714, 0, %v713
  %v716 = vsub.s32 32, %v715
  %v717 = vshll.u32 %v708, %v715
  %v718 = vshrl.u32 %v700, %v716
  %v719 = vor.u32 %v717, %v718
  %v720 = vsub.s32 4294967266, %v715
  %v721 = vadd.s32 %v720, 127
  %v722 = vshll.u32 %v721, 23
  %v723 = vor.u32 4788187, %v722
  %v724 = vand.u32 2147483647, %v723
  %v726 = vcvt.s32.f32 %v719
  %v727 = vmul.f32 %v726, %v724
  %v728 = vxor.u32 %v727, 2147483648
  %v729 = vsel %vm646, %v728, %v727
  %v730 = vsub.s32 4, %v706
  %v731 = vsel %vm646, %v730, %v706
  %v732 = vsel %vm645, %v534, %v729
  %v733 = vsel %vm645, 0, %v731
  %v734 = vcosq.f32.pop %v732
  %v735 = vsinq.f32.pop %v732
  %vm736 = vweird.f32 %v534
  %v737 = vand.u32 %v733, 3
  %vm738 = vcmp.lt.s32.totalorder %v737, 2
  %vm739 = vcmp.eq.s32.totalorder %v737, 0
  %v740 = vxor.u32 %v735, 2147483648
  %v741 = vsel %vm739, %v734, %v740
  %vm742 = vcmp.eq.s32.totalorder %v737, 2
  %v743 = vxor.u32 %v734, 2147483648
  %v744 = vsel %vm742, %v743, %v735
  %v745 = vsel %vm738, %v741, %v744
  %v746 = vsel %vm736, nan, %v745
  %v747 = vand.u32 2147483647, %v535
  %vm748 = vcmp.le.f32.partialorder %v747, 0.7853982
  %vm749 = vcmp.lt.s32.totalorder %v535, 0
  %v750 = vand.u32 %v535, 2139095040
  %v751 = vshrl.u32 %v750, 23
  %v752 = vsub.s32 %v751, 127
  %v753 = vand.u32 2147483647, %v535
  %v754 = vand.u32 %v753, 8388607
  %v755 = vor.u32 %v754, 8388608
  %v756 = vsub.s32 0, %v755
  %v757 = vadd.s32 %v752, 1
  %vm758 = vcmp.gt.s32.totalorder %v757, 0
  %v759 = vsel %vm758, %v757, 0
  %v760 = vshrl.u32 %v759, 5
  %v761 = vand.u32 %v759, 31
  %v762 = vsub.s32 32, %v761
  %v763 = vshrl.u32 683565275, %v762
  %v764 = vshll.u32 683565275, %v761
  %v765 = vshrl.u32 2475754826, %v762
  %v766 = vor.u32 %v764, %v765
  %v767 = vshll.u32 2475754826, %v761
  %v768 = vshrl.u32 2131351028, %v762
  %v769 = vor.u32 %v767, %v768
  %v770 = vshll.u32 2131351028, %v761
  %v771 = vshrl.u32 2102212464, %v762
  %v772 = vor.u32 %v770, %v771
  %v773 = vshll.u32 2102212464, %v761
  %v774 = vshrl.u32 920167782, %v762
  %v775 = vor.u32 %v773, %v774
  %v776 = vshll.u32 920167782, %v761
  %v777 = vshrl.u32 1326507024, %v762
  %v778 = vor.u32 %v776, %v777
  %vm779 = vcmp.lt.s32.totalorder %v760, 1
  %vm780 = vcmp.lt.s32.totalorder %v760, 2
  %vm781 = vcmp.lt.s32.totalorder %v760, 3
  %vm782 = vcmp.lt.s32.totalorder %v760, 4
  %v783 = vsel %vm779, %v763, %v766
  %v784 = vsel %vm782, %v772, 2102212464
  %v785 = vsel %vm781, %v769, %v784
  %v786 = vsel %vm780, %v783, %v785
  %v787 = vsel %vm779, %v766, %v769
  %v788 = vsel %vm782, %v775, 920167782
  %v789 = vsel %vm781, %v772, %v788
  %v790 = vsel %vm780, %v787, %v789
  %v791 = vsel %vm779, %v769, %v772
  %v792 = vsel %vm782, %v778, 1326507024
  %v793 = vsel %vm781, %v775, %v792
  %v794 = vsel %vm780, %v791, %v793
  %v795 = vshll.u32 %v755, 8
  %v796 = vmul.u32.u64.compose %v795, %v794
  %v797 = vextract.low.u32 %v796
  %v798 = vextract.high.u32 %v796
  %v799 = vmul.u32.u64.compose %v795, %v790
  %v800 = vextract.low.u32 %v799
  %v801 = vextract.high.u32 %v799
  %v802 = vmul.u32 %v795, %v786
  %v803 = vadd.s32 %v798, %v800
  %vm804 = vc.u32 %v798, %v800
  %v805 = vadd.s32 %v801, 1
  %v806 = vsel %vm804, %v805, %v801
  %v807 = vadd.s32 %v802, %v806
  %v808 = vadd.s32 %v807, 536870912
  %v809 = vshrl.u32 %v808, 30
  %v810 = vshll.u32 %v809, 30
  %v811 = vsub.s32 %v807, %v810
  %vm812 = vcmp.lt.s32.totalorder %v811, 0
  %v813 = vsub.s32 0, %v811
  %v814 = vsel %vm812, %v813, %v811
  %v815 = vclz %v814
  %v816 = vsub.s32 %v815, 2
  %vm817 = vcmp.gt.s32.totalorder 0, %v816
  %v818 = vsel %vm817, 0, %v816
  %v819 = vsub.s32 32, %v818
  %v820 = vshll.u32 %v811, %v818
  %v821 = vshrl.u32 %v803, %v819
  %v822 = vor.u32 %v820, %v821
  %v823 = vsub.s32 4294967266, %v818
  %v824 = vadd.s32 %v823, 127
  %v825 = vshll.u32 %v824, 23
  %v826 = vor.u32 4788187, %v825
  %v827 = vand.u32 2147483647, %v826
  %v829 = vcvt.s32.f32 %v822
  %v830 = vmul.f32 %v829, %v827
  %v831 = vxor.u32 %v830, 2147483648
  %v832 = vsel %vm749, %v831, %v830
  %v833 = vsub.s32 4, %v809
  %v834 = vsel %vm749, %v833, %v809
  %v835 = vsel %vm748, %v535, %v832
  %v836 = vsel %vm748, 0, %v834
  %v837 = vcosq.f32.pop %v835
  %v838 = vsinq.f32.pop %v835
  %vm839 = vweird.f32 %v535
  %v840 = vand.u32 %v836, 3
  %vm841 = vcmp.lt.s32.totalorder %v840, 2
  %vm842 = vcmp.eq.s32.totalorder %v840, 0
  %v843 = vxor.u32 %v838, 2147483648
  %v844 = vsel %vm842, %v837, %v843
  %vm845 = vcmp.eq.s32.totalorder %v840, 2
  %v846 = vxor.u32 %v837, 2147483648
  %v847 = vsel %vm845, %v846, %v838
  %v848 = vsel %vm841, %v844, %v847
  %v849 = vsel %vm839, nan, %v848
  %v850 = vand.u32 2147483647, %v536
  %vm851 = vcmp.le.f32.partialorder %v850, 0.7853982
  %vm852 = vcmp.lt.s32.totalorder %v536, 0
  %v853 = vand.u32 %v536, 2139095040
  %v854 = vshrl.u32 %v853, 23
  %v855 = vsub.s32 %v854, 127
  %v856 = vand.u32 2147483647, %v536
  %v857 = vand.u32 %v856, 8388607
  %v858 = vor.u32 %v857, 8388608
  %v859 = vsub.s32 0, %v858
  %v860 = vadd.s32 %v855, 1
  %vm861 = vcmp.gt.s32.totalorder %v860, 0
  %v862 = vsel %vm861, %v860, 0
  %v863 = vshrl.u32 %v862, 5
  %v864 = vand.u32 %v862, 31
  %v865 = vsub.s32 32, %v864
  %v866 = vshrl.u32 683565275, %v865
  %v867 = vshll.u32 683565275, %v864
  %v868 = vshrl.u32 2475754826, %v865
  %v869 = vor.u32 %v867, %v868
  %v870 = vshll.u32 2475754826, %v864
  %v871 = vshrl.u32 2131351028, %v865
  %v872 = vor.u32 %v870, %v871
  %v873 = vshll.u32 2131351028, %v864
  %v874 = vshrl.u32 2102212464, %v865
  %v875 = vor.u32 %v873, %v874
  %v876 = vshll.u32 2102212464, %v864
  %v877 = vshrl.u32 920167782, %v865
  %v878 = vor.u32 %v876, %v877
  %v879 = vshll.u32 920167782, %v864
  %v880 = vshrl.u32 1326507024, %v865
  %v881 = vor.u32 %v879, %v880
  %vm882 = vcmp.lt.s32.totalorder %v863, 1
  %vm883 = vcmp.lt.s32.totalorder %v863, 2
  %vm884 = vcmp.lt.s32.totalorder %v863, 3
  %vm885 = vcmp.lt.s32.totalorder %v863, 4
  %v886 = vsel %vm882, %v866, %v869
  %v887 = vsel %vm885, %v875, 2102212464
  %v888 = vsel %vm884, %v872, %v887
  %v889 = vsel %vm883, %v886, %v888
  %v890 = vsel %vm882, %v869, %v872
  %v891 = vsel %vm885, %v878, 920167782
  %v892 = vsel %vm884, %v875, %v891
  %v893 = vsel %vm883, %v890, %v892
  %v894 = vsel %vm882, %v872, %v875
  %v895 = vsel %vm885, %v881, 1326507024
  %v896 = vsel %vm884, %v878, %v895
  %v897 = vsel %vm883, %v894, %v896
  %v898 = vshll.u32 %v858, 8
  %v899 = vmul.u32.u64.compose %v898, %v897
  %v900 = vextract.low.u32 %v899
  %v901 = vextract.high.u32 %v899
  %v902 = vmul.u32.u64.compose %v898, %v893
  %v903 = vextract.low.u32 %v902
  %v904 = vextract.high.u32 %v902
  %v905 = vmul.u32 %v898, %v889
  %v906 = vadd.s32 %v901, %v903
  %vm907 = vc.u32 %v901, %v903
  %v908 = vadd.s32 %v904, 1
  %v909 = vsel %vm907, %v908, %v904
  %v910 = vadd.s32 %v905, %v909
  %v911 = vadd.s32 %v910, 536870912
  %v912 = vshrl.u32 %v911, 30
  %v913 = vshll.u32 %v912, 30
  %v914 = vsub.s32 %v910, %v913
  %vm915 = vcmp.lt.s32.totalorder %v914, 0
  %v916 = vsub.s32 0, %v914
  %v917 = vsel %vm915, %v916, %v914
  %v918 = vclz %v917
  %v919 = vsub.s32 %v918, 2
  %vm920 = vcmp.gt.s32.totalorder 0, %v919
  %v921 = vsel %vm920, 0, %v919
  %v922 = vsub.s32 32, %v921
  %v923 = vshll.u32 %v914, %v921
  %v924 = vshrl.u32 %v906, %v922
  %v925 = vor.u32 %v923, %v924
  %v926 = vsub.s32 4294967266, %v921
  %v927 = vadd.s32 %v926, 127
  %v928 = vshll.u32 %v927, 23
  %v929 = vor.u32 4788187, %v928
  %v930 = vand.u32 2147483647, %v929
  %v932 = vcvt.s32.f32 %v925
  %v933 = vmul.f32 %v932, %v930
  %v934 = vxor.u32 %v933, 2147483648
  %v935 = vsel %vm852, %v934, %v933
  %v936 = vsub.s32 4, %v912
  %v937 = vsel %vm852, %v936, %v912
  %v938 = vsel %vm851, %v536, %v935
  %v939 = vsel %vm851, 0, %v937
  %v940 = vcosq.f32.pop %v938
  %v941 = vsinq.f32.pop %v938
  %vm942 = vweird.f32 %v536
  %v943 = vand.u32 %v939, 3
  %vm944 = vcmp.lt.s32.totalorder %v943, 2
  %vm945 = vcmp.eq.s32.totalorder %v943, 0
  %v946 = vxor.u32 %v941, 2147483648
  %v947 = vsel %vm945, %v940, %v946
  %vm948 = vcmp.eq.s32.totalorder %v943, 2
  %v949 = vxor.u32 %v940, 2147483648
  %v950 = vsel %vm948, %v949, %v941
  %v951 = vsel %vm944, %v947, %v950
  %v952 = vsel %vm942, nan, %v951
  %v953 = vand.u32 2147483647, %v537
  %vm954 = vcmp.le.f32.partialorder %v953, 0.7853982
  %vm955 = vcmp.lt.s32.totalorder %v537, 0
  %v956 = vand.u32 %v537, 2139095040
  %v957 = vshrl.u32 %v956, 23
  %v958 = vsub.s32 %v957, 127
  %v959 = vand.u32 2147483647, %v537
  %v960 = vand.u32 %v959, 8388607
  %v961 = vor.u32 %v960, 8388608
  %v962 = vsub.s32 0, %v961
  %v963 = vadd.s32 %v958, 1
  %vm964 = vcmp.gt.s32.totalorder %v963, 0
  %v965 = vsel %vm964, %v963, 0
  %v966 = vshrl.u32 %v965, 5
  %v967 = vand.u32 %v965, 31
  %v968 = vsub.s32 32, %v967
  %v969 = vshrl.u32 683565275, %v968
  %v970 = vshll.u32 683565275, %v967
  %v971 = vshrl.u32 2475754826, %v968
  %v972 = vor.u32 %v970, %v971
  %v973 = vshll.u32 2475754826, %v967
  %v974 = vshrl.u32 2131351028, %v968
  %v975 = vor.u32 %v973, %v974
  %v976 = vshll.u32 2131351028, %v967
  %v977 = vshrl.u32 2102212464, %v968
  %v978 = vor.u32 %v976, %v977
  %v979 = vshll.u32 2102212464, %v967
  %v980 = vshrl.u32 920167782, %v968
  %v981 = vor.u32 %v979, %v980
  %v982 = vshll.u32 920167782, %v967
  %v983 = vshrl.u32 1326507024, %v968
  %v984 = vor.u32 %v982, %v983
  %vm985 = vcmp.lt.s32.totalorder %v966, 1
  %vm986 = vcmp.lt.s32.totalorder %v966, 2
  %vm987 = vcmp.lt.s32.totalorder %v966, 3
  %vm988 = vcmp.lt.s32.totalorder %v966, 4
  %v989 = vsel %vm985, %v969, %v972
  %v990 = vsel %vm988, %v978, 2102212464
  %v991 = vsel %vm987, %v975, %v990
  %v992 = vsel %vm986, %v989, %v991
  %v993 = vsel %vm985, %v972, %v975
  %v994 = vsel %vm988, %v981, 920167782
  %v995 = vsel %vm987, %v978, %v994
  %v996 = vsel %vm986, %v993, %v995
  %v997 = vsel %vm985, %v975, %v978
  %v998 = vsel %vm988, %v984, 1326507024
  %v999 = vsel %vm987, %v981, %v998
  %v1000 = vsel %vm986, %v997, %v999
  %v1001 = vshll.u32 %v961, 8
  %v1002 = vmul.u32.u64.compose %v1001, %v1000
  %v1003 = vextract.low.u32 %v1002
  %v1004 = vextract.high.u32 %v1002
  %v1005 = vmul.u32.u64.compose %v1001, %v996
  %v1006 = vextract.low.u32 %v1005
  %v1007 = vextract.high.u32 %v1005
  %v1008 = vmul.u32 %v1001, %v992
  %v1009 = vadd.s32 %v1004, %v1006
  %vm1010 = vc.u32 %v1004, %v1006
  %v1011 = vadd.s32 %v1007, 1
  %v1012 = vsel %vm1010, %v1011, %v1007
  %v1013 = vadd.s32 %v1008, %v1012
  %v1014 = vadd.s32 %v1013, 536870912
  %v1015 = vshrl.u32 %v1014, 30
  %v1016 = vshll.u32 %v1015, 30
  %v1017 = vsub.s32 %v1013, %v1016
  %vm1018 = vcmp.lt.s32.totalorder %v1017, 0
  %v1019 = vsub.s32 0, %v1017
  %v1020 = vsel %vm1018, %v1019, %v1017
  %v1021 = vclz %v1020
  %v1022 = vsub.s32 %v1021, 2
  %vm1023 = vcmp.gt.s32.totalorder 0, %v1022
  %v1024 = vsel %vm1023, 0, %v1022
  %v1025 = vsub.s32 32, %v1024
  %v1026 = vshll.u32 %v1017, %v1024
  %v1027 = vshrl.u32 %v1009, %v1025
  %v1028 = vor.u32 %v1026, %v1027
  %v1029 = vsub.s32 4294967266, %v1024
  %v1030 = vadd.s32 %v1029, 127
  %v1031 = vshll.u32 %v1030, 23
  %v1032 = vor.u32 4788187, %v1031
  %v1033 = vand.u32 2147483647, %v1032
  %v1035 = vcvt.s32.f32 %v1028
  %v1036 = vmul.f32 %v1035, %v1033
  %v1037 = vxor.u32 %v1036, 2147483648
  %v1038 = vsel %vm955, %v1037, %v1036
  %v1039 = vsub.s32 4, %v1015
  %v1040 = vsel %vm955, %v1039, %v1015
  %v1041 = vsel %vm954, %v537, %v1038
  %v1042 = vsel %vm954, 0, %v1040
  %v1043 = vcosq.f32.pop %v1041
  %v1044 = vsinq.f32.pop %v1041
  %vm1045 = vweird.f32 %v537
  %v1046 = vand.u32 %v1042, 3
  %vm1047 = vcmp.lt.s32.totalorder %v1046, 2
  %vm1048 = vcmp.eq.s32.totalorder %v1046, 0
  %v1049 = vxor.u32 %v1044, 2147483648
  %v1050 = vsel %vm1048, %v1043, %v1049
  %vm1051 = vcmp.eq.s32.totalorder %v1046, 2
  %v1052 = vxor.u32 %v1043, 2147483648
  %v1053 = vsel %vm1051, %v1052, %v1044
  %v1054 = vsel %vm1047, %v1050, %v1053
  %v1055 = vsel %vm1045, nan, %v1054
  %v1056 = vand.u32 2147483647, %v538
  %vm1057 = vcmp.le.f32.partialorder %v1056, 0.7853982
  %vm1058 = vcmp.lt.s32.totalorder %v538, 0
  %v1059 = vand.u32 %v538, 2139095040
  %v1060 = vshrl.u32 %v1059, 23
  %v1061 = vsub.s32 %v1060, 127
  %v1062 = vand.u32 2147483647, %v538
  %v1063 = vand.u32 %v1062, 8388607
  %v1064 = vor.u32 %v1063, 8388608
  %v1065 = vsub.s32 0, %v1064
  %v1066 = vadd.s32 %v1061, 1
  %vm1067 = vcmp.gt.s32.totalorder %v1066, 0
  %v1068 = vsel %vm1067, %v1066, 0
  %v1069 = vshrl.u32 %v1068, 5
  %v1070 = vand.u32 %v1068, 31
  %v1071 = vsub.s32 32, %v1070
  %v1072 = vshrl.u32 683565275, %v1071
  %v1073 = vshll.u32 683565275, %v1070
  %v1074 = vshrl.u32 2475754826, %v1071
  %v1075 = vor.u32 %v1073, %v1074
  %v1076 = vshll.u32 2475754826, %v1070
  %v1077 = vshrl.u32 2131351028, %v1071
  %v1078 = vor.u32 %v1076, %v1077
  %v1079 = vshll.u32 2131351028, %v1070
  %v1080 = vshrl.u32 2102212464, %v1071
  %v1081 = vor.u32 %v1079, %v1080
  %v1082 = vshll.u32 2102212464, %v1070
  %v1083 = vshrl.u32 920167782, %v1071
  %v1084 = vor.u32 %v1082, %v1083
  %v1085 = vshll.u32 920167782, %v1070
  %v1086 = vshrl.u32 1326507024, %v1071
  %v1087 = vor.u32 %v1085, %v1086
  %vm1088 = vcmp.lt.s32.totalorder %v1069, 1
  %vm1089 = vcmp.lt.s32.totalorder %v1069, 2
  %vm1090 = vcmp.lt.s32.totalorder %v1069, 3
  %vm1091 = vcmp.lt.s32.totalorder %v1069, 4
  %v1092 = vsel %vm1088, %v1072, %v1075
  %v1093 = vsel %vm1091, %v1081, 2102212464
  %v1094 = vsel %vm1090, %v1078, %v1093
  %v1095 = vsel %vm1089, %v1092, %v1094
  %v1096 = vsel %vm1088, %v1075, %v1078
  %v1097 = vsel %vm1091, %v1084, 920167782
  %v1098 = vsel %vm1090, %v1081, %v1097
  %v1099 = vsel %vm1089, %v1096, %v1098
  %v1100 = vsel %vm1088, %v1078, %v1081
  %v1101 = vsel %vm1091, %v1087, 1326507024
  %v1102 = vsel %vm1090, %v1084, %v1101
  %v1103 = vsel %vm1089, %v1100, %v1102
  %v1104 = vshll.u32 %v1064, 8
  %v1105 = vmul.u32.u64.compose %v1104, %v1103
  %v1106 = vextract.low.u32 %v1105
  %v1107 = vextract.high.u32 %v1105
  %v1108 = vmul.u32.u64.compose %v1104, %v1099
  %v1109 = vextract.low.u32 %v1108
  %v1110 = vextract.high.u32 %v1108
  %v1111 = vmul.u32 %v1104, %v1095
  %v1112 = vadd.s32 %v1107, %v1109
  %vm1113 = vc.u32 %v1107, %v1109
  %v1114 = vadd.s32 %v1110, 1
  %v1115 = vsel %vm1113, %v1114, %v1110
  %v1116 = vadd.s32 %v1111, %v1115
  %v1117 = vadd.s32 %v1116, 536870912
  %v1118 = vshrl.u32 %v1117, 30
  %v1119 = vshll.u32 %v1118, 30
  %v1120 = vsub.s32 %v1116, %v1119
  %vm1121 = vcmp.lt.s32.totalorder %v1120, 0
  %v1122 = vsub.s32 0, %v1120
  %v1123 = vsel %vm1121, %v1122, %v1120
  %v1124 = vclz %v1123
  %v1125 = vsub.s32 %v1124, 2
  %vm1126 = vcmp.gt.s32.totalorder 0, %v1125
  %v1127 = vsel %vm1126, 0, %v1125
  %v1128 = vsub.s32 32, %v1127
  %v1129 = vshll.u32 %v1120, %v1127
  %v1130 = vshrl.u32 %v1112, %v1128
  %v1131 = vor.u32 %v1129, %v1130
  %v1132 = vsub.s32 4294967266, %v1127
  %v1133 = vadd.s32 %v1132, 127
  %v1134 = vshll.u32 %v1133, 23
  %v1135 = vor.u32 4788187, %v1134
  %v1136 = vand.u32 2147483647, %v1135
  %v1138 = vcvt.s32.f32 %v1131
  %v1139 = vmul.f32 %v1138, %v1136
  %v1140 = vxor.u32 %v1139, 2147483648
  %v1141 = vsel %vm1058, %v1140, %v1139
  %v1142 = vsub.s32 4, %v1118
  %v1143 = vsel %vm1058, %v1142, %v1118
  %v1144 = vsel %vm1057, %v538, %v1141
  %v1145 = vsel %vm1057, 0, %v1143
  %v1146 = vcosq.f32.pop %v1144
  %v1147 = vsinq.f32.pop %v1144
  %vm1148 = vweird.f32 %v538
  %v1149 = vand.u32 %v1145, 3
  %vm1150 = vcmp.lt.s32.totalorder %v1149, 2
  %vm1151 = vcmp.eq.s32.totalorder %v1149, 0
  %v1152 = vxor.u32 %v1147, 2147483648
  %v1153 = vsel %vm1151, %v1146, %v1152
  %vm1154 = vcmp.eq.s32.totalorder %v1149, 2
  %v1155 = vxor.u32 %v1146, 2147483648
  %v1156 = vsel %vm1154, %v1155, %v1147
  %v1157 = vsel %vm1150, %v1153, %v1156
  %v1158 = vsel %vm1148, nan, %v1157
  %v1159 = vand.u32 2147483647, %v539
  %vm1160 = vcmp.le.f32.partialorder %v1159, 0.7853982
  %vm1161 = vcmp.lt.s32.totalorder %v539, 0
  %v1162 = vand.u32 %v539, 2139095040
  %v1163 = vshrl.u32 %v1162, 23
  %v1164 = vsub.s32 %v1163, 127
  %v1165 = vand.u32 2147483647, %v539
  %v1166 = vand.u32 %v1165, 8388607
  %v1167 = vor.u32 %v1166, 8388608
  %v1168 = vsub.s32 0, %v1167
  %v1169 = vadd.s32 %v1164, 1
  %vm1170 = vcmp.gt.s32.totalorder %v1169, 0
  %v1171 = vsel %vm1170, %v1169, 0
  %v1172 = vshrl.u32 %v1171, 5
  %v1173 = vand.u32 %v1171, 31
  %v1174 = vsub.s32 32, %v1173
  %v1175 = vshrl.u32 683565275, %v1174
  %v1176 = vshll.u32 683565275, %v1173
  %v1177 = vshrl.u32 2475754826, %v1174
  %v1178 = vor.u32 %v1176, %v1177
  %v1179 = vshll.u32 2475754826, %v1173
  %v1180 = vshrl.u32 2131351028, %v1174
  %v1181 = vor.u32 %v1179, %v1180
  %v1182 = vshll.u32 2131351028, %v1173
  %v1183 = vshrl.u32 2102212464, %v1174
  %v1184 = vor.u32 %v1182, %v1183
  %v1185 = vshll.u32 2102212464, %v1173
  %v1186 = vshrl.u32 920167782, %v1174
  %v1187 = vor.u32 %v1185, %v1186
  %v1188 = vshll.u32 920167782, %v1173
  %v1189 = vshrl.u32 1326507024, %v1174
  %v1190 = vor.u32 %v1188, %v1189
  %vm1191 = vcmp.lt.s32.totalorder %v1172, 1
  %vm1192 = vcmp.lt.s32.totalorder %v1172, 2
  %vm1193 = vcmp.lt.s32.totalorder %v1172, 3
  %vm1194 = vcmp.lt.s32.totalorder %v1172, 4
  %v1195 = vsel %vm1191, %v1175, %v1178
  %v1196 = vsel %vm1194, %v1184, 2102212464
  %v1197 = vsel %vm1193, %v1181, %v1196
  %v1198 = vsel %vm1192, %v1195, %v1197
  %v1199 = vsel %vm1191, %v1178, %v1181
  %v1200 = vsel %vm1194, %v1187, 920167782
  %v1201 = vsel %vm1193, %v1184, %v1200
  %v1202 = vsel %vm1192, %v1199, %v1201
  %v1203 = vsel %vm1191, %v1181, %v1184
  %v1204 = vsel %vm1194, %v1190, 1326507024
  %v1205 = vsel %vm1193, %v1187, %v1204
  %v1206 = vsel %vm1192, %v1203, %v1205
  %v1207 = vshll.u32 %v1167, 8
  %v1208 = vmul.u32.u64.compose %v1207, %v1206
  %v1209 = vextract.low.u32 %v1208
  %v1210 = vextract.high.u32 %v1208
  %v1211 = vmul.u32.u64.compose %v1207, %v1202
  %v1212 = vextract.low.u32 %v1211
  %v1213 = vextract.high.u32 %v1211
  %v1214 = vmul.u32 %v1207, %v1198
  %v1215 = vadd.s32 %v1210, %v1212
  %vm1216 = vc.u32 %v1210, %v1212
  %v1217 = vadd.s32 %v1213, 1
  %v1218 = vsel %vm1216, %v1217, %v1213
  %v1219 = vadd.s32 %v1214, %v1218
  %v1220 = vadd.s32 %v1219, 536870912
  %v1221 = vshrl.u32 %v1220, 30
  %v1222 = vshll.u32 %v1221, 30
  %v1223 = vsub.s32 %v1219, %v1222
  %vm1224 = vcmp.lt.s32.totalorder %v1223, 0
  %v1225 = vsub.s32 0, %v1223
  %v1226 = vsel %vm1224, %v1225, %v1223
  %v1227 = vclz %v1226
  %v1228 = vsub.s32 %v1227, 2
  %vm1229 = vcmp.gt.s32.totalorder 0, %v1228
  %v1230 = vsel %vm1229, 0, %v1228
  %v1231 = vsub.s32 32, %v1230
  %v1232 = vshll.u32 %v1223, %v1230
  %v1233 = vshrl.u32 %v1215, %v1231
  %v1234 = vor.u32 %v1232, %v1233
  %v1235 = vsub.s32 4294967266, %v1230
  %v1236 = vadd.s32 %v1235, 127
  %v1237 = vshll.u32 %v1236, 23
  %v1238 = vor.u32 4788187, %v1237
  %v1239 = vand.u32 2147483647, %v1238
  %v1241 = vcvt.s32.f32 %v1234
  %v1242 = vmul.f32 %v1241, %v1239
  %v1243 = vxor.u32 %v1242, 2147483648
  %v1244 = vsel %vm1161, %v1243, %v1242
  %v1245 = vsub.s32 4, %v1221
  %v1246 = vsel %vm1161, %v1245, %v1221
  %v1247 = vsel %vm1160, %v539, %v1244
  %v1248 = vsel %vm1160, 0, %v1246
  %v1249 = vcosq.f32.pop %v1247
  %v1250 = vsinq.f32.pop %v1247
  %vm1251 = vweird.f32 %v539
  %v1252 = vand.u32 %v1248, 3
  %vm1253 = vcmp.lt.s32.totalorder %v1252, 2
  %vm1254 = vcmp.eq.s32.totalorder %v1252, 0
  %v1255 = vxor.u32 %v1250, 2147483648
  %v1256 = vsel %vm1254, %v1249, %v1255
  %vm1257 = vcmp.eq.s32.totalorder %v1252, 2
  %v1258 = vxor.u32 %v1249, 2147483648
  %v1259 = vsel %vm1257, %v1258, %v1250
  %v1260 = vsel %vm1253, %v1256, %v1259
  %v1261 = vsel %vm1251, nan, %v1260
  %v1262 = vand.u32 2147483647, %v540
  %vm1263 = vcmp.le.f32.partialorder %v1262, 0.7853982
  %vm1264 = vcmp.lt.s32.totalorder %v540, 0
  %v1265 = vand.u32 %v540, 2139095040
  %v1266 = vshrl.u32 %v1265, 23
  %v1267 = vsub.s32 %v1266, 127
  %v1268 = vand.u32 2147483647, %v540
  %v1269 = vand.u32 %v1268, 8388607
  %v1270 = vor.u32 %v1269, 8388608
  %v1271 = vsub.s32 0, %v1270
  %v1272 = vadd.s32 %v1267, 1
  %vm1273 = vcmp.gt.s32.totalorder %v1272, 0
  %v1274 = vsel %vm1273, %v1272, 0
  %v1275 = vshrl.u32 %v1274, 5
  %v1276 = vand.u32 %v1274, 31
  %v1277 = vsub.s32 32, %v1276
  %v1278 = vshrl.u32 683565275, %v1277
  %v1279 = vshll.u32 683565275, %v1276
  %v1280 = vshrl.u32 2475754826, %v1277
  %v1281 = vor.u32 %v1279, %v1280
  %v1282 = vshll.u32 2475754826, %v1276
  %v1283 = vshrl.u32 2131351028, %v1277
  %v1284 = vor.u32 %v1282, %v1283
  %v1285 = vshll.u32 2131351028, %v1276
  %v1286 = vshrl.u32 2102212464, %v1277
  %v1287 = vor.u32 %v1285, %v1286
  %v1288 = vshll.u32 2102212464, %v1276
  %v1289 = vshrl.u32 920167782, %v1277
  %v1290 = vor.u32 %v1288, %v1289
  %v1291 = vshll.u32 920167782, %v1276
  %v1292 = vshrl.u32 1326507024, %v1277
  %v1293 = vor.u32 %v1291, %v1292
  %vm1294 = vcmp.lt.s32.totalorder %v1275, 1
  %vm1295 = vcmp.lt.s32.totalorder %v1275, 2
  %vm1296 = vcmp.lt.s32.totalorder %v1275, 3
  %vm1297 = vcmp.lt.s32.totalorder %v1275, 4
  %v1298 = vsel %vm1294, %v1278, %v1281
  %v1299 = vsel %vm1297, %v1287, 2102212464
  %v1300 = vsel %vm1296, %v1284, %v1299
  %v1301 = vsel %vm1295, %v1298, %v1300
  %v1302 = vsel %vm1294, %v1281, %v1284
  %v1303 = vsel %vm1297, %v1290, 920167782
  %v1304 = vsel %vm1296, %v1287, %v1303
  %v1305 = vsel %vm1295, %v1302, %v1304
  %v1306 = vsel %vm1294, %v1284, %v1287
  %v1307 = vsel %vm1297, %v1293, 1326507024
  %v1308 = vsel %vm1296, %v1290, %v1307
  %v1309 = vsel %vm1295, %v1306, %v1308
  %v1310 = vshll.u32 %v1270, 8
  %v1311 = vmul.u32.u64.compose %v1310, %v1309
  %v1312 = vextract.low.u32 %v1311
  %v1313 = vextract.high.u32 %v1311
  %v1314 = vmul.u32.u64.compose %v1310, %v1305
  %v1315 = vextract.low.u32 %v1314
  %v1316 = vextract.high.u32 %v1314
  %v1317 = vmul.u32 %v1310, %v1301
  %v1318 = vadd.s32 %v1313, %v1315
  %vm1319 = vc.u32 %v1313, %v1315
  %v1320 = vadd.s32 %v1316, 1
  %v1321 = vsel %vm1319, %v1320, %v1316
  %v1322 = vadd.s32 %v1317, %v1321
  %v1323 = vadd.s32 %v1322, 536870912
  %v1324 = vshrl.u32 %v1323, 30
  %v1325 = vshll.u32 %v1324, 30
  %v1326 = vsub.s32 %v1322, %v1325
  %vm1327 = vcmp.lt.s32.totalorder %v1326, 0
  %v1328 = vsub.s32 0, %v1326
  %v1329 = vsel %vm1327, %v1328, %v1326
  %v1330 = vclz %v1329
  %v1331 = vsub.s32 %v1330, 2
  %vm1332 = vcmp.gt.s32.totalorder 0, %v1331
  %v1333 = vsel %vm1332, 0, %v1331
  %v1334 = vsub.s32 32, %v1333
  %v1335 = vshll.u32 %v1326, %v1333
  %v1336 = vshrl.u32 %v1318, %v1334
  %v1337 = vor.u32 %v1335, %v1336
  %v1338 = vsub.s32 4294967266, %v1333
  %v1339 = vadd.s32 %v1338, 127
  %v1340 = vshll.u32 %v1339, 23
  %v1341 = vor.u32 4788187, %v1340
  %v1342 = vand.u32 2147483647, %v1341
  %v1344 = vcvt.s32.f32 %v1337
  %v1345 = vmul.f32 %v1344, %v1342
  %v1346 = vxor.u32 %v1345, 2147483648
  %v1347 = vsel %vm1264, %v1346, %v1345
  %v1348 = vsub.s32 4, %v1324
  %v1349 = vsel %vm1264, %v1348, %v1324
  %v1350 = vsel %vm1263, %v540, %v1347
  %v1351 = vsel %vm1263, 0, %v1349
  %v1352 = vcosq.f32.pop %v1350
  %v1353 = vsinq.f32.pop %v1350
  %vm1354 = vweird.f32 %v540
  %v1355 = vand.u32 %v1351, 3
  %vm1356 = vcmp.lt.s32.totalorder %v1355, 2
  %vm1357 = vcmp.eq.s32.totalorder %v1355, 0
  %v1358 = vxor.u32 %v1353, 2147483648
  %v1359 = vsel %vm1357, %v1352, %v1358
  %vm1360 = vcmp.eq.s32.totalorder %v1355, 2
  %v1361 = vxor.u32 %v1352, 2147483648
  %v1362 = vsel %vm1360, %v1361, %v1353
  %v1363 = vsel %vm1356, %v1359, %v1362
  %v1364 = vsel %vm1354, nan, %v1363
  %v1365 = vld [vmem:[%s3] sm:$0xff]
  %v1366 = vld [vmem:[%s3 + $0x8] sm:$0xff]
  %v1367 = vld [vmem:[%s3 + $0x10] sm:$0xff]
  %v1368 = vpack.c.bf16 %v746, %v643
  %v1369 = vpack.c.bf16 %v952, %v849
  %v1370 = vpack.c.bf16 %v1158, %v1055
  %v1371 = vpack.c.bf16 %v1364, %v1261
  %v1372 = vand.u32 2147483647, %v533
  %vm1373 = vcmp.le.f32.partialorder %v1372, 0.7853982
  %vm1374 = vcmp.lt.s32.totalorder %v533, 0
  %v1375 = vand.u32 %v533, 2139095040
  %v1376 = vshrl.u32 %v1375, 23
  %v1377 = vsub.s32 %v1376, 127
  %v1378 = vand.u32 2147483647, %v533
  %v1379 = vand.u32 %v1378, 8388607
  %v1380 = vor.u32 %v1379, 8388608
  %v1381 = vsub.s32 0, %v1380
  %v1382 = vadd.s32 %v1377, 1
  %vm1383 = vcmp.gt.s32.totalorder %v1382, 0
  %v1384 = vsel %vm1383, %v1382, 0
  %v1385 = vshrl.u32 %v1384, 5
  %v1386 = vand.u32 %v1384, 31
  %v1387 = vsub.s32 32, %v1386
  %v1388 = vshrl.u32 683565275, %v1387
  %v1389 = vshll.u32 683565275, %v1386
  %v1390 = vshrl.u32 2475754826, %v1387
  %v1391 = vor.u32 %v1389, %v1390
  %v1392 = vshll.u32 2475754826, %v1386
  %v1393 = vshrl.u32 2131351028, %v1387
  %v1394 = vor.u32 %v1392, %v1393
  %v1395 = vshll.u32 2131351028, %v1386
  %v1396 = vshrl.u32 2102212464, %v1387
  %v1397 = vor.u32 %v1395, %v1396
  %v1398 = vshll.u32 2102212464, %v1386
  %v1399 = vshrl.u32 920167782, %v1387
  %v1400 = vor.u32 %v1398, %v1399
  %v1401 = vshll.u32 920167782, %v1386
  %v1402 = vshrl.u32 1326507024, %v1387
  %v1403 = vor.u32 %v1401, %v1402
  %vm1404 = vcmp.lt.s32.totalorder %v1385, 1
  %vm1405 = vcmp.lt.s32.totalorder %v1385, 2
  %vm1406 = vcmp.lt.s32.totalorder %v1385, 3
  %vm1407 = vcmp.lt.s32.totalorder %v1385, 4
  %v1408 = vsel %vm1404, %v1388, %v1391
  %v1409 = vsel %vm1407, %v1397, 2102212464
  %v1410 = vsel %vm1406, %v1394, %v1409
  %v1411 = vsel %vm1405, %v1408, %v1410
  %v1412 = vsel %vm1404, %v1391, %v1394
  %v1413 = vsel %vm1407, %v1400, 920167782
  %v1414 = vsel %vm1406, %v1397, %v1413
  %v1415 = vsel %vm1405, %v1412, %v1414
  %v1416 = vsel %vm1404, %v1394, %v1397
  %v1417 = vsel %vm1407, %v1403, 1326507024
  %v1418 = vsel %vm1406, %v1400, %v1417
  %v1419 = vsel %vm1405, %v1416, %v1418
  %v1420 = vshll.u32 %v1380, 8
  %v1421 = vmul.u32.u64.compose %v1420, %v1419
  %v1422 = vextract.low.u32 %v1421
  %v1423 = vextract.high.u32 %v1421
  %v1424 = vmul.u32.u64.compose %v1420, %v1415
  %v1425 = vextract.low.u32 %v1424
  %v1426 = vextract.high.u32 %v1424
  %v1427 = vmul.u32 %v1420, %v1411
  %v1428 = vadd.s32 %v1423, %v1425
  %vm1429 = vc.u32 %v1423, %v1425
  %v1430 = vadd.s32 %v1426, 1
  %v1431 = vsel %vm1429, %v1430, %v1426
  %v1432 = vadd.s32 %v1427, %v1431
  %v1433 = vadd.s32 %v1432, 536870912
  %v1434 = vshrl.u32 %v1433, 30
  %v1435 = vshll.u32 %v1434, 30
  %v1436 = vsub.s32 %v1432, %v1435
  %vm1437 = vcmp.lt.s32.totalorder %v1436, 0
  %v1438 = vsub.s32 0, %v1436
  %v1439 = vsel %vm1437, %v1438, %v1436
  %v1440 = vclz %v1439
  %v1441 = vsub.s32 %v1440, 2
  %vm1442 = vcmp.gt.s32.totalorder 0, %v1441
  %v1443 = vsel %vm1442, 0, %v1441
  %v1444 = vsub.s32 32, %v1443
  %v1445 = vshll.u32 %v1436, %v1443
  %v1446 = vshrl.u32 %v1428, %v1444
  %v1447 = vor.u32 %v1445, %v1446
  %v1448 = vsub.s32 4294967266, %v1443
  %v1449 = vadd.s32 %v1448, 127
  %v1450 = vshll.u32 %v1449, 23
  %v1451 = vor.u32 4788187, %v1450
  %v1452 = vand.u32 2147483647, %v1451
  %v1454 = vcvt.s32.f32 %v1447
  %v1455 = vmul.f32 %v1454, %v1452
  %v1456 = vxor.u32 %v1455, 2147483648
  %v1457 = vsel %vm1374, %v1456, %v1455
  %v1458 = vsub.s32 4, %v1434
  %v1459 = vsel %vm1374, %v1458, %v1434
  %v1460 = vsel %vm1373, %v533, %v1457
  %v1461 = vsel %vm1373, 0, %v1459
  %v1462 = vcosq.f32.pop %v1460
  %v1463 = vsinq.f32.pop %v1460
  %vm1464 = vweird.f32 %v533
  %v1465 = vadd.s32 %v1461, 3
  %v1466 = vand.u32 %v1465, 3
  %vm1467 = vcmp.lt.s32.totalorder %v1466, 2
  %vm1468 = vcmp.eq.s32.totalorder %v1466, 0
  %v1469 = vxor.u32 %v1463, 2147483648
  %v1470 = vsel %vm1468, %v1462, %v1469
  %vm1471 = vcmp.eq.s32.totalorder %v1466, 2
  %v1472 = vxor.u32 %v1462, 2147483648
  %v1473 = vsel %vm1471, %v1472, %v1463
  %v1474 = vsel %vm1467, %v1470, %v1473
  %v1475 = vsel %vm1464, nan, %v1474
  %v1476 = vand.u32 2147483647, %v534
  %vm1477 = vcmp.le.f32.partialorder %v1476, 0.7853982
  %vm1478 = vcmp.lt.s32.totalorder %v534, 0
  %v1479 = vand.u32 %v534, 2139095040
  %v1480 = vshrl.u32 %v1479, 23
  %v1481 = vsub.s32 %v1480, 127
  %v1482 = vand.u32 2147483647, %v534
  %v1483 = vand.u32 %v1482, 8388607
  %v1484 = vor.u32 %v1483, 8388608
  %v1485 = vsub.s32 0, %v1484
  %v1486 = vadd.s32 %v1481, 1
  %vm1487 = vcmp.gt.s32.totalorder %v1486, 0
  %v1488 = vsel %vm1487, %v1486, 0
  %v1489 = vshrl.u32 %v1488, 5
  %v1490 = vand.u32 %v1488, 31
  %v1491 = vsub.s32 32, %v1490
  %v1492 = vshrl.u32 683565275, %v1491
  %v1493 = vshll.u32 683565275, %v1490
  %v1494 = vshrl.u32 2475754826, %v1491
  %v1495 = vor.u32 %v1493, %v1494
  %v1496 = vshll.u32 2475754826, %v1490
  %v1497 = vshrl.u32 2131351028, %v1491
  %v1498 = vor.u32 %v1496, %v1497
  %v1499 = vshll.u32 2131351028, %v1490
  %v1500 = vshrl.u32 2102212464, %v1491
  %v1501 = vor.u32 %v1499, %v1500
  %v1502 = vshll.u32 2102212464, %v1490
  %v1503 = vshrl.u32 920167782, %v1491
  %v1504 = vor.u32 %v1502, %v1503
  %v1505 = vshll.u32 920167782, %v1490
  %v1506 = vshrl.u32 1326507024, %v1491
  %v1507 = vor.u32 %v1505, %v1506
  %vm1508 = vcmp.lt.s32.totalorder %v1489, 1
  %vm1509 = vcmp.lt.s32.totalorder %v1489, 2
  %vm1510 = vcmp.lt.s32.totalorder %v1489, 3
  %vm1511 = vcmp.lt.s32.totalorder %v1489, 4
  %v1512 = vsel %vm1508, %v1492, %v1495
  %v1513 = vsel %vm1511, %v1501, 2102212464
  %v1514 = vsel %vm1510, %v1498, %v1513
  %v1515 = vsel %vm1509, %v1512, %v1514
  %v1516 = vsel %vm1508, %v1495, %v1498
  %v1517 = vsel %vm1511, %v1504, 920167782
  %v1518 = vsel %vm1510, %v1501, %v1517
  %v1519 = vsel %vm1509, %v1516, %v1518
  %v1520 = vsel %vm1508, %v1498, %v1501
  %v1521 = vsel %vm1511, %v1507, 1326507024
  %v1522 = vsel %vm1510, %v1504, %v1521
  %v1523 = vsel %vm1509, %v1520, %v1522
  %v1524 = vshll.u32 %v1484, 8
  %v1525 = vmul.u32.u64.compose %v1524, %v1523
  %v1526 = vextract.low.u32 %v1525
  %v1527 = vextract.high.u32 %v1525
  %v1528 = vmul.u32.u64.compose %v1524, %v1519
  %v1529 = vextract.low.u32 %v1528
  %v1530 = vextract.high.u32 %v1528
  %v1531 = vmul.u32 %v1524, %v1515
  %v1532 = vadd.s32 %v1527, %v1529
  %vm1533 = vc.u32 %v1527, %v1529
  %v1534 = vadd.s32 %v1530, 1
  %v1535 = vsel %vm1533, %v1534, %v1530
  %v1536 = vadd.s32 %v1531, %v1535
  %v1537 = vadd.s32 %v1536, 536870912
  %v1538 = vshrl.u32 %v1537, 30
  %v1539 = vshll.u32 %v1538, 30
  %v1540 = vsub.s32 %v1536, %v1539
  %vm1541 = vcmp.lt.s32.totalorder %v1540, 0
  %v1542 = vsub.s32 0, %v1540
  %v1543 = vsel %vm1541, %v1542, %v1540
  %v1544 = vclz %v1543
  %v1545 = vsub.s32 %v1544, 2
  %vm1546 = vcmp.gt.s32.totalorder 0, %v1545
  %v1547 = vsel %vm1546, 0, %v1545
  %v1548 = vsub.s32 32, %v1547
  %v1549 = vshll.u32 %v1540, %v1547
  %v1550 = vshrl.u32 %v1532, %v1548
  %v1551 = vor.u32 %v1549, %v1550
  %v1552 = vsub.s32 4294967266, %v1547
  %v1553 = vadd.s32 %v1552, 127
  %v1554 = vshll.u32 %v1553, 23
  %v1555 = vor.u32 4788187, %v1554
  %v1556 = vand.u32 2147483647, %v1555
  %v1558 = vcvt.s32.f32 %v1551
  %v1559 = vmul.f32 %v1558, %v1556
  %v1560 = vxor.u32 %v1559, 2147483648
  %v1561 = vsel %vm1478, %v1560, %v1559
  %v1562 = vsub.s32 4, %v1538
  %v1563 = vsel %vm1478, %v1562, %v1538
  %v1564 = vsel %vm1477, %v534, %v1561
  %v1565 = vsel %vm1477, 0, %v1563
  %v1566 = vcosq.f32.pop %v1564
  %v1567 = vsinq.f32.pop %v1564
  %vm1568 = vweird.f32 %v534
  %v1569 = vadd.s32 %v1565, 3
  %v1570 = vand.u32 %v1569, 3
  %vm1571 = vcmp.lt.s32.totalorder %v1570, 2
  %vm1572 = vcmp.eq.s32.totalorder %v1570, 0
  %v1573 = vxor.u32 %v1567, 2147483648
  %v1574 = vsel %vm1572, %v1566, %v1573
  %vm1575 = vcmp.eq.s32.totalorder %v1570, 2
  %v1576 = vxor.u32 %v1566, 2147483648
  %v1577 = vsel %vm1575, %v1576, %v1567
  %v1578 = vsel %vm1571, %v1574, %v1577
  %v1579 = vsel %vm1568, nan, %v1578
  %v1580 = vand.u32 2147483647, %v535
  %vm1581 = vcmp.le.f32.partialorder %v1580, 0.7853982
  %vm1582 = vcmp.lt.s32.totalorder %v535, 0
  %v1583 = vand.u32 %v535, 2139095040
  %v1584 = vshrl.u32 %v1583, 23
  %v1585 = vsub.s32 %v1584, 127
  %v1586 = vand.u32 2147483647, %v535
  %v1587 = vand.u32 %v1586, 8388607
  %v1588 = vor.u32 %v1587, 8388608
  %v1589 = vsub.s32 0, %v1588
  %v1590 = vadd.s32 %v1585, 1
  %vm1591 = vcmp.gt.s32.totalorder %v1590, 0
  %v1592 = vsel %vm1591, %v1590, 0
  %v1593 = vshrl.u32 %v1592, 5
  %v1594 = vand.u32 %v1592, 31
  %v1595 = vsub.s32 32, %v1594
  %v1596 = vshrl.u32 683565275, %v1595
  %v1597 = vshll.u32 683565275, %v1594
  %v1598 = vshrl.u32 2475754826, %v1595
  %v1599 = vor.u32 %v1597, %v1598
  %v1600 = vshll.u32 2475754826, %v1594
  %v1601 = vshrl.u32 2131351028, %v1595
  %v1602 = vor.u32 %v1600, %v1601
  %v1603 = vshll.u32 2131351028, %v1594
  %v1604 = vshrl.u32 2102212464, %v1595
  %v1605 = vor.u32 %v1603, %v1604
  %v1606 = vshll.u32 2102212464, %v1594
  %v1607 = vshrl.u32 920167782, %v1595
  %v1608 = vor.u32 %v1606, %v1607
  %v1609 = vshll.u32 920167782, %v1594
  %v1610 = vshrl.u32 1326507024, %v1595
  %v1611 = vor.u32 %v1609, %v1610
  %vm1612 = vcmp.lt.s32.totalorder %v1593, 1
  %vm1613 = vcmp.lt.s32.totalorder %v1593, 2
  %vm1614 = vcmp.lt.s32.totalorder %v1593, 3
  %vm1615 = vcmp.lt.s32.totalorder %v1593, 4
  %v1616 = vsel %vm1612, %v1596, %v1599
  %v1617 = vsel %vm1615, %v1605, 2102212464
  %v1618 = vsel %vm1614, %v1602, %v1617
  %v1619 = vsel %vm1613, %v1616, %v1618
  %v1620 = vsel %vm1612, %v1599, %v1602
  %v1621 = vsel %vm1615, %v1608, 920167782
  %v1622 = vsel %vm1614, %v1605, %v1621
  %v1623 = vsel %vm1613, %v1620, %v1622
  %v1624 = vsel %vm1612, %v1602, %v1605
  %v1625 = vsel %vm1615, %v1611, 1326507024
  %v1626 = vsel %vm1614, %v1608, %v1625
  %v1627 = vsel %vm1613, %v1624, %v1626
  %v1628 = vshll.u32 %v1588, 8
  %v1629 = vmul.u32.u64.compose %v1628, %v1627
  %v1630 = vextract.low.u32 %v1629
  %v1631 = vextract.high.u32 %v1629
  %v1632 = vmul.u32.u64.compose %v1628, %v1623
  %v1633 = vextract.low.u32 %v1632
  %v1634 = vextract.high.u32 %v1632
  %v1635 = vmul.u32 %v1628, %v1619
  %v1636 = vadd.s32 %v1631, %v1633
  %vm1637 = vc.u32 %v1631, %v1633
  %v1638 = vadd.s32 %v1634, 1
  %v1639 = vsel %vm1637, %v1638, %v1634
  %v1640 = vadd.s32 %v1635, %v1639
  %v1641 = vadd.s32 %v1640, 536870912
  %v1642 = vshrl.u32 %v1641, 30
  %v1643 = vshll.u32 %v1642, 30
  %v1644 = vsub.s32 %v1640, %v1643
  %vm1645 = vcmp.lt.s32.totalorder %v1644, 0
  %v1646 = vsub.s32 0, %v1644
  %v1647 = vsel %vm1645, %v1646, %v1644
  %v1648 = vclz %v1647
  %v1649 = vsub.s32 %v1648, 2
  %vm1650 = vcmp.gt.s32.totalorder 0, %v1649
  %v1651 = vsel %vm1650, 0, %v1649
  %v1652 = vsub.s32 32, %v1651
  %v1653 = vshll.u32 %v1644, %v1651
  %v1654 = vshrl.u32 %v1636, %v1652
  %v1655 = vor.u32 %v1653, %v1654
  %v1656 = vsub.s32 4294967266, %v1651
  %v1657 = vadd.s32 %v1656, 127
  %v1658 = vshll.u32 %v1657, 23
  %v1659 = vor.u32 4788187, %v1658
  %v1660 = vand.u32 2147483647, %v1659
  %v1662 = vcvt.s32.f32 %v1655
  %v1663 = vmul.f32 %v1662, %v1660
  %v1664 = vxor.u32 %v1663, 2147483648
  %v1665 = vsel %vm1582, %v1664, %v1663
  %v1666 = vsub.s32 4, %v1642
  %v1667 = vsel %vm1582, %v1666, %v1642
  %v1668 = vsel %vm1581, %v535, %v1665
  %v1669 = vsel %vm1581, 0, %v1667
  %v1670 = vcosq.f32.pop %v1668
  %v1671 = vsinq.f32.pop %v1668
  %vm1672 = vweird.f32 %v535
  %v1673 = vadd.s32 %v1669, 3
  %v1674 = vand.u32 %v1673, 3
  %vm1675 = vcmp.lt.s32.totalorder %v1674, 2
  %vm1676 = vcmp.eq.s32.totalorder %v1674, 0
  %v1677 = vxor.u32 %v1671, 2147483648
  %v1678 = vsel %vm1676, %v1670, %v1677
  %vm1679 = vcmp.eq.s32.totalorder %v1674, 2
  %v1680 = vxor.u32 %v1670, 2147483648
  %v1681 = vsel %vm1679, %v1680, %v1671
  %v1682 = vsel %vm1675, %v1678, %v1681
  %v1683 = vsel %vm1672, nan, %v1682
  %v1684 = vand.u32 2147483647, %v536
  %vm1685 = vcmp.le.f32.partialorder %v1684, 0.7853982
  %vm1686 = vcmp.lt.s32.totalorder %v536, 0
  %v1687 = vand.u32 %v536, 2139095040
  %v1688 = vshrl.u32 %v1687, 23
  %v1689 = vsub.s32 %v1688, 127
  %v1690 = vand.u32 2147483647, %v536
  %v1691 = vand.u32 %v1690, 8388607
  %v1692 = vor.u32 %v1691, 8388608
  %v1693 = vsub.s32 0, %v1692
  %v1694 = vadd.s32 %v1689, 1
  %vm1695 = vcmp.gt.s32.totalorder %v1694, 0
  %v1696 = vsel %vm1695, %v1694, 0
  %v1697 = vshrl.u32 %v1696, 5
  %v1698 = vand.u32 %v1696, 31
  %v1699 = vsub.s32 32, %v1698
  %v1700 = vshrl.u32 683565275, %v1699
  %v1701 = vshll.u32 683565275, %v1698
  %v1702 = vshrl.u32 2475754826, %v1699
  %v1703 = vor.u32 %v1701, %v1702
  %v1704 = vshll.u32 2475754826, %v1698
  %v1705 = vshrl.u32 2131351028, %v1699
  %v1706 = vor.u32 %v1704, %v1705
  %v1707 = vshll.u32 2131351028, %v1698
  %v1708 = vshrl.u32 2102212464, %v1699
  %v1709 = vor.u32 %v1707, %v1708
  %v1710 = vshll.u32 2102212464, %v1698
  %v1711 = vshrl.u32 920167782, %v1699
  %v1712 = vor.u32 %v1710, %v1711
  %v1713 = vshll.u32 920167782, %v1698
  %v1714 = vshrl.u32 1326507024, %v1699
  %v1715 = vor.u32 %v1713, %v1714
  %vm1716 = vcmp.lt.s32.totalorder %v1697, 1
  %vm1717 = vcmp.lt.s32.totalorder %v1697, 2
  %vm1718 = vcmp.lt.s32.totalorder %v1697, 3
  %vm1719 = vcmp.lt.s32.totalorder %v1697, 4
  %v1720 = vsel %vm1716, %v1700, %v1703
  %v1721 = vsel %vm1719, %v1709, 2102212464
  %v1722 = vsel %vm1718, %v1706, %v1721
  %v1723 = vsel %vm1717, %v1720, %v1722
  %v1724 = vsel %vm1716, %v1703, %v1706
  %v1725 = vsel %vm1719, %v1712, 920167782
  %v1726 = vsel %vm1718, %v1709, %v1725
  %v1727 = vsel %vm1717, %v1724, %v1726
  %v1728 = vsel %vm1716, %v1706, %v1709
  %v1729 = vsel %vm1719, %v1715, 1326507024
  %v1730 = vsel %vm1718, %v1712, %v1729
  %v1731 = vsel %vm1717, %v1728, %v1730
  %v1732 = vshll.u32 %v1692, 8
  %v1733 = vmul.u32.u64.compose %v1732, %v1731
  %v1734 = vextract.low.u32 %v1733
  %v1735 = vextract.high.u32 %v1733
  %v1736 = vmul.u32.u64.compose %v1732, %v1727
  %v1737 = vextract.low.u32 %v1736
  %v1738 = vextract.high.u32 %v1736
  %v1739 = vmul.u32 %v1732, %v1723
  %v1740 = vadd.s32 %v1735, %v1737
  %vm1741 = vc.u32 %v1735, %v1737
  %v1742 = vadd.s32 %v1738, 1
  %v1743 = vsel %vm1741, %v1742, %v1738
  %v1744 = vadd.s32 %v1739, %v1743
  %v1745 = vadd.s32 %v1744, 536870912
  %v1746 = vshrl.u32 %v1745, 30
  %v1747 = vshll.u32 %v1746, 30
  %v1748 = vsub.s32 %v1744, %v1747
  %vm1749 = vcmp.lt.s32.totalorder %v1748, 0
  %v1750 = vsub.s32 0, %v1748
  %v1751 = vsel %vm1749, %v1750, %v1748
  %v1752 = vclz %v1751
  %v1753 = vsub.s32 %v1752, 2
  %vm1754 = vcmp.gt.s32.totalorder 0, %v1753
  %v1755 = vsel %vm1754, 0, %v1753
  %v1756 = vsub.s32 32, %v1755
  %v1757 = vshll.u32 %v1748, %v1755
  %v1758 = vshrl.u32 %v1740, %v1756
  %v1759 = vor.u32 %v1757, %v1758
  %v1760 = vsub.s32 4294967266, %v1755
  %v1761 = vadd.s32 %v1760, 127
  %v1762 = vshll.u32 %v1761, 23
  %v1763 = vor.u32 4788187, %v1762
  %v1764 = vand.u32 2147483647, %v1763
  %v1766 = vcvt.s32.f32 %v1759
  %v1767 = vmul.f32 %v1766, %v1764
  %v1768 = vxor.u32 %v1767, 2147483648
  %v1769 = vsel %vm1686, %v1768, %v1767
  %v1770 = vsub.s32 4, %v1746
  %v1771 = vsel %vm1686, %v1770, %v1746
  %v1772 = vsel %vm1685, %v536, %v1769
  %v1773 = vsel %vm1685, 0, %v1771
  %v1774 = vcosq.f32.pop %v1772
  %v1775 = vsinq.f32.pop %v1772
  %vm1776 = vweird.f32 %v536
  %v1777 = vadd.s32 %v1773, 3
  %v1778 = vand.u32 %v1777, 3
  %vm1779 = vcmp.lt.s32.totalorder %v1778, 2
  %vm1780 = vcmp.eq.s32.totalorder %v1778, 0
  %v1781 = vxor.u32 %v1775, 2147483648
  %v1782 = vsel %vm1780, %v1774, %v1781
  %vm1783 = vcmp.eq.s32.totalorder %v1778, 2
  %v1784 = vxor.u32 %v1774, 2147483648
  %v1785 = vsel %vm1783, %v1784, %v1775
  %v1786 = vsel %vm1779, %v1782, %v1785
  %v1787 = vsel %vm1776, nan, %v1786
  %v1788 = vand.u32 2147483647, %v537
  %vm1789 = vcmp.le.f32.partialorder %v1788, 0.7853982
  %vm1790 = vcmp.lt.s32.totalorder %v537, 0
  %v1791 = vand.u32 %v537, 2139095040
  %v1792 = vshrl.u32 %v1791, 23
  %v1793 = vsub.s32 %v1792, 127
  %v1794 = vand.u32 2147483647, %v537
  %v1795 = vand.u32 %v1794, 8388607
  %v1796 = vor.u32 %v1795, 8388608
  %v1797 = vsub.s32 0, %v1796
  %v1798 = vadd.s32 %v1793, 1
  %vm1799 = vcmp.gt.s32.totalorder %v1798, 0
  %v1800 = vsel %vm1799, %v1798, 0
  %v1801 = vshrl.u32 %v1800, 5
  %v1802 = vand.u32 %v1800, 31
  %v1803 = vsub.s32 32, %v1802
  %v1804 = vshrl.u32 683565275, %v1803
  %v1805 = vshll.u32 683565275, %v1802
  %v1806 = vshrl.u32 2475754826, %v1803
  %v1807 = vor.u32 %v1805, %v1806
  %v1808 = vshll.u32 2475754826, %v1802
  %v1809 = vshrl.u32 2131351028, %v1803
  %v1810 = vor.u32 %v1808, %v1809
  %v1811 = vshll.u32 2131351028, %v1802
  %v1812 = vshrl.u32 2102212464, %v1803
  %v1813 = vor.u32 %v1811, %v1812
  %v1814 = vshll.u32 2102212464, %v1802
  %v1815 = vshrl.u32 920167782, %v1803
  %v1816 = vor.u32 %v1814, %v1815
  %v1817 = vshll.u32 920167782, %v1802
  %v1818 = vshrl.u32 1326507024, %v1803
  %v1819 = vor.u32 %v1817, %v1818
  %vm1820 = vcmp.lt.s32.totalorder %v1801, 1
  %vm1821 = vcmp.lt.s32.totalorder %v1801, 2
  %vm1822 = vcmp.lt.s32.totalorder %v1801, 3
  %vm1823 = vcmp.lt.s32.totalorder %v1801, 4
  %v1824 = vsel %vm1820, %v1804, %v1807
  %v1825 = vsel %vm1823, %v1813, 2102212464
  %v1826 = vsel %vm1822, %v1810, %v1825
  %v1827 = vsel %vm1821, %v1824, %v1826
  %v1828 = vsel %vm1820, %v1807, %v1810
  %v1829 = vsel %vm1823, %v1816, 920167782
  %v1830 = vsel %vm1822, %v1813, %v1829
  %v1831 = vsel %vm1821, %v1828, %v1830
  %v1832 = vsel %vm1820, %v1810, %v1813
  %v1833 = vsel %vm1823, %v1819, 1326507024
  %v1834 = vsel %vm1822, %v1816, %v1833
  %v1835 = vsel %vm1821, %v1832, %v1834
  %v1836 = vshll.u32 %v1796, 8
  %v1837 = vmul.u32.u64.compose %v1836, %v1835
  %v1838 = vextract.low.u32 %v1837
  %v1839 = vextract.high.u32 %v1837
  %v1840 = vmul.u32.u64.compose %v1836, %v1831
  %v1841 = vextract.low.u32 %v1840
  %v1842 = vextract.high.u32 %v1840
  %v1843 = vmul.u32 %v1836, %v1827
  %v1844 = vadd.s32 %v1839, %v1841
  %vm1845 = vc.u32 %v1839, %v1841
  %v1846 = vadd.s32 %v1842, 1
  %v1847 = vsel %vm1845, %v1846, %v1842
  %v1848 = vadd.s32 %v1843, %v1847
  %v1849 = vadd.s32 %v1848, 536870912
  %v1850 = vshrl.u32 %v1849, 30
  %v1851 = vshll.u32 %v1850, 30
  %v1852 = vsub.s32 %v1848, %v1851
  %vm1853 = vcmp.lt.s32.totalorder %v1852, 0
  %v1854 = vsub.s32 0, %v1852
  %v1855 = vsel %vm1853, %v1854, %v1852
  %v1856 = vclz %v1855
  %v1857 = vsub.s32 %v1856, 2
  %vm1858 = vcmp.gt.s32.totalorder 0, %v1857
  %v1859 = vsel %vm1858, 0, %v1857
  %v1860 = vsub.s32 32, %v1859
  %v1861 = vshll.u32 %v1852, %v1859
  %v1862 = vshrl.u32 %v1844, %v1860
  %v1863 = vor.u32 %v1861, %v1862
  %v1864 = vsub.s32 4294967266, %v1859
  %v1865 = vadd.s32 %v1864, 127
  %v1866 = vshll.u32 %v1865, 23
  %v1867 = vor.u32 4788187, %v1866
  %v1868 = vand.u32 2147483647, %v1867
  %v1870 = vcvt.s32.f32 %v1863
  %v1871 = vmul.f32 %v1870, %v1868
  %v1872 = vxor.u32 %v1871, 2147483648
  %v1873 = vsel %vm1790, %v1872, %v1871
  %v1874 = vsub.s32 4, %v1850
  %v1875 = vsel %vm1790, %v1874, %v1850
  %v1876 = vsel %vm1789, %v537, %v1873
  %v1877 = vsel %vm1789, 0, %v1875
  %v1878 = vcosq.f32.pop %v1876
  %v1879 = vsinq.f32.pop %v1876
  %vm1880 = vweird.f32 %v537
  %v1881 = vadd.s32 %v1877, 3
  %v1882 = vand.u32 %v1881, 3
  %vm1883 = vcmp.lt.s32.totalorder %v1882, 2
  %vm1884 = vcmp.eq.s32.totalorder %v1882, 0
  %v1885 = vxor.u32 %v1879, 2147483648
  %v1886 = vsel %vm1884, %v1878, %v1885
  %vm1887 = vcmp.eq.s32.totalorder %v1882, 2
  %v1888 = vxor.u32 %v1878, 2147483648
  %v1889 = vsel %vm1887, %v1888, %v1879
  %v1890 = vsel %vm1883, %v1886, %v1889
  %v1891 = vsel %vm1880, nan, %v1890
  %v1892 = vand.u32 2147483647, %v538
  %vm1893 = vcmp.le.f32.partialorder %v1892, 0.7853982
  %vm1894 = vcmp.lt.s32.totalorder %v538, 0
  %v1895 = vand.u32 %v538, 2139095040
  %v1896 = vshrl.u32 %v1895, 23
  %v1897 = vsub.s32 %v1896, 127
  %v1898 = vand.u32 2147483647, %v538
  %v1899 = vand.u32 %v1898, 8388607
  %v1900 = vor.u32 %v1899, 8388608
  %v1901 = vsub.s32 0, %v1900
  %v1902 = vadd.s32 %v1897, 1
  %vm1903 = vcmp.gt.s32.totalorder %v1902, 0
  %v1904 = vsel %vm1903, %v1902, 0
  %v1905 = vshrl.u32 %v1904, 5
  %v1906 = vand.u32 %v1904, 31
  %v1907 = vsub.s32 32, %v1906
  %v1908 = vshrl.u32 683565275, %v1907
  %v1909 = vshll.u32 683565275, %v1906
  %v1910 = vshrl.u32 2475754826, %v1907
  %v1911 = vor.u32 %v1909, %v1910
  %v1912 = vshll.u32 2475754826, %v1906
  %v1913 = vshrl.u32 2131351028, %v1907
  %v1914 = vor.u32 %v1912, %v1913
  %v1915 = vshll.u32 2131351028, %v1906
  %v1916 = vshrl.u32 2102212464, %v1907
  %v1917 = vor.u32 %v1915, %v1916
  %v1918 = vshll.u32 2102212464, %v1906
  %v1919 = vshrl.u32 920167782, %v1907
  %v1920 = vor.u32 %v1918, %v1919
  %v1921 = vshll.u32 920167782, %v1906
  %v1922 = vshrl.u32 1326507024, %v1907
  %v1923 = vor.u32 %v1921, %v1922
  %vm1924 = vcmp.lt.s32.totalorder %v1905, 1
  %vm1925 = vcmp.lt.s32.totalorder %v1905, 2
  %vm1926 = vcmp.lt.s32.totalorder %v1905, 3
  %vm1927 = vcmp.lt.s32.totalorder %v1905, 4
  %v1928 = vsel %vm1924, %v1908, %v1911
  %v1929 = vsel %vm1927, %v1917, 2102212464
  %v1930 = vsel %vm1926, %v1914, %v1929
  %v1931 = vsel %vm1925, %v1928, %v1930
  %v1932 = vsel %vm1924, %v1911, %v1914
  %v1933 = vsel %vm1927, %v1920, 920167782
  %v1934 = vsel %vm1926, %v1917, %v1933
  %v1935 = vsel %vm1925, %v1932, %v1934
  %v1936 = vsel %vm1924, %v1914, %v1917
  %v1937 = vsel %vm1927, %v1923, 1326507024
  %v1938 = vsel %vm1926, %v1920, %v1937
  %v1939 = vsel %vm1925, %v1936, %v1938
  %v1940 = vshll.u32 %v1900, 8
  %v1941 = vmul.u32.u64.compose %v1940, %v1939
  %v1942 = vextract.low.u32 %v1941
  %v1943 = vextract.high.u32 %v1941
  %v1944 = vmul.u32.u64.compose %v1940, %v1935
  %v1945 = vextract.low.u32 %v1944
  %v1946 = vextract.high.u32 %v1944
  %v1947 = vmul.u32 %v1940, %v1931
  %v1948 = vadd.s32 %v1943, %v1945
  %vm1949 = vc.u32 %v1943, %v1945
  %v1950 = vadd.s32 %v1946, 1
  %v1951 = vsel %vm1949, %v1950, %v1946
  %v1952 = vadd.s32 %v1947, %v1951
  %v1953 = vadd.s32 %v1952, 536870912
  %v1954 = vshrl.u32 %v1953, 30
  %v1955 = vshll.u32 %v1954, 30
  %v1956 = vsub.s32 %v1952, %v1955
  %vm1957 = vcmp.lt.s32.totalorder %v1956, 0
  %v1958 = vsub.s32 0, %v1956
  %v1959 = vsel %vm1957, %v1958, %v1956
  %v1960 = vclz %v1959
  %v1961 = vsub.s32 %v1960, 2
  %vm1962 = vcmp.gt.s32.totalorder 0, %v1961
  %v1963 = vsel %vm1962, 0, %v1961
  %v1964 = vsub.s32 32, %v1963
  %v1965 = vshll.u32 %v1956, %v1963
  %v1966 = vshrl.u32 %v1948, %v1964
  %v1967 = vor.u32 %v1965, %v1966
  %v1968 = vsub.s32 4294967266, %v1963
  %v1969 = vadd.s32 %v1968, 127
  %v1970 = vshll.u32 %v1969, 23
  %v1971 = vor.u32 4788187, %v1970
  %v1972 = vand.u32 2147483647, %v1971
  %v1974 = vcvt.s32.f32 %v1967
  %v1975 = vmul.f32 %v1974, %v1972
  %v1976 = vxor.u32 %v1975, 2147483648
  %v1977 = vsel %vm1894, %v1976, %v1975
  %v1978 = vsub.s32 4, %v1954
  %v1979 = vsel %vm1894, %v1978, %v1954
  %v1980 = vsel %vm1893, %v538, %v1977
  %v1981 = vsel %vm1893, 0, %v1979
  %v1982 = vcosq.f32.pop %v1980
  %v1983 = vsinq.f32.pop %v1980
  %vm1984 = vweird.f32 %v538
  %v1985 = vadd.s32 %v1981, 3
  %v1986 = vand.u32 %v1985, 3
  %vm1987 = vcmp.lt.s32.totalorder %v1986, 2
  %vm1988 = vcmp.eq.s32.totalorder %v1986, 0
  %v1989 = vxor.u32 %v1983, 2147483648
  %v1990 = vsel %vm1988, %v1982, %v1989
  %vm1991 = vcmp.eq.s32.totalorder %v1986, 2
  %v1992 = vxor.u32 %v1982, 2147483648
  %v1993 = vsel %vm1991, %v1992, %v1983
  %v1994 = vsel %vm1987, %v1990, %v1993
  %v1995 = vsel %vm1984, nan, %v1994
  %v1996 = vand.u32 2147483647, %v539
  %vm1997 = vcmp.le.f32.partialorder %v1996, 0.7853982
  %vm1998 = vcmp.lt.s32.totalorder %v539, 0
  %v1999 = vand.u32 %v539, 2139095040
  %v2000 = vshrl.u32 %v1999, 23
  %v2001 = vsub.s32 %v2000, 127
  %v2002 = vand.u32 2147483647, %v539
  %v2003 = vand.u32 %v2002, 8388607
  %v2004 = vor.u32 %v2003, 8388608
  %v2005 = vsub.s32 0, %v2004
  %v2006 = vadd.s32 %v2001, 1
  %vm2007 = vcmp.gt.s32.totalorder %v2006, 0
  %v2008 = vsel %vm2007, %v2006, 0
  %v2009 = vshrl.u32 %v2008, 5
  %v2010 = vand.u32 %v2008, 31
  %v2011 = vsub.s32 32, %v2010
  %v2012 = vshrl.u32 683565275, %v2011
  %v2013 = vshll.u32 683565275, %v2010
  %v2014 = vshrl.u32 2475754826, %v2011
  %v2015 = vor.u32 %v2013, %v2014
  %v2016 = vshll.u32 2475754826, %v2010
  %v2017 = vshrl.u32 2131351028, %v2011
  %v2018 = vor.u32 %v2016, %v2017
  %v2019 = vshll.u32 2131351028, %v2010
  %v2020 = vshrl.u32 2102212464, %v2011
  %v2021 = vor.u32 %v2019, %v2020
  %v2022 = vshll.u32 2102212464, %v2010
  %v2023 = vshrl.u32 920167782, %v2011
  %v2024 = vor.u32 %v2022, %v2023
  %v2025 = vshll.u32 920167782, %v2010
  %v2026 = vshrl.u32 1326507024, %v2011
  %v2027 = vor.u32 %v2025, %v2026
  %vm2028 = vcmp.lt.s32.totalorder %v2009, 1
  %vm2029 = vcmp.lt.s32.totalorder %v2009, 2
  %vm2030 = vcmp.lt.s32.totalorder %v2009, 3
  %vm2031 = vcmp.lt.s32.totalorder %v2009, 4
  %v2032 = vsel %vm2028, %v2012, %v2015
  %v2033 = vsel %vm2031, %v2021, 2102212464
  %v2034 = vsel %vm2030, %v2018, %v2033
  %v2035 = vsel %vm2029, %v2032, %v2034
  %v2036 = vsel %vm2028, %v2015, %v2018
  %v2037 = vsel %vm2031, %v2024, 920167782
  %v2038 = vsel %vm2030, %v2021, %v2037
  %v2039 = vsel %vm2029, %v2036, %v2038
  %v2040 = vsel %vm2028, %v2018, %v2021
  %v2041 = vsel %vm2031, %v2027, 1326507024
  %v2042 = vsel %vm2030, %v2024, %v2041
  %v2043 = vsel %vm2029, %v2040, %v2042
  %v2044 = vshll.u32 %v2004, 8
  %v2045 = vmul.u32.u64.compose %v2044, %v2043
  %v2046 = vextract.low.u32 %v2045
  %v2047 = vextract.high.u32 %v2045
  %v2048 = vmul.u32.u64.compose %v2044, %v2039
  %v2049 = vextract.low.u32 %v2048
  %v2050 = vextract.high.u32 %v2048
  %v2051 = vmul.u32 %v2044, %v2035
  %v2052 = vadd.s32 %v2047, %v2049
  %vm2053 = vc.u32 %v2047, %v2049
  %v2054 = vadd.s32 %v2050, 1
  %v2055 = vsel %vm2053, %v2054, %v2050
  %v2056 = vadd.s32 %v2051, %v2055
  %v2057 = vadd.s32 %v2056, 536870912
  %v2058 = vshrl.u32 %v2057, 30
  %v2059 = vshll.u32 %v2058, 30
  %v2060 = vsub.s32 %v2056, %v2059
  %vm2061 = vcmp.lt.s32.totalorder %v2060, 0
  %v2062 = vsub.s32 0, %v2060
  %v2063 = vsel %vm2061, %v2062, %v2060
  %v2064 = vclz %v2063
  %v2065 = vsub.s32 %v2064, 2
  %vm2066 = vcmp.gt.s32.totalorder 0, %v2065
  %v2067 = vsel %vm2066, 0, %v2065
  %v2068 = vsub.s32 32, %v2067
  %v2069 = vshll.u32 %v2060, %v2067
  %v2070 = vshrl.u32 %v2052, %v2068
  %v2071 = vor.u32 %v2069, %v2070
  %v2072 = vsub.s32 4294967266, %v2067
  %v2073 = vadd.s32 %v2072, 127
  %v2074 = vshll.u32 %v2073, 23
  %v2075 = vor.u32 4788187, %v2074
  %v2076 = vand.u32 2147483647, %v2075
  %v2078 = vcvt.s32.f32 %v2071
  %v2079 = vmul.f32 %v2078, %v2076
  %v2080 = vxor.u32 %v2079, 2147483648
  %v2081 = vsel %vm1998, %v2080, %v2079
  %v2082 = vsub.s32 4, %v2058
  %v2083 = vsel %vm1998, %v2082, %v2058
  %v2084 = vsel %vm1997, %v539, %v2081
  %v2085 = vsel %vm1997, 0, %v2083
  %v2086 = vcosq.f32.pop %v2084
  %v2087 = vsinq.f32.pop %v2084
  %vm2088 = vweird.f32 %v539
  %v2089 = vadd.s32 %v2085, 3
  %v2090 = vand.u32 %v2089, 3
  %vm2091 = vcmp.lt.s32.totalorder %v2090, 2
  %vm2092 = vcmp.eq.s32.totalorder %v2090, 0
  %v2093 = vxor.u32 %v2087, 2147483648
  %v2094 = vsel %vm2092, %v2086, %v2093
  %vm2095 = vcmp.eq.s32.totalorder %v2090, 2
  %v2096 = vxor.u32 %v2086, 2147483648
  %v2097 = vsel %vm2095, %v2096, %v2087
  %v2098 = vsel %vm2091, %v2094, %v2097
  %v2099 = vsel %vm2088, nan, %v2098
  %v2100 = vand.u32 2147483647, %v540
  %vm2101 = vcmp.le.f32.partialorder %v2100, 0.7853982
  %vm2102 = vcmp.lt.s32.totalorder %v540, 0
  %v2103 = vand.u32 %v540, 2139095040
  %v2104 = vshrl.u32 %v2103, 23
  %v2105 = vsub.s32 %v2104, 127
  %v2106 = vand.u32 2147483647, %v540
  %v2107 = vand.u32 %v2106, 8388607
  %v2108 = vor.u32 %v2107, 8388608
  %v2109 = vsub.s32 0, %v2108
  %v2110 = vadd.s32 %v2105, 1
  %vm2111 = vcmp.gt.s32.totalorder %v2110, 0
  %v2112 = vsel %vm2111, %v2110, 0
  %v2113 = vshrl.u32 %v2112, 5
  %v2114 = vand.u32 %v2112, 31
  %v2115 = vsub.s32 32, %v2114
  %v2116 = vshrl.u32 683565275, %v2115
  %v2117 = vshll.u32 683565275, %v2114
  %v2118 = vshrl.u32 2475754826, %v2115
  %v2119 = vor.u32 %v2117, %v2118
  %v2120 = vshll.u32 2475754826, %v2114
  %v2121 = vshrl.u32 2131351028, %v2115
  %v2122 = vor.u32 %v2120, %v2121
  %v2123 = vshll.u32 2131351028, %v2114
  %v2124 = vshrl.u32 2102212464, %v2115
  %v2125 = vor.u32 %v2123, %v2124
  %v2126 = vshll.u32 2102212464, %v2114
  %v2127 = vshrl.u32 920167782, %v2115
  %v2128 = vor.u32 %v2126, %v2127
  %v2129 = vshll.u32 920167782, %v2114
  %v2130 = vshrl.u32 1326507024, %v2115
  %v2131 = vor.u32 %v2129, %v2130
  %vm2132 = vcmp.lt.s32.totalorder %v2113, 1
  %vm2133 = vcmp.lt.s32.totalorder %v2113, 2
  %vm2134 = vcmp.lt.s32.totalorder %v2113, 3
  %vm2135 = vcmp.lt.s32.totalorder %v2113, 4
  %v2136 = vsel %vm2132, %v2116, %v2119
  %v2137 = vsel %vm2135, %v2125, 2102212464
  %v2138 = vsel %vm2134, %v2122, %v2137
  %v2139 = vsel %vm2133, %v2136, %v2138
  %v2140 = vsel %vm2132, %v2119, %v2122
  %v2141 = vsel %vm2135, %v2128, 920167782
  %v2142 = vsel %vm2134, %v2125, %v2141
  %v2143 = vsel %vm2133, %v2140, %v2142
  %v2144 = vsel %vm2132, %v2122, %v2125
  %v2145 = vsel %vm2135, %v2131, 1326507024
  %v2146 = vsel %vm2134, %v2128, %v2145
  %v2147 = vsel %vm2133, %v2144, %v2146
  %v2148 = vshll.u32 %v2108, 8
  %v2149 = vmul.u32.u64.compose %v2148, %v2147
  %v2150 = vextract.low.u32 %v2149
  %v2151 = vextract.high.u32 %v2149
  %v2152 = vmul.u32.u64.compose %v2148, %v2143
  %v2153 = vextract.low.u32 %v2152
  %v2154 = vextract.high.u32 %v2152
  %v2155 = vmul.u32 %v2148, %v2139
  %v2156 = vadd.s32 %v2151, %v2153
  %vm2157 = vc.u32 %v2151, %v2153
  %v2158 = vadd.s32 %v2154, 1
  %v2159 = vsel %vm2157, %v2158, %v2154
  %v2160 = vadd.s32 %v2155, %v2159
  %v2161 = vadd.s32 %v2160, 536870912
  %v2162 = vshrl.u32 %v2161, 30
  %v2163 = vshll.u32 %v2162, 30
  %v2164 = vsub.s32 %v2160, %v2163
  %vm2165 = vcmp.lt.s32.totalorder %v2164, 0
  %v2166 = vsub.s32 0, %v2164
  %v2167 = vsel %vm2165, %v2166, %v2164
  %v2168 = vclz %v2167
  %v2169 = vsub.s32 %v2168, 2
  %vm2170 = vcmp.gt.s32.totalorder 0, %v2169
  %v2171 = vsel %vm2170, 0, %v2169
  %v2172 = vsub.s32 32, %v2171
  %v2173 = vshll.u32 %v2164, %v2171
  %v2174 = vshrl.u32 %v2156, %v2172
  %v2175 = vor.u32 %v2173, %v2174
  %v2176 = vsub.s32 4294967266, %v2171
  %v2177 = vadd.s32 %v2176, 127
  %v2178 = vshll.u32 %v2177, 23
  %v2179 = vor.u32 4788187, %v2178
  %v2180 = vand.u32 2147483647, %v2179
  %v2182 = vcvt.s32.f32 %v2175
  %v2183 = vmul.f32 %v2182, %v2180
  %v2184 = vxor.u32 %v2183, 2147483648
  %v2185 = vsel %vm2102, %v2184, %v2183
  %v2186 = vsub.s32 4, %v2162
  %v2187 = vsel %vm2102, %v2186, %v2162
  %v2188 = vsel %vm2101, %v540, %v2185
  %v2189 = vsel %vm2101, 0, %v2187
  %v2190 = vcosq.f32.pop %v2188
  %v2191 = vsinq.f32.pop %v2188
  %vm2192 = vweird.f32 %v540
  %v2193 = vadd.s32 %v2189, 3
  %v2194 = vand.u32 %v2193, 3
  %vm2195 = vcmp.lt.s32.totalorder %v2194, 2
  %vm2196 = vcmp.eq.s32.totalorder %v2194, 0
  %v2197 = vxor.u32 %v2191, 2147483648
  %v2198 = vsel %vm2196, %v2190, %v2197
  %vm2199 = vcmp.eq.s32.totalorder %v2194, 2
  %v2200 = vxor.u32 %v2190, 2147483648
  %v2201 = vsel %vm2199, %v2200, %v2191
  %v2202 = vsel %vm2195, %v2198, %v2201
  %v2203 = vsel %vm2192, nan, %v2202
  %v2204 = vld [vmem:[%s4] sm:$0xff]
  %v2205 = vld [vmem:[%s4 + $0x8] sm:$0xff]
  %v2206 = vld [vmem:[%s4 + $0x10] sm:$0xff]
  %v2207 = vpack.c.bf16 %v1579, %v1475
  %v2208 = vpack.c.bf16 %v1787, %v1683
  %v2209 = vpack.c.bf16 %v1995, %v1891
  %v2210 = vpack.c.bf16 %v2203, %v2099
  %v2214 = vunpack.c.l.b16 %v2204
  %v2215 = vunpack.c.h.b16 %v2204
  %v2216 = vunpack.c.l.b16 %v2205
  %v2217 = vunpack.c.h.b16 %v2205
  %v2218 = vunpack.c.l.b16 %v2206
  %v2219 = vunpack.c.h.b16 %v2206
  %v2220 = vpack.c.b16 %v2216, %v2214
  %v2221 = vpack.c.b16 %v2217, %v2215
  %v2222 = vpack.c.b16 %v2218, %v2218
  %v2223 = vpack.c.b16 %v2219, %v2219
  %vm2226 = vcmask 195584
  %v2228 = vsel %vm2226, %v2207, 0
  %v2231 = vsel %vm2226, %v2208, 0
  %v2234 = vsel %vm2226, %v2209, 0
  %v2237 = vsel %vm2226, %v2210, 0
  %vm2239 = vcmask 1043456
  %v2241 = vsel %vm2239, %v2222, 0
  %v2244 = vsel %vm2239, %v2223, 0
  %2246 = vmatprep.subr.bf16.mxu0 0
  %2247 = vmatpush1.bf16.msra.mxu0 0
  %2248 = vmatprep.subr.bf16.mxu0 0
  %2249 = vmatpush1.bf16.msra.mxu0 0
  %2250 = vmatprep.subr.bf16.mxu0 0
  %2251 = vmatpush1.bf16.msra.mxu0 0
  %2252 = vmatprep.subr.bf16.mxu0 0
  %2253 = vmatpush1.bf16.msra.mxu0 0
  %2254 = vmatprep.subr.bf16.mxu0 0
  %2255 = vmatpush1.bf16.msra.mxu0 0
  %2256 = vmatprep.subr.bf16.mxu0 0
  %2257 = vmatpush1.bf16.msra.mxu0 0
  %2258 = vmatprep.subr.bf16.mxu0 %v2244
  %2259 = vmatpush1.bf16.msra.mxu0 %v2241
  %2260 = vmatprep.subr.bf16.mxu0 %v2221
  %2261 = vmatpush1.bf16.msra.mxu0 %v2220
  %2262 = vmatprep.subr.bf16.mxu0 0
  %2263 = vmatpush2.bf16.msra.mxu0 0
  %2264 = vmatprep.subr.bf16.mxu0 0
  %2265 = vmatpush2.bf16.msra.mxu0 0
  %2266 = vmatprep.subr.bf16.mxu0 0
  %2267 = vmatpush2.bf16.msra.mxu0 0
  %2268 = vmatprep.subr.bf16.mxu0 0
  %2269 = vmatpush2.bf16.msra.mxu0 0
  %2270 = vmatprep.subr.bf16.mxu0 0
  %2271 = vmatpush2.bf16.msra.mxu0 0
  %2272 = vmatprep.subr.bf16.mxu0 0
  %2273 = vmatpush2.bf16.msra.mxu0 0
  %2274 = vmatprep.subr.bf16.mxu0 0
  %2275 = vmatpush2.bf16.msra.mxu0 0
  %2276 = vmatprep.subr.bf16.mxu0 0
  %2277 = vmatpush2.bf16.msra.mxu0 0
  %2278 = vmatprep.mubr.bf16.mxu0 0
  %2279 = vmatmul.mubr.bf16.gmra.mxu0 %v2228
  %v2280 = vpop.f32.mrf.mxu0
  %v2281 = vadd.f32 0.0, %v2280
  %v2282 = vpop.f32.mrf.mxu0
  %v2283 = vadd.f32 0.0, %v2282
  %v2284 = vpop.f32.mrf.mxu0
  %v2285 = vadd.f32 0.0, %v2284
  %v2286 = vpop.f32.mrf.mxu0
  %v2287 = vadd.f32 0.0, %v2286
  %2288 = vmatprep.mubr.bf16.mxu0 0
  %2289 = vmatmul.mubr.bf16.gmra.mxu0 %v2231
  %v2290 = vpop.f32.mrf.mxu0
  %v2291 = vadd.f32 0.0, %v2290
  %v2292 = vpop.f32.mrf.mxu0
  %v2293 = vadd.f32 0.0, %v2292
  %v2294 = vpop.f32.mrf.mxu0
  %v2295 = vadd.f32 0.0, %v2294
  %v2296 = vpop.f32.mrf.mxu0
  %v2297 = vadd.f32 0.0, %v2296
  %2298 = vmatprep.mubr.bf16.mxu0 0
  %2299 = vmatmul.mubr.bf16.gmra.mxu0 %v2234
  %v2300 = vpop.f32.mrf.mxu0
  %v2301 = vadd.f32 0.0, %v2300
  %v2302 = vpop.f32.mrf.mxu0
  %v2303 = vadd.f32 0.0, %v2302
  %v2304 = vpop.f32.mrf.mxu0
  %v2305 = vadd.f32 0.0, %v2304
  %v2306 = vpop.f32.mrf.mxu0
  %v2307 = vadd.f32 0.0, %v2306
  %2308 = vmatprep.mubr.bf16.mxu0 0
  %2309 = vmatmul.mubr.bf16.gmra.mxu0 %v2237
  %v2310 = vpop.f32.mrf.mxu0
  %v2311 = vadd.f32 0.0, %v2310
  %v2312 = vpop.f32.mrf.mxu0
  %v2313 = vadd.f32 0.0, %v2312
  %v2314 = vpop.f32.mrf.mxu0
  %v2315 = vadd.f32 0.0, %v2314
  %v2316 = vpop.f32.mrf.mxu0
  %v2317 = vadd.f32 0.0, %v2316
  %2318 = vdwg.mxu0
  %v2322 = vunpack.c.l.b16 %v1365
  %v2323 = vunpack.c.h.b16 %v1365
  %v2324 = vunpack.c.l.b16 %v1366
  %v2325 = vunpack.c.h.b16 %v1366
  %v2326 = vunpack.c.l.b16 %v1367
  %v2327 = vunpack.c.h.b16 %v1367
  %v2328 = vpack.c.b16 %v2324, %v2322
  %v2329 = vpack.c.b16 %v2325, %v2323
  %v2330 = vpack.c.b16 %v2326, %v2326
  %v2331 = vpack.c.b16 %v2327, %v2327
  %v2335 = vsel %vm2226, %v1368, 0
  %v2338 = vsel %vm2226, %v1369, 0
  %v2341 = vsel %vm2226, %v1370, 0
  %v2344 = vsel %vm2226, %v1371, 0
  %v2347 = vsel %vm2239, %v2330, 0
  %v2350 = vsel %vm2239, %v2331, 0
  %2352 = vmatprep.subr.bf16.mxu0 0
  %2353 = vmatpush1.bf16.msra.mxu0 0
  %2354 = vmatprep.subr.bf16.mxu0 0
  %2355 = vmatpush1.bf16.msra.mxu0 0
  %2356 = vmatprep.subr.bf16.mxu0 0
  %2357 = vmatpush1.bf16.msra.mxu0 0
  %2358 = vmatprep.subr.bf16.mxu0 0
  %2359 = vmatpush1.bf16.msra.mxu0 0
  %2360 = vmatprep.subr.bf16.mxu0 0
  %2361 = vmatpush1.bf16.msra.mxu0 0
  %2362 = vmatprep.subr.bf16.mxu0 0
  %2363 = vmatpush1.bf16.msra.mxu0 0
  %2364 = vmatprep.subr.bf16.mxu0 %v2350
  %2365 = vmatpush1.bf16.msra.mxu0 %v2347
  %2366 = vmatprep.subr.bf16.mxu0 %v2329
  %2367 = vmatpush1.bf16.msra.mxu0 %v2328
  %2368 = vmatprep.subr.bf16.mxu0 0
  %2369 = vmatpush2.bf16.msra.mxu0 0
  %2370 = vmatprep.subr.bf16.mxu0 0
  %2371 = vmatpush2.bf16.msra.mxu0 0
  %2372 = vmatprep.subr.bf16.mxu0 0
  %2373 = vmatpush2.bf16.msra.mxu0 0
  %2374 = vmatprep.subr.bf16.mxu0 0
  %2375 = vmatpush2.bf16.msra.mxu0 0
  %2376 = vmatprep.subr.bf16.mxu0 0
  %2377 = vmatpush2.bf16.msra.mxu0 0
  %2378 = vmatprep.subr.bf16.mxu0 0
  %2379 = vmatpush2.bf16.msra.mxu0 0
  %2380 = vmatprep.subr.bf16.mxu0 0
  %2381 = vmatpush2.bf16.msra.mxu0 0
  %2382 = vmatprep.subr.bf16.mxu0 0
  %2383 = vmatpush2.bf16.msra.mxu0 0
  %2384 = vmatprep.mubr.bf16.mxu0 0
  %2385 = vmatmul.mubr.bf16.gmra.mxu0 %v2335
  %v2386 = vpop.f32.mrf.mxu0
  %v2387 = vadd.f32 %v2281, %v2386
  %v2388 = vpop.f32.mrf.mxu0
  %v2389 = vadd.f32 %v2283, %v2388
  %v2390 = vpop.f32.mrf.mxu0
  %v2391 = vadd.f32 %v2285, %v2390
  %v2392 = vpop.f32.mrf.mxu0
  %v2393 = vadd.f32 %v2287, %v2392
  %2394 = vmatprep.mubr.bf16.mxu0 0
  %2395 = vmatmul.mubr.bf16.gmra.mxu0 %v2338
  %v2396 = vpop.f32.mrf.mxu0
  %v2397 = vadd.f32 %v2291, %v2396
  %v2398 = vpop.f32.mrf.mxu0
  %v2399 = vadd.f32 %v2293, %v2398
  %v2400 = vpop.f32.mrf.mxu0
  %v2401 = vadd.f32 %v2295, %v2400
  %v2402 = vpop.f32.mrf.mxu0
  %v2403 = vadd.f32 %v2297, %v2402
  %2404 = vmatprep.mubr.bf16.mxu0 0
  %2405 = vmatmul.mubr.bf16.gmra.mxu0 %v2341
  %v2406 = vpop.f32.mrf.mxu0
  %v2407 = vadd.f32 %v2301, %v2406
  %v2408 = vpop.f32.mrf.mxu0
  %v2409 = vadd.f32 %v2303, %v2408
  %v2410 = vpop.f32.mrf.mxu0
  %v2411 = vadd.f32 %v2305, %v2410
  %v2412 = vpop.f32.mrf.mxu0
  %v2413 = vadd.f32 %v2307, %v2412
  %2414 = vmatprep.mubr.bf16.mxu0 0
  %2415 = vmatmul.mubr.bf16.gmra.mxu0 %v2344
  %v2416 = vpop.f32.mrf.mxu0
  %v2417 = vadd.f32 %v2311, %v2416
  %v2418 = vpop.f32.mrf.mxu0
  %v2419 = vadd.f32 %v2313, %v2418
  %v2420 = vpop.f32.mrf.mxu0
  %v2421 = vadd.f32 %v2315, %v2420
  %v2422 = vpop.f32.mrf.mxu0
  %v2423 = vadd.f32 %v2317, %v2422
  %2424 = vdwg.mxu0
  %v2425 = vld [vmem:[%s5] sm:$0x77]
  %v2426 = vpack.c.bf16 %v55, %v54
  %v2427 = vpack.c.bf16 %v57, %v56
  %v2428 = vpack.c.bf16 %v59, %v58
  %v2429 = vpack.c.bf16 %v61, %v60
  %v2431 = vunpack.c.l.b16 %v2425
  %v2432 = vunpack.c.h.b16 %v2425
  %v2433 = vpack.c.b16 %v2431, %v2431
  %v2434 = vpack.c.b16 %v2432, %v2432
  %vm2435 = vcmask 48128
  %v2437 = vsel %vm2435, %v2426, 0
  %v2440 = vsel %vm2435, %v2427, 0
  %v2443 = vsel %vm2435, %v2428, 0
  %v2446 = vsel %vm2435, %v2429, 0
  %vm2448 = vcmask 1042432
  %v2450 = vsel %vm2448, %v2433, 0
  %v2453 = vsel %vm2448, %v2434, 0
  %2455 = vmatprep.subr.bf16.mxu0 0
  %2456 = vmatpush1.bf16.msra.mxu0 0
  %2457 = vmatprep.subr.bf16.mxu0 0
  %2458 = vmatpush1.bf16.msra.mxu0 0
  %2459 = vmatprep.subr.bf16.mxu0 0
  %2460 = vmatpush1.bf16.msra.mxu0 0
  %2461 = vmatprep.subr.bf16.mxu0 0
  %2462 = vmatpush1.bf16.msra.mxu0 0
  %2463 = vmatprep.subr.bf16.mxu0 0
  %2464 = vmatpush1.bf16.msra.mxu0 0
  %2465 = vmatprep.subr.bf16.mxu0 0
  %2466 = vmatpush1.bf16.msra.mxu0 0
  %2467 = vmatprep.subr.bf16.mxu0 0
  %2468 = vmatpush1.bf16.msra.mxu0 0
  %2469 = vmatprep.subr.bf16.mxu0 %v2453
  %2470 = vmatpush1.bf16.msra.mxu0 %v2450
  %2471 = vmatprep.subr.bf16.mxu0 0
  %2472 = vmatpush2.bf16.msra.mxu0 0
  %2473 = vmatprep.subr.bf16.mxu0 0
  %2474 = vmatpush2.bf16.msra.mxu0 0
  %2475 = vmatprep.subr.bf16.mxu0 0
  %2476 = vmatpush2.bf16.msra.mxu0 0
  %2477 = vmatprep.subr.bf16.mxu0 0
  %2478 = vmatpush2.bf16.msra.mxu0 0
  %2479 = vmatprep.subr.bf16.mxu0 0
  %2480 = vmatpush2.bf16.msra.mxu0 0
  %2481 = vmatprep.subr.bf16.mxu0 0
  %2482 = vmatpush2.bf16.msra.mxu0 0
  %2483 = vmatprep.subr.bf16.mxu0 0
  %2484 = vmatpush2.bf16.msra.mxu0 0
  %2485 = vmatprep.subr.bf16.mxu0 0
  %2486 = vmatpush2.bf16.msra.mxu0 0
  %2487 = vmatprep.mubr.bf16.mxu0 0
  %2488 = vmatmul.mubr.bf16.gmra.mxu0 %v2437
  %v2489 = vpop.f32.mrf.mxu0
  %v2490 = vadd.f32 0.0, %v2489
  %v2491 = vpop.f32.mrf.mxu0
  %v2492 = vadd.f32 0.0, %v2491
  %v2493 = vpop.f32.mrf.mxu0
  %v2494 = vadd.f32 0.0, %v2493
  %v2495 = vpop.f32.mrf.mxu0
  %v2496 = vadd.f32 0.0, %v2495
  %2497 = vmatprep.mubr.bf16.mxu0 0
  %2498 = vmatmul.mubr.bf16.gmra.mxu0 %v2440
  %v2499 = vpop.f32.mrf.mxu0
  %v2500 = vadd.f32 0.0, %v2499
  %v2501 = vpop.f32.mrf.mxu0
  %v2502 = vadd.f32 0.0, %v2501
  %v2503 = vpop.f32.mrf.mxu0
  %v2504 = vadd.f32 0.0, %v2503
  %v2505 = vpop.f32.mrf.mxu0
  %v2506 = vadd.f32 0.0, %v2505
  %2507 = vmatprep.mubr.bf16.mxu0 0
  %2508 = vmatmul.mubr.bf16.gmra.mxu0 %v2443
  %v2509 = vpop.f32.mrf.mxu0
  %v2510 = vadd.f32 0.0, %v2509
  %v2511 = vpop.f32.mrf.mxu0
  %v2512 = vadd.f32 0.0, %v2511
  %v2513 = vpop.f32.mrf.mxu0
  %v2514 = vadd.f32 0.0, %v2513
  %v2515 = vpop.f32.mrf.mxu0
  %v2516 = vadd.f32 0.0, %v2515
  %2517 = vmatprep.mubr.bf16.mxu0 0
  %2518 = vmatmul.mubr.bf16.gmra.mxu0 %v2446
  %v2519 = vpop.f32.mrf.mxu0
  %v2520 = vadd.f32 0.0, %v2519
  %v2521 = vpop.f32.mrf.mxu0
  %v2522 = vadd.f32 0.0, %v2521
  %v2523 = vpop.f32.mrf.mxu0
  %v2524 = vadd.f32 0.0, %v2523
  %v2525 = vpop.f32.mrf.mxu0
  %v2526 = vadd.f32 0.0, %v2525
  %2527 = vdwg.mxu0
  %v2528 = vadd.f32 %v2387, %v2490
  %v2529 = vadd.f32 %v2389, %v2492
  %v2530 = vadd.f32 %v2391, %v2494
  %v2531 = vadd.f32 %v2393, %v2496
  %v2532 = vadd.f32 %v2397, %v2500
  %v2533 = vadd.f32 %v2399, %v2502
  %v2534 = vadd.f32 %v2401, %v2504
  %v2535 = vadd.f32 %v2403, %v2506
  %v2536 = vadd.f32 %v2407, %v2510
  %v2537 = vadd.f32 %v2409, %v2512
  %v2538 = vadd.f32 %v2411, %v2514
  %v2539 = vadd.f32 %v2413, %v2516
  %v2540 = vadd.f32 %v2417, %v2520
  %v2541 = vadd.f32 %v2419, %v2522
  %v2542 = vadd.f32 %v2421, %v2524
  %v2543 = vadd.f32 %v2423, %v2526
  %v2544 = vld [vmem:[%s6] sm:$0x3]
  %v2546 = vlaneseq
  %v2547 = vshrl.u32 %v2546, 7
  %v2548 = vsub.s32 0, %v2547
  %v2549 = vrot.slane %v2544, %v2548
  %v2550 = vlaneseq
  %v2551 = vshrl.u32 %v2550, 7
  %v2552 = vsub.s32 1, %v2551
  %v2553 = vrot.slane %v2544, %v2552
  %v2556 = vadd.f32 %v2528, %v2549
  %v2557 = vadd.f32 %v2529, %v2553
  %v2558 = vadd.f32 %v2530, %v2549
  %v2559 = vadd.f32 %v2531, %v2553
  %v2560 = vadd.f32 %v2532, %v2549
  %v2561 = vadd.f32 %v2533, %v2553
  %v2562 = vadd.f32 %v2534, %v2549
  %v2563 = vadd.f32 %v2535, %v2553
  %v2564 = vadd.f32 %v2536, %v2549
  %v2565 = vadd.f32 %v2537, %v2553
  %v2566 = vadd.f32 %v2538, %v2549
  %v2567 = vadd.f32 %v2539, %v2553
  %v2568 = vadd.f32 %v2540, %v2549
  %v2569 = vadd.f32 %v2541, %v2553
  %v2570 = vadd.f32 %v2542, %v2549
  %v2571 = vadd.f32 %v2543, %v2553
  %v2572 = vld [vmem:[%s9] sm:$0xff]
  %v2573 = vld [vmem:[%s9 + $0x8] sm:$0xff]
  %v2574 = vld [vmem:[%s9 + $0x10] sm:$0xff]
  %v2575 = vld [vmem:[%s9 + $0x18] sm:$0xff]
  %v2576 = vld [vmem:[%s9 + $0x20] sm:$0xff]
  %v2577 = vld [vmem:[%s9 + $0x28] sm:$0xff]
  %v2578 = vld [vmem:[%s9 + $0x30] sm:$0xff]
  %v2579 = vld [vmem:[%s9 + $0x38] sm:$0xff]
  %v2580 = vld [vmem:[%s9 + $0x40] sm:$0xff]
  %v2581 = vld [vmem:[%s9 + $0x48] sm:$0xff]
  %v2582 = vld [vmem:[%s9 + $0x50] sm:$0xff]
  %v2583 = vld [vmem:[%s9 + $0x58] sm:$0xff]
  %v2584 = vld [vmem:[%s9 + $0x60] sm:$0xff]
  %v2585 = vld [vmem:[%s9 + $0x68] sm:$0xff]
  %v2586 = vld [vmem:[%s9 + $0x70] sm:$0xff]
  %v2587 = vld [vmem:[%s9 + $0x78] sm:$0xff]
  %v2588 = vld [vmem:[%s9 + $0x80] sm:$0xff]
  %v2589 = vld [vmem:[%s9 + $0x88] sm:$0xff]
  %v2590 = vld [vmem:[%s9 + $0x90] sm:$0xff]
  %v2591 = vld [vmem:[%s9 + $0x98] sm:$0xff]
  %v2592 = vld [vmem:[%s9 + $0xa0] sm:$0xff]
  %v2593 = vld [vmem:[%s9 + $0xa8] sm:$0xff]
  %v2594 = vld [vmem:[%s9 + $0xb0] sm:$0xff]
  %v2595 = vld [vmem:[%s9 + $0xb8] sm:$0xff]
  %v2596 = vld [vmem:[%s10] sm:$0x3f]
  %v2597 = vld [vmem:[%s10 + $0x8] sm:$0x3f]
  %vm2598 = vcmask 523264
  %v2600 = vsel %vm2598, %v2557, 0
  %v2603 = vsel %vm2598, %v2559, 0
  %v2606 = vsel %vm2598, %v2561, 0
  %v2609 = vsel %vm2598, %v2563, 0
  %v2612 = vsel %vm2598, %v2565, 0
  %v2615 = vsel %vm2598, %v2567, 0
  %v2618 = vsel %vm2598, %v2569, 0
  %v2621 = vsel %vm2598, %v2571, 0
  %2623 = vmatprep.subr.mxu0 0.0
  %2624 = vmatpush1.msra.mxu0 %v2587
  %2625 = vmatprep.subr.mxu0 0.0
  %2626 = vmatpush1.msra.mxu0 %v2586
  %2627 = vmatprep.subr.mxu0 0.0
  %2628 = vmatpush1.msra.mxu0 %v2585
  %2629 = vmatprep.subr.mxu0 0.0
  %2630 = vmatpush1.msra.mxu0 %v2584
  %2631 = vmatprep.subr.mxu0 0.0
  %2632 = vmatpush1.msra.mxu0 %v2583
  %2633 = vmatprep.subr.mxu0 0.0
  %2634 = vmatpush1.msra.mxu0 %v2582
  %2635 = vmatprep.subr.mxu0 0.0
  %2636 = vmatpush1.msra.mxu0 %v2581
  %2637 = vmatprep.subr.mxu0 0.0
  %2638 = vmatpush1.msra.mxu0 %v2580
  %2639 = vmatprep.subr.mxu0 0.0
  %2640 = vmatpush1.msra.mxu0 %v2579
  %2641 = vmatprep.subr.mxu0 0.0
  %2642 = vmatpush1.msra.mxu0 %v2578
  %2643 = vmatprep.subr.mxu0 0.0
  %2644 = vmatpush1.msra.mxu0 %v2577
  %2645 = vmatprep.subr.mxu0 0.0
  %2646 = vmatpush1.msra.mxu0 %v2576
  %2647 = vmatprep.subr.mxu0 0.0
  %2648 = vmatpush1.msra.mxu0 %v2575
  %2649 = vmatprep.subr.mxu0 0.0
  %2650 = vmatpush1.msra.mxu0 %v2574
  %2651 = vmatprep.subr.mxu0 0.0
  %2652 = vmatpush1.msra.mxu0 %v2573
  %2653 = vmatprep.subr.mxu0 0.0
  %2654 = vmatpush1.msra.mxu0 %v2572
  %2655 = vmatprep.subr.mxu0 0.0
  %2656 = vmatpush2.msra.mxu0 0.0
  %2657 = vmatprep.subr.mxu0 0.0
  %2658 = vmatpush2.msra.mxu0 0.0
  %2659 = vmatprep.subr.mxu0 0.0
  %2660 = vmatpush2.msra.mxu0 0.0
  %2661 = vmatprep.subr.mxu0 0.0
  %2662 = vmatpush2.msra.mxu0 0.0
  %2663 = vmatprep.subr.mxu0 0.0
  %2664 = vmatpush2.msra.mxu0 0.0
  %2665 = vmatprep.subr.mxu0 0.0
  %2666 = vmatpush2.msra.mxu0 0.0
  %2667 = vmatprep.subr.mxu0 0.0
  %2668 = vmatpush2.msra.mxu0 0.0
  %2669 = vmatprep.subr.mxu0 0.0
  %2670 = vmatpush2.msra.mxu0 0.0
  %2671 = vmatprep.subr.mxu0 0.0
  %2672 = vmatpush2.msra.mxu0 %v2595
  %2673 = vmatprep.subr.mxu0 0.0
  %2674 = vmatpush2.msra.mxu0 %v2594
  %2675 = vmatprep.subr.mxu0 0.0
  %2676 = vmatpush2.msra.mxu0 %v2593
  %2677 = vmatprep.subr.mxu0 0.0
  %2678 = vmatpush2.msra.mxu0 %v2592
  %2679 = vmatprep.subr.mxu0 0.0
  %2680 = vmatpush2.msra.mxu0 %v2591
  %2681 = vmatprep.subr.mxu0 0.0
  %2682 = vmatpush2.msra.mxu0 %v2590
  %2683 = vmatprep.subr.mxu0 0.0
  %2684 = vmatpush2.msra.mxu0 %v2589
  %2685 = vmatprep.subr.mxu0 0.0
  %2686 = vmatpush2.msra.mxu0 %v2588
  %2687 = vmatprep.mubr.f32.mxu0 %v2600
  %2688 = vmatmul.mubr.f32.gmra.mxu0 %v2556
  %v2689 = vpop.f32.mrf.mxu0
  %v2690 = vadd.f32 0.0, %v2689
  %v2691 = vpop.f32.mrf.mxu0
  %2692 = vmatprep.mubr.f32.mxu0 %v2603
  %2693 = vmatmul.mubr.f32.gmra.mxu0 %v2558
  %v2694 = vpop.f32.mrf.mxu0
  %v2695 = vadd.f32 0.0, %v2694
  %v2696 = vpop.f32.mrf.mxu0
  %2697 = vmatprep.mubr.f32.mxu0 %v2606
  %2698 = vmatmul.mubr.f32.gmra.mxu0 %v2560
  %v2699 = vpop.f32.mrf.mxu0
  %v2700 = vadd.f32 0.0, %v2699
  %v2701 = vpop.f32.mrf.mxu0
  %2702 = vmatprep.mubr.f32.mxu0 %v2609
  %2703 = vmatmul.mubr.f32.gmra.mxu0 %v2562
  %v2704 = vpop.f32.mrf.mxu0
  %v2705 = vadd.f32 0.0, %v2704
  %v2706 = vpop.f32.mrf.mxu0
  %2707 = vmatprep.mubr.f32.mxu0 %v2612
  %2708 = vmatmul.mubr.f32.gmra.mxu0 %v2564
  %v2709 = vpop.f32.mrf.mxu0
  %v2710 = vadd.f32 0.0, %v2709
  %v2711 = vpop.f32.mrf.mxu0
  %2712 = vmatprep.mubr.f32.mxu0 %v2615
  %2713 = vmatmul.mubr.f32.gmra.mxu0 %v2566
  %v2714 = vpop.f32.mrf.mxu0
  %v2715 = vadd.f32 0.0, %v2714
  %v2716 = vpop.f32.mrf.mxu0
  %2717 = vmatprep.mubr.f32.mxu0 %v2618
  %2718 = vmatmul.mubr.f32.gmra.mxu0 %v2568
  %v2719 = vpop.f32.mrf.mxu0
  %v2720 = vadd.f32 0.0, %v2719
  %v2721 = vpop.f32.mrf.mxu0
  %2722 = vmatprep.mubr.f32.mxu0 %v2621
  %2723 = vmatmul.mubr.f32.gmra.mxu0 %v2570
  %v2724 = vpop.f32.mrf.mxu0
  %v2725 = vadd.f32 0.0, %v2724
  %v2726 = vpop.f32.mrf.mxu0
  %2727 = vdwg.mxu0
  %v2729 = vsel %vm2435, %v2690, 0
  %v2732 = vsel %vm2435, %v2695, 0
  %v2735 = vsel %vm2435, %v2700, 0
  %v2738 = vsel %vm2435, %v2705, 0
  %v2741 = vsel %vm2435, %v2710, 0
  %v2744 = vsel %vm2435, %v2715, 0
  %v2747 = vsel %vm2435, %v2720, 0
  %v2750 = vsel %vm2435, %v2725, 0
  %vm2752 = vcmask 1045504
  %v2754 = vsel %vm2752, %v2596, 0
  %v2757 = vsel %vm2752, %v2597, 0
  %2759 = vmatprep.subr.mxu0 0.0
  %2760 = vmatpush1.msra.mxu0 0.0
  %2761 = vmatprep.subr.mxu0 0.0
  %2762 = vmatpush1.msra.mxu0 0.0
  %2763 = vmatprep.subr.mxu0 0.0
  %2764 = vmatpush1.msra.mxu0 0.0
  %2765 = vmatprep.subr.mxu0 0.0
  %2766 = vmatpush1.msra.mxu0 0.0
  %2767 = vmatprep.subr.mxu0 0.0
  %2768 = vmatpush1.msra.mxu0 0.0
  %2769 = vmatprep.subr.mxu0 0.0
  %2770 = vmatpush1.msra.mxu0 0.0
  %2771 = vmatprep.subr.mxu0 0.0
  %2772 = vmatpush1.msra.mxu0 0.0
  %2773 = vmatprep.subr.mxu0 0.0
  %2774 = vmatpush1.msra.mxu0 0.0
  %2775 = vmatprep.subr.mxu0 0.0
  %2776 = vmatpush1.msra.mxu0 0.0
  %2777 = vmatprep.subr.mxu0 0.0
  %2778 = vmatpush1.msra.mxu0 0.0
  %2779 = vmatprep.subr.mxu0 0.0
  %2780 = vmatpush1.msra.mxu0 0.0
  %2781 = vmatprep.subr.mxu0 0.0
  %2782 = vmatpush1.msra.mxu0 0.0
  %2783 = vmatprep.subr.mxu0 0.0
  %2784 = vmatpush1.msra.mxu0 0.0
  %2785 = vmatprep.subr.mxu0 0.0
  %2786 = vmatpush1.msra.mxu0 0.0
  %2787 = vmatprep.subr.mxu0 0.0
  %2788 = vmatpush1.msra.mxu0 0.0
  %2789 = vmatprep.subr.mxu0 %v2757
  %2790 = vmatpush1.msra.mxu0 %v2754
  %2791 = vmatprep.subr.mxu0 0.0
  %2792 = vmatpush2.msra.mxu0 0.0
  %2793 = vmatprep.subr.mxu0 0.0
  %2794 = vmatpush2.msra.mxu0 0.0
  %2795 = vmatprep.subr.mxu0 0.0
  %2796 = vmatpush2.msra.mxu0 0.0
  %2797 = vmatprep.subr.mxu0 0.0
  %2798 = vmatpush2.msra.mxu0 0.0
  %2799 = vmatprep.subr.mxu0 0.0
  %2800 = vmatpush2.msra.mxu0 0.0
  %2801 = vmatprep.subr.mxu0 0.0
  %2802 = vmatpush2.msra.mxu0 0.0
  %2803 = vmatprep.subr.mxu0 0.0
  %2804 = vmatpush2.msra.mxu0 0.0
  %2805 = vmatprep.subr.mxu0 0.0
  %2806 = vmatpush2.msra.mxu0 0.0
  %2807 = vmatprep.subr.mxu0 0.0
  %2808 = vmatpush2.msra.mxu0 0.0
  %2809 = vmatprep.subr.mxu0 0.0
  %2810 = vmatpush2.msra.mxu0 0.0
  %2811 = vmatprep.subr.mxu0 0.0
  %2812 = vmatpush2.msra.mxu0 0.0
  %2813 = vmatprep.subr.mxu0 0.0
  %2814 = vmatpush2.msra.mxu0 0.0
  %2815 = vmatprep.subr.mxu0 0.0
  %2816 = vmatpush2.msra.mxu0 0.0
  %2817 = vmatprep.subr.mxu0 0.0
  %2818 = vmatpush2.msra.mxu0 0.0
  %2819 = vmatprep.subr.mxu0 0.0
  %2820 = vmatpush2.msra.mxu0 0.0
  %2821 = vmatprep.subr.mxu0 0.0
  %2822 = vmatpush2.msra.mxu0 0.0
  %2823 = vmatprep.mubr.f32.mxu0 0.0
  %2824 = vmatmul.mubr.f32.gmra.mxu0 %v2729
  %v2825 = vpop.f32.mrf.mxu0
  %v2826 = vadd.f32 0.0, %v2825
  %v2827 = vpop.f32.mrf.mxu0
  %v2828 = vadd.f32 0.0, %v2827
  %2829 = vmatprep.mubr.f32.mxu0 0.0
  %2830 = vmatmul.mubr.f32.gmra.mxu0 %v2732
  %v2831 = vpop.f32.mrf.mxu0
  %v2832 = vadd.f32 0.0, %v2831
  %v2833 = vpop.f32.mrf.mxu0
  %v2834 = vadd.f32 0.0, %v2833
  %2835 = vmatprep.mubr.f32.mxu0 0.0
  %2836 = vmatmul.mubr.f32.gmra.mxu0 %v2735
  %v2837 = vpop.f32.mrf.mxu0
  %v2838 = vadd.f32 0.0, %v2837
  %v2839 = vpop.f32.mrf.mxu0
  %v2840 = vadd.f32 0.0, %v2839
  %2841 = vmatprep.mubr.f32.mxu0 0.0
  %2842 = vmatmul.mubr.f32.gmra.mxu0 %v2738
  %v2843 = vpop.f32.mrf.mxu0
  %v2844 = vadd.f32 0.0, %v2843
  %v2845 = vpop.f32.mrf.mxu0
  %v2846 = vadd.f32 0.0, %v2845
  %2847 = vmatprep.mubr.f32.mxu0 0.0
  %2848 = vmatmul.mubr.f32.gmra.mxu0 %v2741
  %v2849 = vpop.f32.mrf.mxu0
  %v2850 = vadd.f32 0.0, %v2849
  %v2851 = vpop.f32.mrf.mxu0
  %v2852 = vadd.f32 0.0, %v2851
  %2853 = vmatprep.mubr.f32.mxu0 0.0
  %2854 = vmatmul.mubr.f32.gmra.mxu0 %v2744
  %v2855 = vpop.f32.mrf.mxu0
  %v2856 = vadd.f32 0.0, %v2855
  %v2857 = vpop.f32.mrf.mxu0
  %v2858 = vadd.f32 0.0, %v2857
  %2859 = vmatprep.mubr.f32.mxu0 0.0
  %2860 = vmatmul.mubr.f32.gmra.mxu0 %v2747
  %v2861 = vpop.f32.mrf.mxu0
  %v2862 = vadd.f32 0.0, %v2861
  %v2863 = vpop.f32.mrf.mxu0
  %v2864 = vadd.f32 0.0, %v2863
  %2865 = vmatprep.mubr.f32.mxu0 0.0
  %2866 = vmatmul.mubr.f32.gmra.mxu0 %v2750
  %v2867 = vpop.f32.mrf.mxu0
  %v2868 = vadd.f32 0.0, %v2867
  %v2869 = vpop.f32.mrf.mxu0
  %v2870 = vadd.f32 0.0, %v2869
  %2871 = vdwg.mxu0
  %v2872 = vsub.f32 %v2556, %v2826
  %v2873 = vsub.f32 %v2557, %v2828
  %v2874 = vsub.f32 %v2558, %v2832
  %v2875 = vsub.f32 %v2559, %v2834
  %v2876 = vsub.f32 %v2560, %v2838
  %v2877 = vsub.f32 %v2561, %v2840
  %v2878 = vsub.f32 %v2562, %v2844
  %v2879 = vsub.f32 %v2563, %v2846
  %v2880 = vsub.f32 %v2564, %v2850
  %v2881 = vsub.f32 %v2565, %v2852
  %v2882 = vsub.f32 %v2566, %v2856
  %v2883 = vsub.f32 %v2567, %v2858
  %v2884 = vsub.f32 %v2568, %v2862
  %v2885 = vsub.f32 %v2569, %v2864
  %v2886 = vsub.f32 %v2570, %v2868
  %v2887 = vsub.f32 %v2571, %v2870
  %v2888 = vmul.f32 %v2872, %v2872
  %v2889 = vmul.f32 %v2873, %v2873
  %v2890 = vmul.f32 %v2874, %v2874
  %v2891 = vmul.f32 %v2875, %v2875
  %v2892 = vmul.f32 %v2876, %v2876
  %v2893 = vmul.f32 %v2877, %v2877
  %v2894 = vmul.f32 %v2878, %v2878
  %v2895 = vmul.f32 %v2879, %v2879
  %v2896 = vmul.f32 %v2880, %v2880
  %v2897 = vmul.f32 %v2881, %v2881
  %v2898 = vmul.f32 %v2882, %v2882
  %v2899 = vmul.f32 %v2883, %v2883
  %v2900 = vmul.f32 %v2884, %v2884
  %v2901 = vmul.f32 %v2885, %v2885
  %v2902 = vmul.f32 %v2886, %v2886
  %v2903 = vmul.f32 %v2887, %v2887
  %v2905 = vsel %vm2598, %v2889, 0
  %v2908 = vsel %vm2598, %v2891, 0
  %v2911 = vsel %vm2598, %v2893, 0
  %v2914 = vsel %vm2598, %v2895, 0
  %v2917 = vsel %vm2598, %v2897, 0
  %v2920 = vsel %vm2598, %v2899, 0
  %v2923 = vsel %vm2598, %v2901, 0
  %v2926 = vsel %vm2598, %v2903, 0
  %2928 = vmatprep.subr.mxu0 0.0
  %2929 = vmatpush1.msra.mxu0 %v2587
  %2930 = vmatprep.subr.mxu0 0.0
  %2931 = vmatpush1.msra.mxu0 %v2586
  %2932 = vmatprep.subr.mxu0 0.0
  %2933 = vmatpush1.msra.mxu0 %v2585
  %2934 = vmatprep.subr.mxu0 0.0
  %2935 = vmatpush1.msra.mxu0 %v2584
  %2936 = vmatprep.subr.mxu0 0.0
  %2937 = vmatpush1.msra.mxu0 %v2583
  %2938 = vmatprep.subr.mxu0 0.0
  %2939 = vmatpush1.msra.mxu0 %v2582
  %2940 = vmatprep.subr.mxu0 0.0
  %2941 = vmatpush1.msra.mxu0 %v2581
  %2942 = vmatprep.subr.mxu0 0.0
  %2943 = vmatpush1.msra.mxu0 %v2580
  %2944 = vmatprep.subr.mxu0 0.0
  %2945 = vmatpush1.msra.mxu0 %v2579
  %2946 = vmatprep.subr.mxu0 0.0
  %2947 = vmatpush1.msra.mxu0 %v2578
  %2948 = vmatprep.subr.mxu0 0.0
  %2949 = vmatpush1.msra.mxu0 %v2577
  %2950 = vmatprep.subr.mxu0 0.0
  %2951 = vmatpush1.msra.mxu0 %v2576
  %2952 = vmatprep.subr.mxu0 0.0
  %2953 = vmatpush1.msra.mxu0 %v2575
  %2954 = vmatprep.subr.mxu0 0.0
  %2955 = vmatpush1.msra.mxu0 %v2574
  %2956 = vmatprep.subr.mxu0 0.0
  %2957 = vmatpush1.msra.mxu0 %v2573
  %2958 = vmatprep.subr.mxu0 0.0
  %2959 = vmatpush1.msra.mxu0 %v2572
  %2960 = vmatprep.subr.mxu0 0.0
  %2961 = vmatpush2.msra.mxu0 0.0
  %2962 = vmatprep.subr.mxu0 0.0
  %2963 = vmatpush2.msra.mxu0 0.0
  %2964 = vmatprep.subr.mxu0 0.0
  %2965 = vmatpush2.msra.mxu0 0.0
  %2966 = vmatprep.subr.mxu0 0.0
  %2967 = vmatpush2.msra.mxu0 0.0
  %2968 = vmatprep.subr.mxu0 0.0
  %2969 = vmatpush2.msra.mxu0 0.0
  %2970 = vmatprep.subr.mxu0 0.0
  %2971 = vmatpush2.msra.mxu0 0.0
  %2972 = vmatprep.subr.mxu0 0.0
  %2973 = vmatpush2.msra.mxu0 0.0
  %2974 = vmatprep.subr.mxu0 0.0
  %2975 = vmatpush2.msra.mxu0 0.0
  %2976 = vmatprep.subr.mxu0 0.0
  %2977 = vmatpush2.msra.mxu0 %v2595
  %2978 = vmatprep.subr.mxu0 0.0
  %2979 = vmatpush2.msra.mxu0 %v2594
  %2980 = vmatprep.subr.mxu0 0.0
  %2981 = vmatpush2.msra.mxu0 %v2593
  %2982 = vmatprep.subr.mxu0 0.0
  %2983 = vmatpush2.msra.mxu0 %v2592
  %2984 = vmatprep.subr.mxu0 0.0
  %2985 = vmatpush2.msra.mxu0 %v2591
  %2986 = vmatprep.subr.mxu0 0.0
  %2987 = vmatpush2.msra.mxu0 %v2590
  %2988 = vmatprep.subr.mxu0 0.0
  %2989 = vmatpush2.msra.mxu0 %v2589
  %2990 = vmatprep.subr.mxu0 0.0
  %2991 = vmatpush2.msra.mxu0 %v2588
  %2992 = vmatprep.mubr.f32.mxu0 %v2905
  %2993 = vmatmul.mubr.f32.gmra.mxu0 %v2888
  %v2994 = vpop.f32.mrf.mxu0
  %v2995 = vadd.f32 0.0, %v2994
  %v2996 = vpop.f32.mrf.mxu0
  %2997 = vmatprep.mubr.f32.mxu0 %v2908
  %2998 = vmatmul.mubr.f32.gmra.mxu0 %v2890
  %v2999 = vpop.f32.mrf.mxu0
  %v3000 = vadd.f32 0.0, %v2999
  %v3001 = vpop.f32.mrf.mxu0
  %3002 = vmatprep.mubr.f32.mxu0 %v2911
  %3003 = vmatmul.mubr.f32.gmra.mxu0 %v2892
  %v3004 = vpop.f32.mrf.mxu0
  %v3005 = vadd.f32 0.0, %v3004
  %v3006 = vpop.f32.mrf.mxu0
  %3007 = vmatprep.mubr.f32.mxu0 %v2914
  %3008 = vmatmul.mubr.f32.gmra.mxu0 %v2894
  %v3009 = vpop.f32.mrf.mxu0
  %v3010 = vadd.f32 0.0, %v3009
  %v3011 = vpop.f32.mrf.mxu0
  %3012 = vmatprep.mubr.f32.mxu0 %v2917
  %3013 = vmatmul.mubr.f32.gmra.mxu0 %v2896
  %v3014 = vpop.f32.mrf.mxu0
  %v3015 = vadd.f32 0.0, %v3014
  %v3016 = vpop.f32.mrf.mxu0
  %3017 = vmatprep.mubr.f32.mxu0 %v2920
  %3018 = vmatmul.mubr.f32.gmra.mxu0 %v2898
  %v3019 = vpop.f32.mrf.mxu0
  %v3020 = vadd.f32 0.0, %v3019
  %v3021 = vpop.f32.mrf.mxu0
  %3022 = vmatprep.mubr.f32.mxu0 %v2923
  %3023 = vmatmul.mubr.f32.gmra.mxu0 %v2900
  %v3024 = vpop.f32.mrf.mxu0
  %v3025 = vadd.f32 0.0, %v3024
  %v3026 = vpop.f32.mrf.mxu0
  %3027 = vmatprep.mubr.f32.mxu0 %v2926
  %3028 = vmatmul.mubr.f32.gmra.mxu0 %v2902
  %v3029 = vpop.f32.mrf.mxu0
  %v3030 = vadd.f32 0.0, %v3029
  %v3031 = vpop.f32.mrf.mxu0
  %3032 = vdwg.mxu0
  %v3034 = vsel %vm2435, %v2995, 0
  %v3037 = vsel %vm2435, %v3000, 0
  %v3040 = vsel %vm2435, %v3005, 0
  %v3043 = vsel %vm2435, %v3010, 0
  %v3046 = vsel %vm2435, %v3015, 0
  %v3049 = vsel %vm2435, %v3020, 0
  %v3052 = vsel %vm2435, %v3025, 0
  %v3055 = vsel %vm2435, %v3030, 0
  %3057 = vmatprep.subr.mxu0 0.0
  %3058 = vmatpush1.msra.mxu0 0.0
  %3059 = vmatprep.subr.mxu0 0.0
  %3060 = vmatpush1.msra.mxu0 0.0
  %3061 = vmatprep.subr.mxu0 0.0
  %3062 = vmatpush1.msra.mxu0 0.0
  %3063 = vmatprep.subr.mxu0 0.0
  %3064 = vmatpush1.msra.mxu0 0.0
  %3065 = vmatprep.subr.mxu0 0.0
  %3066 = vmatpush1.msra.mxu0 0.0
  %3067 = vmatprep.subr.mxu0 0.0
  %3068 = vmatpush1.msra.mxu0 0.0
  %3069 = vmatprep.subr.mxu0 0.0
  %3070 = vmatpush1.msra.mxu0 0.0
  %3071 = vmatprep.subr.mxu0 0.0
  %3072 = vmatpush1.msra.mxu0 0.0
  %3073 = vmatprep.subr.mxu0 0.0
  %3074 = vmatpush1.msra.mxu0 0.0
  %3075 = vmatprep.subr.mxu0 0.0
  %3076 = vmatpush1.msra.mxu0 0.0
  %3077 = vmatprep.subr.mxu0 0.0
  %3078 = vmatpush1.msra.mxu0 0.0
  %3079 = vmatprep.subr.mxu0 0.0
  %3080 = vmatpush1.msra.mxu0 0.0
  %3081 = vmatprep.subr.mxu0 0.0
  %3082 = vmatpush1.msra.mxu0 0.0
  %3083 = vmatprep.subr.mxu0 0.0
  %3084 = vmatpush1.msra.mxu0 0.0
  %3085 = vmatprep.subr.mxu0 0.0
  %3086 = vmatpush1.msra.mxu0 0.0
  %3087 = vmatprep.subr.mxu0 %v2757
  %3088 = vmatpush1.msra.mxu0 %v2754
  %3089 = vmatprep.subr.mxu0 0.0
  %3090 = vmatpush2.msra.mxu0 0.0
  %3091 = vmatprep.subr.mxu0 0.0
  %3092 = vmatpush2.msra.mxu0 0.0
  %3093 = vmatprep.subr.mxu0 0.0
  %3094 = vmatpush2.msra.mxu0 0.0
  %3095 = vmatprep.subr.mxu0 0.0
  %3096 = vmatpush2.msra.mxu0 0.0
  %3097 = vmatprep.subr.mxu0 0.0
  %3098 = vmatpush2.msra.mxu0 0.0
  %3099 = vmatprep.subr.mxu0 0.0
  %3100 = vmatpush2.msra.mxu0 0.0
  %3101 = vmatprep.subr.mxu0 0.0
  %3102 = vmatpush2.msra.mxu0 0.0
  %3103 = vmatprep.subr.mxu0 0.0
  %3104 = vmatpush2.msra.mxu0 0.0
  %3105 = vmatprep.subr.mxu0 0.0
  %3106 = vmatpush2.msra.mxu0 0.0
  %3107 = vmatprep.subr.mxu0 0.0
  %3108 = vmatpush2.msra.mxu0 0.0
  %3109 = vmatprep.subr.mxu0 0.0
  %3110 = vmatpush2.msra.mxu0 0.0
  %3111 = vmatprep.subr.mxu0 0.0
  %3112 = vmatpush2.msra.mxu0 0.0
  %3113 = vmatprep.subr.mxu0 0.0
  %3114 = vmatpush2.msra.mxu0 0.0
  %3115 = vmatprep.subr.mxu0 0.0
  %3116 = vmatpush2.msra.mxu0 0.0
  %3117 = vmatprep.subr.mxu0 0.0
  %3118 = vmatpush2.msra.mxu0 0.0
  %3119 = vmatprep.subr.mxu0 0.0
  %3120 = vmatpush2.msra.mxu0 0.0
  %3121 = vmatprep.mubr.f32.mxu0 0.0
  %3122 = vmatmul.mubr.f32.gmra.mxu0 %v3034
  %v3123 = vpop.f32.mrf.mxu0
  %v3124 = vadd.f32 1e-05, %v3123
  %v3125 = vpop.f32.mrf.mxu0
  %v3126 = vadd.f32 1e-05, %v3125
  %3127 = vmatprep.mubr.f32.mxu0 0.0
  %3128 = vmatmul.mubr.f32.gmra.mxu0 %v3037
  %v3129 = vpop.f32.mrf.mxu0
  %v3130 = vadd.f32 1e-05, %v3129
  %v3131 = vpop.f32.mrf.mxu0
  %v3132 = vadd.f32 1e-05, %v3131
  %3133 = vmatprep.mubr.f32.mxu0 0.0
  %3134 = vmatmul.mubr.f32.gmra.mxu0 %v3040
  %v3135 = vpop.f32.mrf.mxu0
  %v3136 = vadd.f32 1e-05, %v3135
  %v3137 = vpop.f32.mrf.mxu0
  %v3138 = vadd.f32 1e-05, %v3137
  %3139 = vmatprep.mubr.f32.mxu0 0.0
  %3140 = vmatmul.mubr.f32.gmra.mxu0 %v3043
  %v3141 = vpop.f32.mrf.mxu0
  %v3142 = vadd.f32 1e-05, %v3141
  %v3143 = vpop.f32.mrf.mxu0
  %v3144 = vadd.f32 1e-05, %v3143
  %3145 = vmatprep.mubr.f32.mxu0 0.0
  %3146 = vmatmul.mubr.f32.gmra.mxu0 %v3046
  %v3147 = vpop.f32.mrf.mxu0
  %v3148 = vadd.f32 1e-05, %v3147
  %v3149 = vpop.f32.mrf.mxu0
  %v3150 = vadd.f32 1e-05, %v3149
  %3151 = vmatprep.mubr.f32.mxu0 0.0
  %3152 = vmatmul.mubr.f32.gmra.mxu0 %v3049
  %v3153 = vpop.f32.mrf.mxu0
  %v3154 = vadd.f32 1e-05, %v3153
  %v3155 = vpop.f32.mrf.mxu0
  %v3156 = vadd.f32 1e-05, %v3155
  %3157 = vmatprep.mubr.f32.mxu0 0.0
  %3158 = vmatmul.mubr.f32.gmra.mxu0 %v3052
  %v3159 = vpop.f32.mrf.mxu0
  %v3160 = vadd.f32 1e-05, %v3159
  %v3161 = vpop.f32.mrf.mxu0
  %v3162 = vadd.f32 1e-05, %v3161
  %3163 = vmatprep.mubr.f32.mxu0 0.0
  %3164 = vmatmul.mubr.f32.gmra.mxu0 %v3055
  %v3165 = vpop.f32.mrf.mxu0
  %v3166 = vadd.f32 1e-05, %v3165
  %v3167 = vpop.f32.mrf.mxu0
  %v3168 = vadd.f32 1e-05, %v3167
  %3169 = vdwg.mxu0
  %v3170 = vrsqrt.pop %v3124
  %v3171 = vrsqrt.pop %v3126
  %v3172 = vrsqrt.pop %v3130
  %v3173 = vrsqrt.pop %v3132
  %v3174 = vrsqrt.pop %v3136
  %v3175 = vrsqrt.pop %v3138
  %v3176 = vrsqrt.pop %v3142
  %v3177 = vrsqrt.pop %v3144
  %v3178 = vrsqrt.pop %v3148
  %v3179 = vrsqrt.pop %v3150
  %v3180 = vrsqrt.pop %v3154
  %v3181 = vrsqrt.pop %v3156
  %v3182 = vrsqrt.pop %v3160
  %v3183 = vrsqrt.pop %v3162
  %v3184 = vrsqrt.pop %v3166
  %v3185 = vrsqrt.pop %v3168
  %v3186 = vmul.f32 %v2872, %v3170
  %v3187 = vmul.f32 %v2873, %v3171
  %v3188 = vmul.f32 %v2874, %v3172
  %v3189 = vmul.f32 %v2875, %v3173
  %v3190 = vmul.f32 %v2876, %v3174
  %v3191 = vmul.f32 %v2877, %v3175
  %v3192 = vmul.f32 %v2878, %v3176
  %v3193 = vmul.f32 %v2879, %v3177
  %v3194 = vmul.f32 %v2880, %v3178
  %v3195 = vmul.f32 %v2881, %v3179
  %v3196 = vmul.f32 %v2882, %v3180
  %v3197 = vmul.f32 %v2883, %v3181
  %v3198 = vmul.f32 %v2884, %v3182
  %v3199 = vmul.f32 %v2885, %v3183
  %v3200 = vmul.f32 %v2886, %v3184
  %v3201 = vmul.f32 %v2887, %v3185
  %v3202 = vld [vmem:[%s7] sm:$0x3]
  %v3204 = vlaneseq
  %v3205 = vshrl.u32 %v3204, 7
  %v3206 = vsub.s32 0, %v3205
  %v3207 = vrot.slane %v3202, %v3206
  %v3208 = vlaneseq
  %v3209 = vshrl.u32 %v3208, 7
  %v3210 = vsub.s32 1, %v3209
  %v3211 = vrot.slane %v3202, %v3210
  %v3214 = vmul.f32 %v3186, %v3207
  %v3215 = vmul.f32 %v3187, %v3211
  %v3216 = vmul.f32 %v3188, %v3207
  %v3217 = vmul.f32 %v3189, %v3211
  %v3218 = vmul.f32 %v3190, %v3207
  %v3219 = vmul.f32 %v3191, %v3211
  %v3220 = vmul.f32 %v3192, %v3207
  %v3221 = vmul.f32 %v3193, %v3211
  %v3222 = vmul.f32 %v3194, %v3207
  %v3223 = vmul.f32 %v3195, %v3211
  %v3224 = vmul.f32 %v3196, %v3207
  %v3225 = vmul.f32 %v3197, %v3211
  %v3226 = vmul.f32 %v3198, %v3207
  %v3227 = vmul.f32 %v3199, %v3211
  %v3228 = vmul.f32 %v3200, %v3207
  %v3229 = vmul.f32 %v3201, %v3211
  %v3230 = vld [vmem:[%s8] sm:$0x3]
  %v3232 = vlaneseq
  %v3233 = vshrl.u32 %v3232, 7
  %v3234 = vsub.s32 0, %v3233
  %v3235 = vrot.slane %v3230, %v3234
  %v3236 = vlaneseq
  %v3237 = vshrl.u32 %v3236, 7
  %v3238 = vsub.s32 1, %v3237
  %v3239 = vrot.slane %v3230, %v3238
  %v3242 = vadd.f32 %v3214, %v3235
  %v3243 = vadd.f32 %v3215, %v3239
  %v3244 = vadd.f32 %v3216, %v3235
  %v3245 = vadd.f32 %v3217, %v3239
  %v3246 = vadd.f32 %v3218, %v3235
  %v3247 = vadd.f32 %v3219, %v3239
  %v3248 = vadd.f32 %v3220, %v3235
  %v3249 = vadd.f32 %v3221, %v3239
  %v3250 = vadd.f32 %v3222, %v3235
  %v3251 = vadd.f32 %v3223, %v3239
  %v3252 = vadd.f32 %v3224, %v3235
  %v3253 = vadd.f32 %v3225, %v3239
  %v3254 = vadd.f32 %v3226, %v3235
  %v3255 = vadd.f32 %v3227, %v3239
  %v3256 = vadd.f32 %v3228, %v3235
  %v3257 = vadd.f32 %v3229, %v3239
  %v3258 = vmax.f32 %v3242, 0.0
  %v3259 = vmax.f32 %v3243, 0.0
  %v3260 = vmax.f32 %v3244, 0.0
  %v3261 = vmax.f32 %v3245, 0.0
  %v3262 = vmax.f32 %v3246, 0.0
  %v3263 = vmax.f32 %v3247, 0.0
  %v3264 = vmax.f32 %v3248, 0.0
  %v3265 = vmax.f32 %v3249, 0.0
  %v3266 = vmax.f32 %v3250, 0.0
  %v3267 = vmax.f32 %v3251, 0.0
  %v3268 = vmax.f32 %v3252, 0.0
  %v3269 = vmax.f32 %v3253, 0.0
  %v3270 = vmax.f32 %v3254, 0.0
  %v3271 = vmax.f32 %v3255, 0.0
  %v3272 = vmax.f32 %v3256, 0.0
  %v3273 = vmax.f32 %v3257, 0.0
  %v3274 = vld [vmem:[%s11] sm:$0xf]
  %v3275 = vld [vmem:[%s11 + $0x4] sm:$0xf]
  %v3276 = vld [vmem:[%s11 + $0x8] sm:$0xf]
  %v3277 = vld [vmem:[%s11 + $0xc] sm:$0xf]
  %v3278 = vld [vmem:[%s11 + $0x10] sm:$0xf]
  %v3279 = vld [vmem:[%s11 + $0x14] sm:$0xf]
  %v3280 = vld [vmem:[%s11 + $0x18] sm:$0xf]
  %v3281 = vld [vmem:[%s11 + $0x1c] sm:$0xf]
  %v3282 = vld [vmem:[%s11 + $0x20] sm:$0xf]
  %v3283 = vld [vmem:[%s11 + $0x24] sm:$0xf]
  %v3284 = vld [vmem:[%s11 + $0x28] sm:$0xf]
  %v3285 = vld [vmem:[%s11 + $0x2c] sm:$0xf]
  %v3286 = vld [vmem:[%s11 + $0x30] sm:$0xf]
  %v3287 = vld [vmem:[%s11 + $0x34] sm:$0xf]
  %v3288 = vld [vmem:[%s11 + $0x38] sm:$0xf]
  %v3289 = vld [vmem:[%s11 + $0x3c] sm:$0xf]
  %v3290 = vld [vmem:[%s11 + $0x40] sm:$0xf]
  %v3291 = vld [vmem:[%s11 + $0x44] sm:$0xf]
  %v3292 = vld [vmem:[%s11 + $0x48] sm:$0xf]
  %v3293 = vld [vmem:[%s11 + $0x4c] sm:$0xf]
  %v3294 = vld [vmem:[%s11 + $0x50] sm:$0xf]
  %v3295 = vld [vmem:[%s11 + $0x54] sm:$0xf]
  %v3296 = vld [vmem:[%s11 + $0x58] sm:$0xf]
  %v3297 = vld [vmem:[%s11 + $0x5c] sm:$0xf]
  %v3298 = vpack.c.bf16 %v3260, %v3258
  %v3299 = vpack.c.bf16 %v3261, %v3259
  %v3300 = vpack.c.bf16 %v3264, %v3262
  %v3301 = vpack.c.bf16 %v3265, %v3263
  %v3302 = vpack.c.bf16 %v3268, %v3266
  %v3303 = vpack.c.bf16 %v3269, %v3267
  %v3304 = vpack.c.bf16 %v3272, %v3270
  %v3305 = vpack.c.bf16 %v3273, %v3271
  %v3306 = vld [vmem:[%s12] sm:$0x1]
  %v3308 = vlaneseq
  %v3309 = vshrl.u32 %v3308, 7
  %v3310 = vsub.s32 0, %v3309
  %v3311 = vrot.slane %v3306, %v3310
  %v3337 = vunpack.c.l.b16 %v3274
  %v3338 = vunpack.c.l.b16 %v3275
  %v3339 = vunpack.c.l.b16 %v3276
  %v3340 = vunpack.c.l.b16 %v3277
  %v3341 = vunpack.c.l.b16 %v3278
  %v3342 = vunpack.c.l.b16 %v3279
  %v3343 = vunpack.c.l.b16 %v3280
  %v3344 = vunpack.c.l.b16 %v3281
  %v3345 = vunpack.c.l.b16 %v3282
  %v3346 = vunpack.c.l.b16 %v3283
  %v3347 = vunpack.c.l.b16 %v3284
  %v3348 = vunpack.c.l.b16 %v3285
  %v3349 = vunpack.c.l.b16 %v3286
  %v3350 = vunpack.c.l.b16 %v3287
  %v3351 = vunpack.c.l.b16 %v3288
  %v3352 = vunpack.c.l.b16 %v3289
  %v3353 = vunpack.c.l.b16 %v3290
  %v3354 = vunpack.c.l.b16 %v3291
  %v3355 = vunpack.c.l.b16 %v3292
  %v3356 = vunpack.c.l.b16 %v3293
  %v3357 = vunpack.c.l.b16 %v3294
  %v3358 = vunpack.c.l.b16 %v3295
  %v3359 = vunpack.c.l.b16 %v3296
  %v3360 = vunpack.c.l.b16 %v3297
  %v3361 = vpack.c.b16 %v3338, %v3337
  %v3362 = vpack.c.b16 %v3340, %v3339
  %v3363 = vpack.c.b16 %v3342, %v3341
  %v3364 = vpack.c.b16 %v3344, %v3343
  %v3365 = vpack.c.b16 %v3346, %v3345
  %v3366 = vpack.c.b16 %v3348, %v3347
  %v3367 = vpack.c.b16 %v3350, %v3349
  %v3368 = vpack.c.b16 %v3352, %v3351
  %v3369 = vpack.c.b16 %v3354, %v3353
  %v3370 = vpack.c.b16 %v3356, %v3355
  %v3371 = vpack.c.b16 %v3358, %v3357
  %v3372 = vpack.c.b16 %v3360, %v3359
  %v3386 = vsel %vm2598, %v3299, 0
  %v3389 = vsel %vm2598, %v3301, 0
  %v3392 = vsel %vm2598, %v3303, 0
  %v3395 = vsel %vm2598, %v3305, 0
  %3397 = vmatprep.subr.bf16.mxu0 0
  %3398 = vmatpush1.bf16.msra.mxu0 %v3368
  %3399 = vmatprep.subr.bf16.mxu0 0
  %3400 = vmatpush1.bf16.msra.mxu0 %v3367
  %3401 = vmatprep.subr.bf16.mxu0 0
  %3402 = vmatpush1.bf16.msra.mxu0 %v3366
  %3403 = vmatprep.subr.bf16.mxu0 0
  %3404 = vmatpush1.bf16.msra.mxu0 %v3365
  %3405 = vmatprep.subr.bf16.mxu0 0
  %3406 = vmatpush1.bf16.msra.mxu0 %v3364
  %3407 = vmatprep.subr.bf16.mxu0 0
  %3408 = vmatpush1.bf16.msra.mxu0 %v3363
  %3409 = vmatprep.subr.bf16.mxu0 0
  %3410 = vmatpush1.bf16.msra.mxu0 %v3362
  %3411 = vmatprep.subr.bf16.mxu0 0
  %3412 = vmatpush1.bf16.msra.mxu0 %v3361
  %3413 = vmatprep.subr.bf16.mxu0 0
  %3414 = vmatpush2.bf16.msra.mxu0 0
  %3415 = vmatprep.subr.bf16.mxu0 0
  %3416 = vmatpush2.bf16.msra.mxu0 0
  %3417 = vmatprep.subr.bf16.mxu0 0
  %3418 = vmatpush2.bf16.msra.mxu0 0
  %3419 = vmatprep.subr.bf16.mxu0 0
  %3420 = vmatpush2.bf16.msra.mxu0 0
  %3421 = vmatprep.subr.bf16.mxu0 0
  %3422 = vmatpush2.bf16.msra.mxu0 %v3372
  %3423 = vmatprep.subr.bf16.mxu0 0
  %3424 = vmatpush2.bf16.msra.mxu0 %v3371
  %3425 = vmatprep.subr.bf16.mxu0 0
  %3426 = vmatpush2.bf16.msra.mxu0 %v3370
  %3427 = vmatprep.subr.bf16.mxu0 0
  %3428 = vmatpush2.bf16.msra.mxu0 %v3369
  %3429 = vmatprep.mubr.bf16.mxu0 %v3386
  %3430 = vmatmul.mubr.bf16.gmra.mxu0 %v3298
  %v3431 = vpop.f32.mrf.mxu0
  %v3432 = vadd.f32 %v3311, %v3431
  %v3433 = vpop.f32.mrf.mxu0
  %v3434 = vpop.f32.mrf.mxu0
  %v3435 = vadd.f32 %v3311, %v3434
  %v3436 = vpop.f32.mrf.mxu0
  %3437 = vmatprep.mubr.bf16.mxu0 %v3389
  %3438 = vmatmul.mubr.bf16.gmra.mxu0 %v3300
  %v3439 = vpop.f32.mrf.mxu0
  %v3440 = vadd.f32 %v3311, %v3439
  %v3441 = vpop.f32.mrf.mxu0
  %v3442 = vpop.f32.mrf.mxu0
  %v3443 = vadd.f32 %v3311, %v3442
  %v3444 = vpop.f32.mrf.mxu0
  %3445 = vmatprep.mubr.bf16.mxu0 %v3392
  %3446 = vmatmul.mubr.bf16.gmra.mxu0 %v3302
  %v3447 = vpop.f32.mrf.mxu0
  %v3448 = vadd.f32 %v3311, %v3447
  %v3449 = vpop.f32.mrf.mxu0
  %v3450 = vpop.f32.mrf.mxu0
  %v3451 = vadd.f32 %v3311, %v3450
  %v3452 = vpop.f32.mrf.mxu0
  %3453 = vmatprep.mubr.bf16.mxu0 %v3395
  %3454 = vmatmul.mubr.bf16.gmra.mxu0 %v3304
  %v3455 = vpop.f32.mrf.mxu0
  %v3456 = vadd.f32 %v3311, %v3455
  %v3457 = vpop.f32.mrf.mxu0
  %v3458 = vpop.f32.mrf.mxu0
  %v3459 = vadd.f32 %v3311, %v3458
  %v3460 = vpop.f32.mrf.mxu0
  %3461 = vdwg.mxu0
  %v3462 = vld [vmem:[%s1] sm:$0xff]
  %v3463 = vld [vmem:[%s1 + $0x8] sm:$0xff]
  %v3464 = vld [vmem:[%s1 + $0x10] sm:$0xff]
  %v3465 = vld [vmem:[%s1 + $0x18] sm:$0xff]
  %v3466 = vld [vmem:[%s1 + $0x20] sm:$0xff]
  %v3467 = vld [vmem:[%s1 + $0x28] sm:$0xff]
  %v3468 = vld [vmem:[%s1 + $0x30] sm:$0xff]
  %v3469 = vld [vmem:[%s1 + $0x38] sm:$0xff]
  %v3470 = vadd.f32 %v3432, %v3462
  %v3471 = vadd.f32 %v3435, %v3463
  %v3472 = vadd.f32 %v3440, %v3464
  %v3473 = vadd.f32 %v3443, %v3465
  %v3474 = vadd.f32 %v3448, %v3466
  %v3475 = vadd.f32 %v3451, %v3467
  %v3476 = vadd.f32 %v3456, %v3468
  %v3477 = vadd.f32 %v3459, %v3469
  %v3478 = vld [vmem:[%s13] sm:$0x3]
  %vm3479 = vcmask 261120
  %v3480 = vsel %vm3479, %v3470, 0.0
  %3481 = vadd.xlane.f32.xlu0 %v3480
  %v3482 = vpop.xlane.xlu0 %3481
  %v3483 = vsel %vm3479, %v3471, 0.0
  %3484 = vadd.xlane.f32.xlu0 %v3483
  %v3485 = vpop.xlane.xlu0 %3484
  %v3486 = vsel %vm3479, %v3472, 0.0
  %3487 = vadd.xlane.f32.xlu0 %v3486
  %v3488 = vpop.xlane.xlu0 %3487
  %v3489 = vsel %vm3479, %v3473, 0.0
  %3490 = vadd.xlane.f32.xlu0 %v3489
  %v3491 = vpop.xlane.xlu0 %3490
  %v3492 = vsel %vm3479, %v3474, 0.0
  %3493 = vadd.xlane.f32.xlu0 %v3492
  %v3494 = vpop.xlane.xlu0 %3493
  %v3495 = vsel %vm3479, %v3475, 0.0
  %3496 = vadd.xlane.f32.xlu0 %v3495
  %v3497 = vpop.xlane.xlu0 %3496
  %v3498 = vsel %vm3479, %v3476, 0.0
  %3499 = vadd.xlane.f32.xlu0 %v3498
  %v3500 = vpop.xlane.xlu0 %3499
  %v3501 = vsel %vm3479, %v3477, 0.0
  %3502 = vadd.xlane.f32.xlu0 %v3501
  %v3503 = vpop.xlane.xlu0 %3502
  %v3504 = vrcp.pop 32.0
  %v3505 = vmul.f32 %v3482, %v3504
  %v3506 = vmul.f32 %v3485, %v3504
  %v3507 = vmul.f32 %v3488, %v3504
  %v3508 = vmul.f32 %v3491, %v3504
  %v3509 = vmul.f32 %v3494, %v3504
  %v3510 = vmul.f32 %v3497, %v3504
  %v3511 = vmul.f32 %v3500, %v3504
  %v3512 = vmul.f32 %v3503, %v3504
  %v3513 = vsub.f32 %v3470, %v3505
  %v3514 = vsub.f32 %v3471, %v3506
  %v3515 = vsub.f32 %v3472, %v3507
  %v3516 = vsub.f32 %v3473, %v3508
  %v3517 = vsub.f32 %v3474, %v3509
  %v3518 = vsub.f32 %v3475, %v3510
  %v3519 = vsub.f32 %v3476, %v3511
  %v3520 = vsub.f32 %v3477, %v3512
  %v3521 = vmul.f32 %v3513, %v3513
  %v3522 = vmul.f32 %v3514, %v3514
  %v3523 = vmul.f32 %v3515, %v3515
  %v3524 = vmul.f32 %v3516, %v3516
  %v3525 = vmul.f32 %v3517, %v3517
  %v3526 = vmul.f32 %v3518, %v3518
  %v3527 = vmul.f32 %v3519, %v3519
  %v3528 = vmul.f32 %v3520, %v3520
  %v3529 = vsel %vm3479, %v3521, 0.0
  %3530 = vadd.xlane.f32.xlu0 %v3529
  %v3531 = vpop.xlane.xlu0 %3530
  %v3532 = vsel %vm3479, %v3522, 0.0
  %3533 = vadd.xlane.f32.xlu0 %v3532
  %v3534 = vpop.xlane.xlu0 %3533
  %v3535 = vsel %vm3479, %v3523, 0.0
  %3536 = vadd.xlane.f32.xlu0 %v3535
  %v3537 = vpop.xlane.xlu0 %3536
  %v3538 = vsel %vm3479, %v3524, 0.0
  %3539 = vadd.xlane.f32.xlu0 %v3538
  %v3540 = vpop.xlane.xlu0 %3539
  %v3541 = vsel %vm3479, %v3525, 0.0
  %3542 = vadd.xlane.f32.xlu0 %v3541
  %v3543 = vpop.xlane.xlu0 %3542
  %v3544 = vsel %vm3479, %v3526, 0.0
  %3545 = vadd.xlane.f32.xlu0 %v3544
  %v3546 = vpop.xlane.xlu0 %3545
  %v3547 = vsel %vm3479, %v3527, 0.0
  %3548 = vadd.xlane.f32.xlu0 %v3547
  %v3549 = vpop.xlane.xlu0 %3548
  %v3550 = vsel %vm3479, %v3528, 0.0
  %3551 = vadd.xlane.f32.xlu0 %v3550
  %v3552 = vpop.xlane.xlu0 %3551
  %v3553 = vmul.f32 %v3531, %v3504
  %v3554 = vmul.f32 %v3534, %v3504
  %v3555 = vmul.f32 %v3537, %v3504
  %v3556 = vmul.f32 %v3540, %v3504
  %v3557 = vmul.f32 %v3543, %v3504
  %v3558 = vmul.f32 %v3546, %v3504
  %v3559 = vmul.f32 %v3549, %v3504
  %v3560 = vmul.f32 %v3552, %v3504
  %v3561 = vadd.f32 %v3553, 1e-05
  %v3562 = vadd.f32 %v3554, 1e-05
  %v3563 = vadd.f32 %v3555, 1e-05
  %v3564 = vadd.f32 %v3556, 1e-05
  %v3565 = vadd.f32 %v3557, 1e-05
  %v3566 = vadd.f32 %v3558, 1e-05
  %v3567 = vadd.f32 %v3559, 1e-05
  %v3568 = vadd.f32 %v3560, 1e-05
  %v3569 = vrsqrt.pop %v3561
  %v3570 = vrsqrt.pop %v3562
  %v3571 = vrsqrt.pop %v3563
  %v3572 = vrsqrt.pop %v3564
  %v3573 = vrsqrt.pop %v3565
  %v3574 = vrsqrt.pop %v3566
  %v3575 = vrsqrt.pop %v3567
  %v3576 = vrsqrt.pop %v3568
  %v3577 = vmul.f32 %v3513, %v3569
  %v3578 = vmul.f32 %v3514, %v3570
  %v3579 = vmul.f32 %v3515, %v3571
  %v3580 = vmul.f32 %v3516, %v3572
  %v3581 = vmul.f32 %v3517, %v3573
  %v3582 = vmul.f32 %v3518, %v3574
  %v3583 = vmul.f32 %v3519, %v3575
  %v3584 = vmul.f32 %v3520, %v3576
  %v3585 = vlaneseq
  %v3586 = vshrl.u32 %v3585, 7
  %v3587 = vsub.s32 0, %v3586
  %v3588 = vrot.slane %v3478, %v3587
  %v3589 = vmul.f32 %v3577, %v3588
  %v3590 = vmul.f32 %v3578, %v3588
  %v3591 = vmul.f32 %v3579, %v3588
  %v3592 = vmul.f32 %v3580, %v3588
  %v3593 = vmul.f32 %v3581, %v3588
  %v3594 = vmul.f32 %v3582, %v3588
  %v3595 = vmul.f32 %v3583, %v3588
  %v3596 = vmul.f32 %v3584, %v3588
  %v3597 = vlaneseq
  %v3598 = vshrl.u32 %v3597, 7
  %v3599 = vsub.s32 1, %v3598
  %v3600 = vrot.slane %v3478, %v3599
  %v3601 = vadd.f32 %v3589, %v3600
  %v3602 = vadd.f32 %v3590, %v3600
  %v3603 = vadd.f32 %v3591, %v3600
  %v3604 = vadd.f32 %v3592, %v3600
  %v3605 = vadd.f32 %v3593, %v3600
  %v3606 = vadd.f32 %v3594, %v3600
  %v3607 = vadd.f32 %v3595, %v3600
  %v3608 = vadd.f32 %v3596, %v3600
  %v3609 = vmax.f32 %v3601, 0.0
  %v3610 = vmax.f32 %v3602, 0.0
  %v3611 = vmax.f32 %v3603, 0.0
  %v3612 = vmax.f32 %v3604, 0.0
  %v3613 = vmax.f32 %v3605, 0.0
  %v3614 = vmax.f32 %v3606, 0.0
  %v3615 = vmax.f32 %v3607, 0.0
  %v3616 = vmax.f32 %v3608, 0.0
  %v3617 = vld [vmem:[%s14] sm:$0xf]
  %v3618 = vld [vmem:[%s14 + $0x4] sm:$0xf]
  %v3619 = vld [vmem:[%s14 + $0x8] sm:$0xf]
  %v3620 = vld [vmem:[%s14 + $0xc] sm:$0xf]
  %v3621 = vpack.c.bf16 %v3610, %v3609
  %v3622 = vpack.c.bf16 %v3612, %v3611
  %v3623 = vpack.c.bf16 %v3614, %v3613
  %v3624 = vpack.c.bf16 %v3616, %v3615
  %v3625 = vld [vmem:[%s15] sm:$0x1]
  %v3627 = vlaneseq
  %v3628 = vshrl.u32 %v3627, 7
  %v3629 = vsub.s32 0, %v3628
  %v3630 = vrot.slane %v3625, %v3629
  %v3636 = vunpack.c.l.b16 %v3617
  %v3637 = vunpack.c.l.b16 %v3618
  %v3638 = vunpack.c.l.b16 %v3619
  %v3639 = vunpack.c.l.b16 %v3620
  %v3640 = vpack.c.b16 %v3637, %v3636
  %v3641 = vpack.c.b16 %v3639, %v3638
  %v3645 = vsel %vm3479, %v3621, 0
  %v3648 = vsel %vm3479, %v3622, 0
  %v3651 = vsel %vm3479, %v3623, 0
  %v3654 = vsel %vm3479, %v3624, 0
  %3656 = vmatprep.subr.bf16.mxu0 0
  %3657 = vmatpush1.bf16.msra.mxu0 0
  %3658 = vmatprep.subr.bf16.mxu0 0
  %3659 = vmatpush1.bf16.msra.mxu0 0
  %3660 = vmatprep.subr.bf16.mxu0 0
  %3661 = vmatpush1.bf16.msra.mxu0 0
  %3662 = vmatprep.subr.bf16.mxu0 0
  %3663 = vmatpush1.bf16.msra.mxu0 0
  %3664 = vmatprep.subr.bf16.mxu0 0
  %3665 = vmatpush1.bf16.msra.mxu0 0
  %3666 = vmatprep.subr.bf16.mxu0 0
  %3667 = vmatpush1.bf16.msra.mxu0 0
  %3668 = vmatprep.subr.bf16.mxu0 0
  %3669 = vmatpush1.bf16.msra.mxu0 %v3641
  %3670 = vmatprep.subr.bf16.mxu0 0
  %3671 = vmatpush1.bf16.msra.mxu0 %v3640
  %3672 = vmatprep.subr.bf16.mxu0 0
  %3673 = vmatpush2.bf16.msra.mxu0 0
  %3674 = vmatprep.subr.bf16.mxu0 0
  %3675 = vmatpush2.bf16.msra.mxu0 0
  %3676 = vmatprep.subr.bf16.mxu0 0
  %3677 = vmatpush2.bf16.msra.mxu0 0
  %3678 = vmatprep.subr.bf16.mxu0 0
  %3679 = vmatpush2.bf16.msra.mxu0 0
  %3680 = vmatprep.subr.bf16.mxu0 0
  %3681 = vmatpush2.bf16.msra.mxu0 0
  %3682 = vmatprep.subr.bf16.mxu0 0
  %3683 = vmatpush2.bf16.msra.mxu0 0
  %3684 = vmatprep.subr.bf16.mxu0 0
  %3685 = vmatpush2.bf16.msra.mxu0 0
  %3686 = vmatprep.subr.bf16.mxu0 0
  %3687 = vmatpush2.bf16.msra.mxu0 0
  %3688 = vmatprep.mubr.bf16.mxu0 0
  %3689 = vmatmul.mubr.bf16.gmra.mxu0 %v3645
  %v3690 = vpop.f32.mrf.mxu0
  %v3691 = vadd.f32 %v3630, %v3690
  %v3692 = vpop.f32.mrf.mxu0
  %v3693 = vpop.f32.mrf.mxu0
  %v3694 = vadd.f32 %v3630, %v3693
  %v3695 = vpop.f32.mrf.mxu0
  %3696 = vmatprep.mubr.bf16.mxu0 0
  %3697 = vmatmul.mubr.bf16.gmra.mxu0 %v3648
  %v3698 = vpop.f32.mrf.mxu0
  %v3699 = vadd.f32 %v3630, %v3698
  %v3700 = vpop.f32.mrf.mxu0
  %v3701 = vpop.f32.mrf.mxu0
  %v3702 = vadd.f32 %v3630, %v3701
  %v3703 = vpop.f32.mrf.mxu0
  %3704 = vmatprep.mubr.bf16.mxu0 0
  %3705 = vmatmul.mubr.bf16.gmra.mxu0 %v3651
  %v3706 = vpop.f32.mrf.mxu0
  %v3707 = vadd.f32 %v3630, %v3706
  %v3708 = vpop.f32.mrf.mxu0
  %v3709 = vpop.f32.mrf.mxu0
  %v3710 = vadd.f32 %v3630, %v3709
  %v3711 = vpop.f32.mrf.mxu0
  %3712 = vmatprep.mubr.bf16.mxu0 0
  %3713 = vmatmul.mubr.bf16.gmra.mxu0 %v3654
  %v3714 = vpop.f32.mrf.mxu0
  %v3715 = vadd.f32 %v3630, %v3714
  %v3716 = vpop.f32.mrf.mxu0
  %v3717 = vpop.f32.mrf.mxu0
  %v3718 = vadd.f32 %v3630, %v3717
  %v3719 = vpop.f32.mrf.mxu0
  %3720 = vdwg.mxu0
  %3721 = vst.msk [vmem:[%s16] sm:$0xff] %vm3479, %v3691
  %3722 = vst.msk [vmem:[%s16 + $0x8] sm:$0xff] %vm3479, %v3694
  %3723 = vst.msk [vmem:[%s16 + $0x10] sm:$0xff] %vm3479, %v3699
  %3724 = vst.msk [vmem:[%s16 + $0x18] sm:$0xff] %vm3479, %v3702
  %3725 = vst.msk [vmem:[%s16 + $0x20] sm:$0xff] %vm3479, %v3707
  %3726 = vst.msk [vmem:[%s16 + $0x28] sm:$0xff] %vm3479, %v3710
  %3727 = vst.msk [vmem:[%s16 + $0x30] sm:$0xff] %vm3479, %v3715
  %3728 = vst.msk [vmem:[%s16 + $0x38] sm:$0xff] %vm3479, %v3718
  // Predicated region
  $region66: #{tpu_custom_call.1} parent=0 // pred_check
    _
  $region67: #{tpu_custom_call.1} parent=0 // pred_check_branch
    %3730 = sbr.rel (0) target = $region69
  $region68: #{tpu_custom_call.1} parent=0 // pred_region
    _
  $region69: #{tpu_custom_call.1} parent=0 // pred_fallthru
    _
  // Predicated region
  $region70: #{tpu_custom_call.1} parent=0 // pred_check
    _
  $region71: #{tpu_custom_call.1} parent=0 // pred_check_branch
    %3732 = sbr.rel (0) target = $region73
  $region72: #{tpu_custom_call.1} parent=0 // pred_region
    _
  $region73: #{tpu_custom_call.1} parent=0 // pred_fallthru
    _

</llo_original>
